<compile_context>
chip_gen: v5e
topology: v5e:2x2
jax: 0.10.0
libtpu: 0.0.40
codegen_flags: <defaults>
</compile_context>

<pallas_src>
import functools

import jax
import jax.numpy as jnp
from jax.experimental import pallas as pl
from jax.experimental.pallas import tpu as pltpu

# ---- small config consistent with the module's __init__ / forward ----
IMG = 16          # img_size
IN_CHANS = 3      # in_chans
PATCH = 4         # patch_size
DIM = 32          # dim
DEPTH = 2         # depth
N_CLASSES = 10    # n_classes
EXP = 4           # expansion_factor
EXP_TOK = 0.5     # expansion_factor_token
# dropout = 0.0 -> identity

PH = IMG // PATCH
PW = IMG // PATCH
S = PH * PW                       # num_patches = 16
P = IN_CHANS * PATCH * PATCH      # patch vector length = 48
S_E = int(S * EXP)                # conv1 out channels = 64
D_T = int(DIM * EXP_TOK)          # fc1 out features = 16
EPS = 1e-5                        # torch LayerNorm default
N_PAD = 128                       # lane-padded logits width (sliced in wrapper)

_HAS_EINSHAPE = hasattr(pltpu, "einshape")


def _swap_minor(x3):
    """(b, m, n) -> (b, n, m) minor-dims swap; prefer the lane-layout-aware
    pltpu.einshape (XLU) over jnp.transpose shuffle chains."""
    if _HAS_EINSHAPE:
        return pltpu.einshape("bmn->bnm", x3)
    return jnp.transpose(x3, (0, 2, 1))


def _layer_norm(x, gamma, beta):
    # single-pass: E[x], E[x^2] together; biased variance, eps inside rsqrt
    x = x.astype(jnp.float32)
    mean = jnp.mean(x, axis=-1, keepdims=True)
    mean_sq = jnp.mean(x * x, axis=-1, keepdims=True)
    var = mean_sq - mean * mean
    return (x - mean) * jax.lax.rsqrt(var + EPS) * gamma + beta


def _gelu(x, approximate):
    if approximate:
        c = 0.7978845608028654  # sqrt(2/pi); tanh routes to the EUP slot
        return 0.5 * x * (1.0 + jnp.tanh(c * (x + 0.044715 * x * x * x)))
    return 0.5 * x * (1.0 + jax.lax.erf(x * 0.7071067811865476))


def mixer_kernel(patches_ref, we_ref, be_ref,
                 g1_ref, b1_ref, wc1_ref, bc1_ref, wc2_ref, bc2_ref,
                 g2_ref, b2_ref, wf1_ref, bf1_ref, wf2_ref, bf2_ref,
                 gn_ref, bn_ref, wh_ref, bh_ref, out_ref,
                 *, approximate_gelu=True):
    rows = patches_ref.shape[0]          # tb * S (static)
    tb = rows // S
    cdt = we_ref.dtype                   # compute dtype (bf16 or f32)

    # patch_embed (Linear(P, DIM)) — one big (tb*S, P) @ (P, DIM) matmul.
    x = jnp.dot(patches_ref[...], we_ref[...],
                preferred_element_type=jnp.float32) + be_ref[...]     # f32 residual stream

    # depth mixer layers, unrolled (static Python loop, static layer index)
    for l in range(DEPTH):
        # "channels_mixer": LayerNorm(dim) + Conv1d(k=1) mixing over patches.
        y = _layer_norm(x, g1_ref[l], b1_ref[l])                      # f32 (tb*S, DIM)
        # Move the patch axis to lanes so the token mix is one large 2-D matmul
        # (M = tb*DIM); transpose done in compute dtype (bf16) on the XLU.
        y_t = _swap_minor(y.astype(cdt).reshape(tb, S, DIM)).reshape(tb * DIM, S)
        t = jnp.dot(y_t, wc1_ref[l], preferred_element_type=jnp.float32) + bc1_ref[l]  # (tb*DIM, S_E)
        t = _gelu(t, approximate_gelu)
        t = jnp.dot(t.astype(cdt), wc2_ref[l],
                    preferred_element_type=jnp.float32) + bc2_ref[l]  # (tb*DIM, S)
        y = _swap_minor(t.astype(cdt).reshape(tb, DIM, S)).reshape(tb * S, DIM)
        # "tokens_mixer": LayerNorm(dim) + Linear MLP over channels.
        y = _layer_norm(y, g2_ref[l], b2_ref[l])
        y = jnp.dot(y.astype(cdt), wf1_ref[l],
                    preferred_element_type=jnp.float32) + bf1_ref[l]  # (tb*S, D_T)
        y = _gelu(y, approximate_gelu)
        y = jnp.dot(y.astype(cdt), wf2_ref[l],
                    preferred_element_type=jnp.float32) + bf2_ref[l]  # (tb*S, DIM)
        # single residual around the whole Sequential (as in the reference forward)
        x = x + y

    # final LayerNorm; fold the mean-pool over patches into the head matmul:
    # big-M matmul into a lane-dense 128-wide slab, then reduce over S.
    x = _layer_norm(x, gn_ref[...], bn_ref[...])
    full = jnp.dot(x.astype(cdt), wh_ref[...],
                   preferred_element_type=jnp.float32)                # (tb*S, N_PAD)
    logits = jnp.sum(full.reshape(tb, S, N_PAD), axis=1) * (1.0 / S) + bh_ref[...]
    out_ref[...] = logits                                             # (tb, N_PAD) unmasked vst


PARAM_ORDER = ["we", "be",
               "g1", "b1", "wc1", "bc1", "wc2", "bc2",
               "g2", "b2", "wf1", "bf1", "wf2", "bf2",
               "gn", "bn", "wh", "bh"]


def init_params(key):
    """Deterministic synthetic parameters matching the module's shapes (f32, module layout)."""
    ks = jax.random.split(key, 10)

    def w(k, shape, scale=0.02):
        return (scale * jax.random.normal(k, shape)).astype(jnp.float32)

    return {
        "we": w(ks[0], (P, DIM)),                           # patch_embed weight (in, out)
        "be": jnp.zeros((1, DIM), jnp.float32),             # patch_embed bias
        "g1": jnp.ones((DEPTH, 1, DIM), jnp.float32),       # norm1 gamma
        "b1": jnp.zeros((DEPTH, 1, DIM), jnp.float32),      # norm1 beta
        "wc1": w(ks[1], (DEPTH, S_E, S)),                   # conv1 weight (out_ch, in_ch), k=1
        "bc1": w(ks[2], (DEPTH, S_E, 1)),                   # conv1 bias
        "wc2": w(ks[3], (DEPTH, S, S_E)),                   # conv2 weight
        "bc2": w(ks[4], (DEPTH, S, 1)),                     # conv2 bias
        "g2": jnp.ones((DEPTH, 1, DIM), jnp.float32),       # norm2 gamma
        "b2": jnp.zeros((DEPTH, 1, DIM), jnp.float32),      # norm2 beta
        "wf1": w(ks[5], (DEPTH, DIM, D_T)),                 # fc1 weight (in, out)
        "bf1": w(ks[6], (DEPTH, 1, D_T)),                   # fc1 bias
        "wf2": w(ks[7], (DEPTH, D_T, DIM)),                 # fc2 weight
        "bf2": w(ks[8], (DEPTH, 1, DIM)),                   # fc2 bias
        "gn": jnp.ones((1, DIM), jnp.float32),              # final norm gamma
        "bn": jnp.zeros((1, DIM), jnp.float32),             # final norm beta
        "wh": w(ks[9], (DIM, N_CLASSES)),                   # head weight (in, out)
        "bh": jnp.zeros((1, N_CLASSES), jnp.float32),       # head bias
    }


def _kernel_layout_params(params, compute_dtype):
    """Rearrange module-layout parameters into lane-dense kernel layouts and
    cast matmul weights to the compute dtype (biases / LN params stay f32)."""
    cdt = compute_dtype
    kp = dict(params)
    kp["we"] = params["we"].astype(cdt)
    # Pre-transpose the Conv1d(k=1) weights so the token mix is `act @ w`
    # in the (tb*DIM, S) transposed layout.
    kp["wc1"] = params["wc1"].transpose(0, 2, 1).astype(cdt)   # (DEPTH, S, S_E)
    kp["wc2"] = params["wc2"].transpose(0, 2, 1).astype(cdt)   # (DEPTH, S_E, S)
    # Conv biases become lane-dense row vectors (broadcast along rows).
    kp["bc1"] = params["bc1"].transpose(0, 2, 1)               # (DEPTH, 1, S_E)
    kp["bc2"] = params["bc2"].transpose(0, 2, 1)               # (DEPTH, 1, S)
    kp["wf1"] = params["wf1"].astype(cdt)
    kp["wf2"] = params["wf2"].astype(cdt)
    # Pad the classifier to a full 128-lane output so the final store is an
    # unmasked vst; the wrapper slices back to N_CLASSES.
    kp["wh"] = jnp.pad(params["wh"], ((0, 0), (0, N_PAD - N_CLASSES))).astype(cdt)
    kp["bh"] = jnp.pad(params["bh"], ((0, 0), (0, N_PAD - N_CLASSES)))
    return [kp[k] for k in PARAM_ORDER]


def _round_up(a, m):
    return ((a + m - 1) // m) * m


def mlp_mixer_forward(x, params, tile_b=256, compute_dtype=jnp.bfloat16,
                      approximate_gelu=True):
    # layout: x is NCHW (B, C, H, W) float32, same as the PyTorch module input.
    # Set compute_dtype=jnp.float32 and approximate_gelu=False for strict
    # fp32 / torch.nn.GELU() parity.
    B, C, H, W = x.shape
    assert (C, H, W) == (IN_CHANS, IMG, IMG)

    # patch extraction glue: matches reshape/permute in forward_embed
    patches = x.reshape(B, C, PH, PATCH, PW, PATCH)
    patches = patches.transpose(0, 2, 4, 3, 5, 1)            # (B, PH, PW, p1, p2, C)
    patches = patches.reshape(B, S, P).astype(compute_dtype)

    # Batch tile: cap at ceil(B/2) (rounded to 8) so there are >= 2 grid tiles
    # for moderate/large B (v7x dual TensorCore), while tile_b bounds VMEM use.
    tb = max(8, min(tile_b, _round_up(pl.cdiv(B, 2), 8)))
    n_tiles = pl.cdiv(B, tb)
    b_pad = n_tiles * tb
    if b_pad != B:
        patches = jnp.pad(patches, ((0, b_pad - B), (0, 0), (0, 0)))
    # Pre-flatten to 2-D so the input DMA is a plain contiguous row-block copy.
    patches2d = patches.reshape(b_pad * S, P)

    param_list = _kernel_layout_params(params, compute_dtype)

    in_specs = [pl.BlockSpec((tb * S, P), lambda b: (b, 0))]
    for arr in param_list:
        # full-array block, same block for every grid step
        in_specs.append(pl.BlockSpec(arr.shape, lambda b, _n=arr.ndim: (0,) * _n))

    kernel = functools.partial(mixer_kernel, approximate_gelu=approximate_gelu)

    out = pl.pallas_call(
        kernel,
        out_shape=jax.ShapeDtypeStruct((b_pad, N_PAD), jnp.float32),
        grid=(n_tiles,),
        in_specs=in_specs,
        out_specs=pl.BlockSpec((tb, N_PAD), lambda b: (b, 0)),
        compiler_params=pltpu.CompilerParams(
            dimension_semantics=("parallel",),      # shard batch tiles across cores
            vmem_limit_bytes=32 * 1024 * 1024,      # safe on v5e/v6e/v7x for tb<=256
        ),
    )(patches2d, *param_list)

    return out[:B, :N_CLASSES]


if __name__ == "__main__":
    key = jax.random.PRNGKey(0)
    k_x, k_p = jax.random.split(key)
    x = jax.random.normal(k_x, (2, IN_CHANS, IMG, IMG), dtype=jnp.float32)
    params = init_params(k_p)

    logits = mlp_mixer_forward(x, params)
    jax.block_until_ready(logits)
    assert logits.shape == (2, N_CLASSES)
    print("KERNEL_OK")
</pallas_src>

<mosaic_0001>
module attributes {stable_mosaic.version = 11 : i64} {
  func.func @mixer_kernel(%arg0: i32, %arg1: memref<128x48xbf16, #tpu.memory_space<vmem>>, %arg2: memref<48x32xbf16, #tpu.memory_space<vmem>>, %arg3: memref<1x32xf32, #tpu.memory_space<vmem>>, %arg4: memref<2x1x32xf32, #tpu.memory_space<vmem>>, %arg5: memref<2x1x32xf32, #tpu.memory_space<vmem>>, %arg6: memref<2x16x64xbf16, #tpu.memory_space<vmem>>, %arg7: memref<2x1x64xf32, #tpu.memory_space<vmem>>, %arg8: memref<2x64x16xbf16, #tpu.memory_space<vmem>>, %arg9: memref<2x1x16xf32, #tpu.memory_space<vmem>>, %arg10: memref<2x1x32xf32, #tpu.memory_space<vmem>>, %arg11: memref<2x1x32xf32, #tpu.memory_space<vmem>>, %arg12: memref<2x32x16xbf16, #tpu.memory_space<vmem>>, %arg13: memref<2x1x16xf32, #tpu.memory_space<vmem>>, %arg14: memref<2x16x32xbf16, #tpu.memory_space<vmem>>, %arg15: memref<2x1x32xf32, #tpu.memory_space<vmem>>, %arg16: memref<1x32xf32, #tpu.memory_space<vmem>>, %arg17: memref<1x32xf32, #tpu.memory_space<vmem>>, %arg18: memref<32x128xbf16, #tpu.memory_space<vmem>>, %arg19: memref<1x128xf32, #tpu.memory_space<vmem>>, %arg20: memref<8x128xf32, #tpu.memory_space<vmem>>) attributes {dimension_semantics = [#tpu.dimension_semantics<parallel>], iteration_bounds = array<i64: 1>, scalar_prefetch = 0 : i64, scratch_operands = 0 : i64, tpu.core_type = #tpu.core_type<tc>, window_params = [{transform_indices = @transform_0, window_bounds = array<i64: 128, 48>}, {pipeline_mode = #tpu.pipeline_mode<synchronous>, transform_indices = @transform_1, window_bounds = array<i64: 48, 32>}, {pipeline_mode = #tpu.pipeline_mode<synchronous>, transform_indices = @transform_2, window_bounds = array<i64: 1, 32>}, {pipeline_mode = #tpu.pipeline_mode<synchronous>, transform_indices = @transform_3, window_bounds = array<i64: 2, 1, 32>}, {pipeline_mode = #tpu.pipeline_mode<synchronous>, transform_indices = @transform_4, window_bounds = array<i64: 2, 1, 32>}, {pipeline_mode = #tpu.pipeline_mode<synchronous>, transform_indices = @transform_5, window_bounds = array<i64: 2, 16, 64>}, {pipeline_mode = #tpu.pipeline_mode<synchronous>, transform_indices = @transform_6, window_bounds = array<i64: 2, 1, 64>}, {pipeline_mode = #tpu.pipeline_mode<synchronous>, transform_indices = @transform_7, window_bounds = array<i64: 2, 64, 16>}, {pipeline_mode = #tpu.pipeline_mode<synchronous>, transform_indices = @transform_8, window_bounds = array<i64: 2, 1, 16>}, {pipeline_mode = #tpu.pipeline_mode<synchronous>, transform_indices = @transform_9, window_bounds = array<i64: 2, 1, 32>}, {pipeline_mode = #tpu.pipeline_mode<synchronous>, transform_indices = @transform_10, window_bounds = array<i64: 2, 1, 32>}, {pipeline_mode = #tpu.pipeline_mode<synchronous>, transform_indices = @transform_11, window_bounds = array<i64: 2, 32, 16>}, {pipeline_mode = #tpu.pipeline_mode<synchronous>, transform_indices = @transform_12, window_bounds = array<i64: 2, 1, 16>}, {pipeline_mode = #tpu.pipeline_mode<synchronous>, transform_indices = @transform_13, window_bounds = array<i64: 2, 16, 32>}, {pipeline_mode = #tpu.pipeline_mode<synchronous>, transform_indices = @transform_14, window_bounds = array<i64: 2, 1, 32>}, {pipeline_mode = #tpu.pipeline_mode<synchronous>, transform_indices = @transform_15, window_bounds = array<i64: 1, 32>}, {pipeline_mode = #tpu.pipeline_mode<synchronous>, transform_indices = @transform_16, window_bounds = array<i64: 1, 32>}, {pipeline_mode = #tpu.pipeline_mode<synchronous>, transform_indices = @transform_17, window_bounds = array<i64: 32, 128>}, {pipeline_mode = #tpu.pipeline_mode<synchronous>, transform_indices = @transform_18, window_bounds = array<i64: 1, 128>}, {transform_indices = @transform_19, window_bounds = array<i64: 8, 128>}]} {
    %c0 = arith.constant 0 : index
    %c0_0 = arith.constant 0 : index
    %0 = vector.load %arg1[%c0, %c0_0] : memref<128x48xbf16, #tpu.memory_space<vmem>>, vector<128x48xbf16>
    %c0_1 = arith.constant 0 : index
    %c0_2 = arith.constant 0 : index
    %1 = vector.load %arg2[%c0_1, %c0_2] : memref<48x32xbf16, #tpu.memory_space<vmem>>, vector<48x32xbf16>
    %cst = arith.constant dense<0.000000e+00> : vector<128x32xf32>
    %2 = tpu.matmul %0, %1, %cst {dimension_numbers = #tpu.dot_dimension_numbers<[1], [0], [0], [1], [0, 0, 1, 1], [], []>} : vector<128x48xbf16>, vector<48x32xbf16>, vector<128x32xf32> -> vector<128x32xf32>
    %c0_3 = arith.constant 0 : index
    %c0_4 = arith.constant 0 : index
    %3 = vector.load %arg3[%c0_3, %c0_4] : memref<1x32xf32, #tpu.memory_space<vmem>>, vector<1x32xf32>
    %4 = vector.broadcast %3 : vector<1x32xf32> to vector<128x32xf32>
    %5 = arith.addf %2, %4 : vector<128x32xf32>
    %c0_5 = arith.constant 0 : index
    %c0_6 = arith.constant 0 : index
    %c0_7 = arith.constant 0 : index
    %6 = vector.load %arg4[%c0_5, %c0_6, %c0_7] : memref<2x1x32xf32, #tpu.memory_space<vmem>>, vector<1x1x32xf32>
    %7 = vector.shape_cast %6 : vector<1x1x32xf32> to vector<1x32xf32>
    %c0_8 = arith.constant 0 : index
    %c0_9 = arith.constant 0 : index
    %c0_10 = arith.constant 0 : index
    %8 = vector.load %arg5[%c0_8, %c0_9, %c0_10] : memref<2x1x32xf32, #tpu.memory_space<vmem>>, vector<1x1x32xf32>
    %9 = vector.shape_cast %8 : vector<1x1x32xf32> to vector<1x32xf32>
    %cst_11 = arith.constant dense<0.000000e+00> : vector<128xf32>
    %10 = vector.multi_reduction <add>, %5, %cst_11 [1] : vector<128x32xf32> to vector<128xf32>
    %11 = vector.shape_cast %10 : vector<128xf32> to vector<128x1xf32>
    %cst_12 = arith.constant 3.200000e+01 : f32
    %12 = vector.broadcast %cst_12 : f32 to vector<128x1xf32>
    %13 = arith.divf %11, %12 : vector<128x1xf32>
    %14 = arith.mulf %5, %5 : vector<128x32xf32>
    %cst_13 = arith.constant dense<0.000000e+00> : vector<128xf32>
    %15 = vector.multi_reduction <add>, %14, %cst_13 [1] : vector<128x32xf32> to vector<128xf32>
    %16 = vector.shape_cast %15 : vector<128xf32> to vector<128x1xf32>
    %cst_14 = arith.constant 3.200000e+01 : f32
    %17 = vector.broadcast %cst_14 : f32 to vector<128x1xf32>
    %18 = arith.divf %16, %17 : vector<128x1xf32>
    %19 = arith.mulf %13, %13 : vector<128x1xf32>
    %20 = arith.subf %18, %19 : vector<128x1xf32>
    %21 = vector.broadcast %13 : vector<128x1xf32> to vector<128x32xf32>
    %22 = arith.subf %5, %21 : vector<128x32xf32>
    %cst_15 = arith.constant 9.99999974E-6 : f32
    %23 = vector.broadcast %cst_15 : f32 to vector<128x1xf32>
    %24 = arith.addf %20, %23 : vector<128x1xf32>
    %25 = math.rsqrt %24 : vector<128x1xf32>
    %26 = vector.broadcast %25 : vector<128x1xf32> to vector<128x32xf32>
    %27 = arith.mulf %22, %26 : vector<128x32xf32>
    %28 = vector.broadcast %7 : vector<1x32xf32> to vector<128x32xf32>
    %29 = arith.mulf %27, %28 : vector<128x32xf32>
    %30 = vector.broadcast %9 : vector<1x32xf32> to vector<128x32xf32>
    %31 = arith.addf %29, %30 : vector<128x32xf32>
    %32 = arith.truncf %31 : vector<128x32xf32> to vector<128x32xbf16>
    %33 = vector.shape_cast %32 : vector<128x32xbf16> to vector<8x16x32xbf16>
    %34 = tpu.transpose %33, [0, 2, 1] : vector<8x16x32xbf16> -> vector<8x32x16xbf16>
    %35 = vector.shape_cast %34 : vector<8x32x16xbf16> to vector<256x16xbf16>
    %c0_16 = arith.constant 0 : index
    %c0_17 = arith.constant 0 : index
    %c0_18 = arith.constant 0 : index
    %36 = vector.load %arg6[%c0_16, %c0_17, %c0_18] : memref<2x16x64xbf16, #tpu.memory_space<vmem>>, vector<1x16x64xbf16>
    %37 = vector.shape_cast %36 : vector<1x16x64xbf16> to vector<16x64xbf16>
    %cst_19 = arith.constant dense<0.000000e+00> : vector<256x64xf32>
    %38 = tpu.matmul %35, %37, %cst_19 {dimension_numbers = #tpu.dot_dimension_numbers<[1], [0], [0], [1], [0, 0, 1, 1], [], []>} : vector<256x16xbf16>, vector<16x64xbf16>, vector<256x64xf32> -> vector<256x64xf32>
    %c0_20 = arith.constant 0 : index
    %c0_21 = arith.constant 0 : index
    %c0_22 = arith.constant 0 : index
    %39 = vector.load %arg7[%c0_20, %c0_21, %c0_22] : memref<2x1x64xf32, #tpu.memory_space<vmem>>, vector<1x1x64xf32>
    %40 = vector.shape_cast %39 : vector<1x1x64xf32> to vector<1x64xf32>
    %41 = vector.broadcast %40 : vector<1x64xf32> to vector<256x64xf32>
    %42 = arith.addf %38, %41 : vector<256x64xf32>
    %cst_23 = arith.constant 5.000000e-01 : f32
    %43 = vector.broadcast %cst_23 : f32 to vector<256x64xf32>
    %44 = arith.mulf %43, %42 : vector<256x64xf32>
    %cst_24 = arith.constant 4.471500e-02 : f32
    %45 = vector.broadcast %cst_24 : f32 to vector<256x64xf32>
    %46 = arith.mulf %45, %42 : vector<256x64xf32>
    %47 = arith.mulf %46, %42 : vector<256x64xf32>
    %48 = arith.mulf %47, %42 : vector<256x64xf32>
    %49 = arith.addf %42, %48 : vector<256x64xf32>
    %cst_25 = arith.constant 0.797884583 : f32
    %50 = vector.broadcast %cst_25 : f32 to vector<256x64xf32>
    %51 = arith.mulf %50, %49 : vector<256x64xf32>
    %52 = math.tanh %51 : vector<256x64xf32>
    %cst_26 = arith.constant 1.000000e+00 : f32
    %53 = vector.broadcast %cst_26 : f32 to vector<256x64xf32>
    %54 = arith.addf %53, %52 : vector<256x64xf32>
    %55 = arith.mulf %44, %54 : vector<256x64xf32>
    %56 = arith.truncf %55 : vector<256x64xf32> to vector<256x64xbf16>
    %c0_27 = arith.constant 0 : index
    %c0_28 = arith.constant 0 : index
    %c0_29 = arith.constant 0 : index
    %57 = vector.load %arg8[%c0_27, %c0_28, %c0_29] : memref<2x64x16xbf16, #tpu.memory_space<vmem>>, vector<1x64x16xbf16>
    %58 = vector.shape_cast %57 : vector<1x64x16xbf16> to vector<64x16xbf16>
    %cst_30 = arith.constant dense<0.000000e+00> : vector<256x16xf32>
    %59 = tpu.matmul %56, %58, %cst_30 {dimension_numbers = #tpu.dot_dimension_numbers<[1], [0], [0], [1], [0, 0, 1, 1], [], []>} : vector<256x64xbf16>, vector<64x16xbf16>, vector<256x16xf32> -> vector<256x16xf32>
    %c0_31 = arith.constant 0 : index
    %c0_32 = arith.constant 0 : index
    %c0_33 = arith.constant 0 : index
    %60 = vector.load %arg9[%c0_31, %c0_32, %c0_33] : memref<2x1x16xf32, #tpu.memory_space<vmem>>, vector<1x1x16xf32>
    %61 = vector.shape_cast %60 : vector<1x1x16xf32> to vector<1x16xf32>
    %62 = vector.broadcast %61 : vector<1x16xf32> to vector<256x16xf32>
    %63 = arith.addf %59, %62 : vector<256x16xf32>
    %64 = arith.truncf %63 : vector<256x16xf32> to vector<256x16xbf16>
    %65 = vector.shape_cast %64 : vector<256x16xbf16> to vector<8x32x16xbf16>
    %66 = tpu.transpose %65, [0, 2, 1] : vector<8x32x16xbf16> -> vector<8x16x32xbf16>
    %67 = vector.shape_cast %66 : vector<8x16x32xbf16> to vector<128x32xbf16>
    %c0_34 = arith.constant 0 : index
    %c0_35 = arith.constant 0 : index
    %c0_36 = arith.constant 0 : index
    %68 = vector.load %arg10[%c0_34, %c0_35, %c0_36] : memref<2x1x32xf32, #tpu.memory_space<vmem>>, vector<1x1x32xf32>
    %69 = vector.shape_cast %68 : vector<1x1x32xf32> to vector<1x32xf32>
    %c0_37 = arith.constant 0 : index
    %c0_38 = arith.constant 0 : index
    %c0_39 = arith.constant 0 : index
    %70 = vector.load %arg11[%c0_37, %c0_38, %c0_39] : memref<2x1x32xf32, #tpu.memory_space<vmem>>, vector<1x1x32xf32>
    %71 = vector.shape_cast %70 : vector<1x1x32xf32> to vector<1x32xf32>
    %72 = arith.extf %67 : vector<128x32xbf16> to vector<128x32xf32>
    %cst_40 = arith.constant dense<0.000000e+00> : vector<128xf32>
    %73 = vector.multi_reduction <add>, %72, %cst_40 [1] : vector<128x32xf32> to vector<128xf32>
    %74 = vector.shape_cast %73 : vector<128xf32> to vector<128x1xf32>
    %cst_41 = arith.constant 3.200000e+01 : f32
    %75 = vector.broadcast %cst_41 : f32 to vector<128x1xf32>
    %76 = arith.divf %74, %75 : vector<128x1xf32>
    %77 = arith.mulf %72, %72 : vector<128x32xf32>
    %cst_42 = arith.constant dense<0.000000e+00> : vector<128xf32>
    %78 = vector.multi_reduction <add>, %77, %cst_42 [1] : vector<128x32xf32> to vector<128xf32>
    %79 = vector.shape_cast %78 : vector<128xf32> to vector<128x1xf32>
    %cst_43 = arith.constant 3.200000e+01 : f32
    %80 = vector.broadcast %cst_43 : f32 to vector<128x1xf32>
    %81 = arith.divf %79, %80 : vector<128x1xf32>
    %82 = arith.mulf %76, %76 : vector<128x1xf32>
    %83 = arith.subf %81, %82 : vector<128x1xf32>
    %84 = vector.broadcast %76 : vector<128x1xf32> to vector<128x32xf32>
    %85 = arith.subf %72, %84 : vector<128x32xf32>
    %cst_44 = arith.constant 9.99999974E-6 : f32
    %86 = vector.broadcast %cst_44 : f32 to vector<128x1xf32>
    %87 = arith.addf %83, %86 : vector<128x1xf32>
    %88 = math.rsqrt %87 : vector<128x1xf32>
    %89 = vector.broadcast %88 : vector<128x1xf32> to vector<128x32xf32>
    %90 = arith.mulf %85, %89 : vector<128x32xf32>
    %91 = vector.broadcast %69 : vector<1x32xf32> to vector<128x32xf32>
    %92 = arith.mulf %90, %91 : vector<128x32xf32>
    %93 = vector.broadcast %71 : vector<1x32xf32> to vector<128x32xf32>
    %94 = arith.addf %92, %93 : vector<128x32xf32>
    %95 = arith.truncf %94 : vector<128x32xf32> to vector<128x32xbf16>
    %c0_45 = arith.constant 0 : index
    %c0_46 = arith.constant 0 : index
    %c0_47 = arith.constant 0 : index
    %96 = vector.load %arg12[%c0_45, %c0_46, %c0_47] : memref<2x32x16xbf16, #tpu.memory_space<vmem>>, vector<1x32x16xbf16>
    %97 = vector.shape_cast %96 : vector<1x32x16xbf16> to vector<32x16xbf16>
    %cst_48 = arith.constant dense<0.000000e+00> : vector<128x16xf32>
    %98 = tpu.matmul %95, %97, %cst_48 {dimension_numbers = #tpu.dot_dimension_numbers<[1], [0], [0], [1], [0, 0, 1, 1], [], []>} : vector<128x32xbf16>, vector<32x16xbf16>, vector<128x16xf32> -> vector<128x16xf32>
    %c0_49 = arith.constant 0 : index
    %c0_50 = arith.constant 0 : index
    %c0_51 = arith.constant 0 : index
    %99 = vector.load %arg13[%c0_49, %c0_50, %c0_51] : memref<2x1x16xf32, #tpu.memory_space<vmem>>, vector<1x1x16xf32>
    %100 = vector.shape_cast %99 : vector<1x1x16xf32> to vector<1x16xf32>
    %101 = vector.broadcast %100 : vector<1x16xf32> to vector<128x16xf32>
    %102 = arith.addf %98, %101 : vector<128x16xf32>
    %cst_52 = arith.constant 5.000000e-01 : f32
    %103 = vector.broadcast %cst_52 : f32 to vector<128x16xf32>
    %104 = arith.mulf %103, %102 : vector<128x16xf32>
    %cst_53 = arith.constant 4.471500e-02 : f32
    %105 = vector.broadcast %cst_53 : f32 to vector<128x16xf32>
    %106 = arith.mulf %105, %102 : vector<128x16xf32>
    %107 = arith.mulf %106, %102 : vector<128x16xf32>
    %108 = arith.mulf %107, %102 : vector<128x16xf32>
    %109 = arith.addf %102, %108 : vector<128x16xf32>
    %cst_54 = arith.constant 0.797884583 : f32
    %110 = vector.broadcast %cst_54 : f32 to vector<128x16xf32>
    %111 = arith.mulf %110, %109 : vector<128x16xf32>
    %112 = math.tanh %111 : vector<128x16xf32>
    %cst_55 = arith.constant 1.000000e+00 : f32
    %113 = vector.broadcast %cst_55 : f32 to vector<128x16xf32>
    %114 = arith.addf %113, %112 : vector<128x16xf32>
    %115 = arith.mulf %104, %114 : vector<128x16xf32>
    %116 = arith.truncf %115 : vector<128x16xf32> to vector<128x16xbf16>
    %c0_56 = arith.constant 0 : index
    %c0_57 = arith.constant 0 : index
    %c0_58 = arith.constant 0 : index
    %117 = vector.load %arg14[%c0_56, %c0_57, %c0_58] : memref<2x16x32xbf16, #tpu.memory_space<vmem>>, vector<1x16x32xbf16>
    %118 = vector.shape_cast %117 : vector<1x16x32xbf16> to vector<16x32xbf16>
    %cst_59 = arith.constant dense<0.000000e+00> : vector<128x32xf32>
    %119 = tpu.matmul %116, %118, %cst_59 {dimension_numbers = #tpu.dot_dimension_numbers<[1], [0], [0], [1], [0, 0, 1, 1], [], []>} : vector<128x16xbf16>, vector<16x32xbf16>, vector<128x32xf32> -> vector<128x32xf32>
    %c0_60 = arith.constant 0 : index
    %c0_61 = arith.constant 0 : index
    %c0_62 = arith.constant 0 : index
    %120 = vector.load %arg15[%c0_60, %c0_61, %c0_62] : memref<2x1x32xf32, #tpu.memory_space<vmem>>, vector<1x1x32xf32>
    %121 = vector.shape_cast %120 : vector<1x1x32xf32> to vector<1x32xf32>
    %122 = vector.broadcast %121 : vector<1x32xf32> to vector<128x32xf32>
    %123 = arith.addf %119, %122 : vector<128x32xf32>
    %124 = arith.addf %5, %123 : vector<128x32xf32>
    %c1 = arith.constant 1 : index
    %c0_63 = arith.constant 0 : index
    %c0_64 = arith.constant 0 : index
    %125 = vector.load %arg4[%c1, %c0_63, %c0_64] : memref<2x1x32xf32, #tpu.memory_space<vmem>>, vector<1x1x32xf32>
    %126 = vector.shape_cast %125 : vector<1x1x32xf32> to vector<1x32xf32>
    %c1_65 = arith.constant 1 : index
    %c0_66 = arith.constant 0 : index
    %c0_67 = arith.constant 0 : index
    %127 = vector.load %arg5[%c1_65, %c0_66, %c0_67] : memref<2x1x32xf32, #tpu.memory_space<vmem>>, vector<1x1x32xf32>
    %128 = vector.shape_cast %127 : vector<1x1x32xf32> to vector<1x32xf32>
    %cst_68 = arith.constant dense<0.000000e+00> : vector<128xf32>
    %129 = vector.multi_reduction <add>, %124, %cst_68 [1] : vector<128x32xf32> to vector<128xf32>
    %130 = vector.shape_cast %129 : vector<128xf32> to vector<128x1xf32>
    %cst_69 = arith.constant 3.200000e+01 : f32
    %131 = vector.broadcast %cst_69 : f32 to vector<128x1xf32>
    %132 = arith.divf %130, %131 : vector<128x1xf32>
    %133 = arith.mulf %124, %124 : vector<128x32xf32>
    %cst_70 = arith.constant dense<0.000000e+00> : vector<128xf32>
    %134 = vector.multi_reduction <add>, %133, %cst_70 [1] : vector<128x32xf32> to vector<128xf32>
    %135 = vector.shape_cast %134 : vector<128xf32> to vector<128x1xf32>
    %cst_71 = arith.constant 3.200000e+01 : f32
    %136 = vector.broadcast %cst_71 : f32 to vector<128x1xf32>
    %137 = arith.divf %135, %136 : vector<128x1xf32>
    %138 = arith.mulf %132, %132 : vector<128x1xf32>
    %139 = arith.subf %137, %138 : vector<128x1xf32>
    %140 = vector.broadcast %132 : vector<128x1xf32> to vector<128x32xf32>
    %141 = arith.subf %124, %140 : vector<128x32xf32>
    %cst_72 = arith.constant 9.99999974E-6 : f32
    %142 = vector.broadcast %cst_72 : f32 to vector<128x1xf32>
    %143 = arith.addf %139, %142 : vector<128x1xf32>
    %144 = math.rsqrt %143 : vector<128x1xf32>
    %145 = vector.broadcast %144 : vector<128x1xf32> to vector<128x32xf32>
    %146 = arith.mulf %141, %145 : vector<128x32xf32>
    %147 = vector.broadcast %126 : vector<1x32xf32> to vector<128x32xf32>
    %148 = arith.mulf %146, %147 : vector<128x32xf32>
    %149 = vector.broadcast %128 : vector<1x32xf32> to vector<128x32xf32>
    %150 = arith.addf %148, %149 : vector<128x32xf32>
    %151 = arith.truncf %150 : vector<128x32xf32> to vector<128x32xbf16>
    %152 = vector.shape_cast %151 : vector<128x32xbf16> to vector<8x16x32xbf16>
    %153 = tpu.transpose %152, [0, 2, 1] : vector<8x16x32xbf16> -> vector<8x32x16xbf16>
    %154 = vector.shape_cast %153 : vector<8x32x16xbf16> to vector<256x16xbf16>
    %c1_73 = arith.constant 1 : index
    %c0_74 = arith.constant 0 : index
    %c0_75 = arith.constant 0 : index
    %155 = vector.load %arg6[%c1_73, %c0_74, %c0_75] : memref<2x16x64xbf16, #tpu.memory_space<vmem>>, vector<1x16x64xbf16>
    %156 = vector.shape_cast %155 : vector<1x16x64xbf16> to vector<16x64xbf16>
    %cst_76 = arith.constant dense<0.000000e+00> : vector<256x64xf32>
    %157 = tpu.matmul %154, %156, %cst_76 {dimension_numbers = #tpu.dot_dimension_numbers<[1], [0], [0], [1], [0, 0, 1, 1], [], []>} : vector<256x16xbf16>, vector<16x64xbf16>, vector<256x64xf32> -> vector<256x64xf32>
    %c1_77 = arith.constant 1 : index
    %c0_78 = arith.constant 0 : index
    %c0_79 = arith.constant 0 : index
    %158 = vector.load %arg7[%c1_77, %c0_78, %c0_79] : memref<2x1x64xf32, #tpu.memory_space<vmem>>, vector<1x1x64xf32>
    %159 = vector.shape_cast %158 : vector<1x1x64xf32> to vector<1x64xf32>
    %160 = vector.broadcast %159 : vector<1x64xf32> to vector<256x64xf32>
    %161 = arith.addf %157, %160 : vector<256x64xf32>
    %cst_80 = arith.constant 5.000000e-01 : f32
    %162 = vector.broadcast %cst_80 : f32 to vector<256x64xf32>
    %163 = arith.mulf %162, %161 : vector<256x64xf32>
    %cst_81 = arith.constant 4.471500e-02 : f32
    %164 = vector.broadcast %cst_81 : f32 to vector<256x64xf32>
    %165 = arith.mulf %164, %161 : vector<256x64xf32>
    %166 = arith.mulf %165, %161 : vector<256x64xf32>
    %167 = arith.mulf %166, %161 : vector<256x64xf32>
    %168 = arith.addf %161, %167 : vector<256x64xf32>
    %cst_82 = arith.constant 0.797884583 : f32
    %169 = vector.broadcast %cst_82 : f32 to vector<256x64xf32>
    %170 = arith.mulf %169, %168 : vector<256x64xf32>
    %171 = math.tanh %170 : vector<256x64xf32>
    %cst_83 = arith.constant 1.000000e+00 : f32
    %172 = vector.broadcast %cst_83 : f32 to vector<256x64xf32>
    %173 = arith.addf %172, %171 : vector<256x64xf32>
    %174 = arith.mulf %163, %173 : vector<256x64xf32>
    %175 = arith.truncf %174 : vector<256x64xf32> to vector<256x64xbf16>
    %c1_84 = arith.constant 1 : index
    %c0_85 = arith.constant 0 : index
    %c0_86 = arith.constant 0 : index
    %176 = vector.load %arg8[%c1_84, %c0_85, %c0_86] : memref<2x64x16xbf16, #tpu.memory_space<vmem>>, vector<1x64x16xbf16>
    %177 = vector.shape_cast %176 : vector<1x64x16xbf16> to vector<64x16xbf16>
    %cst_87 = arith.constant dense<0.000000e+00> : vector<256x16xf32>
    %178 = tpu.matmul %175, %177, %cst_87 {dimension_numbers = #tpu.dot_dimension_numbers<[1], [0], [0], [1], [0, 0, 1, 1], [], []>} : vector<256x64xbf16>, vector<64x16xbf16>, vector<256x16xf32> -> vector<256x16xf32>
    %c1_88 = arith.constant 1 : index
    %c0_89 = arith.constant 0 : index
    %c0_90 = arith.constant 0 : index
    %179 = vector.load %arg9[%c1_88, %c0_89, %c0_90] : memref<2x1x16xf32, #tpu.memory_space<vmem>>, vector<1x1x16xf32>
    %180 = vector.shape_cast %179 : vector<1x1x16xf32> to vector<1x16xf32>
    %181 = vector.broadcast %180 : vector<1x16xf32> to vector<256x16xf32>
    %182 = arith.addf %178, %181 : vector<256x16xf32>
    %183 = arith.truncf %182 : vector<256x16xf32> to vector<256x16xbf16>
    %184 = vector.shape_cast %183 : vector<256x16xbf16> to vector<8x32x16xbf16>
    %185 = tpu.transpose %184, [0, 2, 1] : vector<8x32x16xbf16> -> vector<8x16x32xbf16>
    %186 = vector.shape_cast %185 : vector<8x16x32xbf16> to vector<128x32xbf16>
    %c1_91 = arith.constant 1 : index
    %c0_92 = arith.constant 0 : index
    %c0_93 = arith.constant 0 : index
    %187 = vector.load %arg10[%c1_91, %c0_92, %c0_93] : memref<2x1x32xf32, #tpu.memory_space<vmem>>, vector<1x1x32xf32>
    %188 = vector.shape_cast %187 : vector<1x1x32xf32> to vector<1x32xf32>
    %c1_94 = arith.constant 1 : index
    %c0_95 = arith.constant 0 : index
    %c0_96 = arith.constant 0 : index
    %189 = vector.load %arg11[%c1_94, %c0_95, %c0_96] : memref<2x1x32xf32, #tpu.memory_space<vmem>>, vector<1x1x32xf32>
    %190 = vector.shape_cast %189 : vector<1x1x32xf32> to vector<1x32xf32>
    %191 = arith.extf %186 : vector<128x32xbf16> to vector<128x32xf32>
    %cst_97 = arith.constant dense<0.000000e+00> : vector<128xf32>
    %192 = vector.multi_reduction <add>, %191, %cst_97 [1] : vector<128x32xf32> to vector<128xf32>
    %193 = vector.shape_cast %192 : vector<128xf32> to vector<128x1xf32>
    %cst_98 = arith.constant 3.200000e+01 : f32
    %194 = vector.broadcast %cst_98 : f32 to vector<128x1xf32>
    %195 = arith.divf %193, %194 : vector<128x1xf32>
    %196 = arith.mulf %191, %191 : vector<128x32xf32>
    %cst_99 = arith.constant dense<0.000000e+00> : vector<128xf32>
    %197 = vector.multi_reduction <add>, %196, %cst_99 [1] : vector<128x32xf32> to vector<128xf32>
    %198 = vector.shape_cast %197 : vector<128xf32> to vector<128x1xf32>
    %cst_100 = arith.constant 3.200000e+01 : f32
    %199 = vector.broadcast %cst_100 : f32 to vector<128x1xf32>
    %200 = arith.divf %198, %199 : vector<128x1xf32>
    %201 = arith.mulf %195, %195 : vector<128x1xf32>
    %202 = arith.subf %200, %201 : vector<128x1xf32>
    %203 = vector.broadcast %195 : vector<128x1xf32> to vector<128x32xf32>
    %204 = arith.subf %191, %203 : vector<128x32xf32>
    %cst_101 = arith.constant 9.99999974E-6 : f32
    %205 = vector.broadcast %cst_101 : f32 to vector<128x1xf32>
    %206 = arith.addf %202, %205 : vector<128x1xf32>
    %207 = math.rsqrt %206 : vector<128x1xf32>
    %208 = vector.broadcast %207 : vector<128x1xf32> to vector<128x32xf32>
    %209 = arith.mulf %204, %208 : vector<128x32xf32>
    %210 = vector.broadcast %188 : vector<1x32xf32> to vector<128x32xf32>
    %211 = arith.mulf %209, %210 : vector<128x32xf32>
    %212 = vector.broadcast %190 : vector<1x32xf32> to vector<128x32xf32>
    %213 = arith.addf %211, %212 : vector<128x32xf32>
    %214 = arith.truncf %213 : vector<128x32xf32> to vector<128x32xbf16>
    %c1_102 = arith.constant 1 : index
    %c0_103 = arith.constant 0 : index
    %c0_104 = arith.constant 0 : index
    %215 = vector.load %arg12[%c1_102, %c0_103, %c0_104] : memref<2x32x16xbf16, #tpu.memory_space<vmem>>, vector<1x32x16xbf16>
    %216 = vector.shape_cast %215 : vector<1x32x16xbf16> to vector<32x16xbf16>
    %cst_105 = arith.constant dense<0.000000e+00> : vector<128x16xf32>
    %217 = tpu.matmul %214, %216, %cst_105 {dimension_numbers = #tpu.dot_dimension_numbers<[1], [0], [0], [1], [0, 0, 1, 1], [], []>} : vector<128x32xbf16>, vector<32x16xbf16>, vector<128x16xf32> -> vector<128x16xf32>
    %c1_106 = arith.constant 1 : index
    %c0_107 = arith.constant 0 : index
    %c0_108 = arith.constant 0 : index
    %218 = vector.load %arg13[%c1_106, %c0_107, %c0_108] : memref<2x1x16xf32, #tpu.memory_space<vmem>>, vector<1x1x16xf32>
    %219 = vector.shape_cast %218 : vector<1x1x16xf32> to vector<1x16xf32>
    %220 = vector.broadcast %219 : vector<1x16xf32> to vector<128x16xf32>
    %221 = arith.addf %217, %220 : vector<128x16xf32>
    %cst_109 = arith.constant 5.000000e-01 : f32
    %222 = vector.broadcast %cst_109 : f32 to vector<128x16xf32>
    %223 = arith.mulf %222, %221 : vector<128x16xf32>
    %cst_110 = arith.constant 4.471500e-02 : f32
    %224 = vector.broadcast %cst_110 : f32 to vector<128x16xf32>
    %225 = arith.mulf %224, %221 : vector<128x16xf32>
    %226 = arith.mulf %225, %221 : vector<128x16xf32>
    %227 = arith.mulf %226, %221 : vector<128x16xf32>
    %228 = arith.addf %221, %227 : vector<128x16xf32>
    %cst_111 = arith.constant 0.797884583 : f32
    %229 = vector.broadcast %cst_111 : f32 to vector<128x16xf32>
    %230 = arith.mulf %229, %228 : vector<128x16xf32>
    %231 = math.tanh %230 : vector<128x16xf32>
    %cst_112 = arith.constant 1.000000e+00 : f32
    %232 = vector.broadcast %cst_112 : f32 to vector<128x16xf32>
    %233 = arith.addf %232, %231 : vector<128x16xf32>
    %234 = arith.mulf %223, %233 : vector<128x16xf32>
    %235 = arith.truncf %234 : vector<128x16xf32> to vector<128x16xbf16>
    %c1_113 = arith.constant 1 : index
    %c0_114 = arith.constant 0 : index
    %c0_115 = arith.constant 0 : index
    %236 = vector.load %arg14[%c1_113, %c0_114, %c0_115] : memref<2x16x32xbf16, #tpu.memory_space<vmem>>, vector<1x16x32xbf16>
    %237 = vector.shape_cast %236 : vector<1x16x32xbf16> to vector<16x32xbf16>
    %cst_116 = arith.constant dense<0.000000e+00> : vector<128x32xf32>
    %238 = tpu.matmul %235, %237, %cst_116 {dimension_numbers = #tpu.dot_dimension_numbers<[1], [0], [0], [1], [0, 0, 1, 1], [], []>} : vector<128x16xbf16>, vector<16x32xbf16>, vector<128x32xf32> -> vector<128x32xf32>
    %c1_117 = arith.constant 1 : index
    %c0_118 = arith.constant 0 : index
    %c0_119 = arith.constant 0 : index
    %239 = vector.load %arg15[%c1_117, %c0_118, %c0_119] : memref<2x1x32xf32, #tpu.memory_space<vmem>>, vector<1x1x32xf32>
    %240 = vector.shape_cast %239 : vector<1x1x32xf32> to vector<1x32xf32>
    %241 = vector.broadcast %240 : vector<1x32xf32> to vector<128x32xf32>
    %242 = arith.addf %238, %241 : vector<128x32xf32>
    %243 = arith.addf %124, %242 : vector<128x32xf32>
    %c0_120 = arith.constant 0 : index
    %c0_121 = arith.constant 0 : index
    %244 = vector.load %arg16[%c0_120, %c0_121] : memref<1x32xf32, #tpu.memory_space<vmem>>, vector<1x32xf32>
    %c0_122 = arith.constant 0 : index
    %c0_123 = arith.constant 0 : index
    %245 = vector.load %arg17[%c0_122, %c0_123] : memref<1x32xf32, #tpu.memory_space<vmem>>, vector<1x32xf32>
    %cst_124 = arith.constant dense<0.000000e+00> : vector<128xf32>
    %246 = vector.multi_reduction <add>, %243, %cst_124 [1] : vector<128x32xf32> to vector<128xf32>
    %247 = vector.shape_cast %246 : vector<128xf32> to vector<128x1xf32>
    %cst_125 = arith.constant 3.200000e+01 : f32
    %248 = vector.broadcast %cst_125 : f32 to vector<128x1xf32>
    %249 = arith.divf %247, %248 : vector<128x1xf32>
    %250 = arith.mulf %243, %243 : vector<128x32xf32>
    %cst_126 = arith.constant dense<0.000000e+00> : vector<128xf32>
    %251 = vector.multi_reduction <add>, %250, %cst_126 [1] : vector<128x32xf32> to vector<128xf32>
    %252 = vector.shape_cast %251 : vector<128xf32> to vector<128x1xf32>
    %cst_127 = arith.constant 3.200000e+01 : f32
    %253 = vector.broadcast %cst_127 : f32 to vector<128x1xf32>
    %254 = arith.divf %252, %253 : vector<128x1xf32>
    %255 = arith.mulf %249, %249 : vector<128x1xf32>
    %256 = arith.subf %254, %255 : vector<128x1xf32>
    %257 = vector.broadcast %249 : vector<128x1xf32> to vector<128x32xf32>
    %258 = arith.subf %243, %257 : vector<128x32xf32>
    %cst_128 = arith.constant 9.99999974E-6 : f32
    %259 = vector.broadcast %cst_128 : f32 to vector<128x1xf32>
    %260 = arith.addf %256, %259 : vector<128x1xf32>
    %261 = math.rsqrt %260 : vector<128x1xf32>
    %262 = vector.broadcast %261 : vector<128x1xf32> to vector<128x32xf32>
    %263 = arith.mulf %258, %262 : vector<128x32xf32>
    %264 = vector.broadcast %244 : vector<1x32xf32> to vector<128x32xf32>
    %265 = arith.mulf %263, %264 : vector<128x32xf32>
    %266 = vector.broadcast %245 : vector<1x32xf32> to vector<128x32xf32>
    %267 = arith.addf %265, %266 : vector<128x32xf32>
    %268 = arith.truncf %267 : vector<128x32xf32> to vector<128x32xbf16>
    %c0_129 = arith.constant 0 : index
    %c0_130 = arith.constant 0 : index
    %269 = vector.load %arg18[%c0_129, %c0_130] : memref<32x128xbf16, #tpu.memory_space<vmem>>, vector<32x128xbf16>
    %cst_131 = arith.constant dense<0.000000e+00> : vector<128x128xf32>
    %270 = tpu.matmul %268, %269, %cst_131 {dimension_numbers = #tpu.dot_dimension_numbers<[1], [0], [0], [1], [0, 0, 1, 1], [], []>} : vector<128x32xbf16>, vector<32x128xbf16>, vector<128x128xf32> -> vector<128x128xf32>
    %271 = vector.shape_cast %270 : vector<128x128xf32> to vector<8x16x128xf32>
    %cst_132 = arith.constant dense<0.000000e+00> : vector<8x128xf32>
    %272 = vector.multi_reduction <add>, %271, %cst_132 [1] : vector<8x16x128xf32> to vector<8x128xf32>
    %cst_133 = arith.constant 6.250000e-02 : f32
    %273 = vector.broadcast %cst_133 : f32 to vector<8x128xf32>
    %274 = arith.mulf %272, %273 : vector<8x128xf32>
    %c0_134 = arith.constant 0 : index
    %c0_135 = arith.constant 0 : index
    %275 = vector.load %arg19[%c0_134, %c0_135] : memref<1x128xf32, #tpu.memory_space<vmem>>, vector<1x128xf32>
    %276 = vector.broadcast %275 : vector<1x128xf32> to vector<8x128xf32>
    %277 = arith.addf %274, %276 : vector<8x128xf32>
    %c0_136 = arith.constant 0 : index
    %c0_137 = arith.constant 0 : index
    %278 = vector.load %arg20[%c0_136, %c0_137] : memref<8x128xf32, #tpu.memory_space<vmem>>, vector<8x128xf32>
    tpu.vector_store %arg20[%c0_136, %c0_137], %277 {strides = array<i32>} : memref<8x128xf32, #tpu.memory_space<vmem>>, vector<8x128xf32>,
    return
  }
  func.func @transform_0(%arg0: i32) -> (i32, i32) {
    %c0_i32 = arith.constant 0 : i32
    %c0_i32_0 = arith.constant 0 : i32
    return %arg0, %c0_i32 : i32, i32
  }
  func.func @transform_1(%arg0: i32) -> (i32, i32) {
    %c0_i32 = arith.constant 0 : i32
    %c0_i32_0 = arith.constant 0 : i32
    %c0_i32_1 = arith.constant 0 : i32
    return %c0_i32, %c0_i32_0 : i32, i32
  }
  func.func @transform_2(%arg0: i32) -> (i32, i32) {
    %c0_i32 = arith.constant 0 : i32
    %c0_i32_0 = arith.constant 0 : i32
    %c0_i32_1 = arith.constant 0 : i32
    return %c0_i32, %c0_i32_0 : i32, i32
  }
  func.func @transform_3(%arg0: i32) -> (i32, i32, i32) {
    %c0_i32 = arith.constant 0 : i32
    %c0_i32_0 = arith.constant 0 : i32
    %c0_i32_1 = arith.constant 0 : i32
    %c0_i32_2 = arith.constant 0 : i32
    return %c0_i32, %c0_i32_0, %c0_i32_1 : i32, i32, i32
  }
  func.func @transform_4(%arg0: i32) -> (i32, i32, i32) {
    %c0_i32 = arith.constant 0 : i32
    %c0_i32_0 = arith.constant 0 : i32
    %c0_i32_1 = arith.constant 0 : i32
    %c0_i32_2 = arith.constant 0 : i32
    return %c0_i32, %c0_i32_0, %c0_i32_1 : i32, i32, i32
  }
  func.func @transform_5(%arg0: i32) -> (i32, i32, i32) {
    %c0_i32 = arith.constant 0 : i32
    %c0_i32_0 = arith.constant 0 : i32
    %c0_i32_1 = arith.constant 0 : i32
    %c0_i32_2 = arith.constant 0 : i32
    return %c0_i32, %c0_i32_0, %c0_i32_1 : i32, i32, i32
  }
  func.func @transform_6(%arg0: i32) -> (i32, i32, i32) {
    %c0_i32 = arith.constant 0 : i32
    %c0_i32_0 = arith.constant 0 : i32
    %c0_i32_1 = arith.constant 0 : i32
    %c0_i32_2 = arith.constant 0 : i32
    return %c0_i32, %c0_i32_0, %c0_i32_1 : i32, i32, i32
  }
  func.func @transform_7(%arg0: i32) -> (i32, i32, i32) {
    %c0_i32 = arith.constant 0 : i32
    %c0_i32_0 = arith.constant 0 : i32
    %c0_i32_1 = arith.constant 0 : i32
    %c0_i32_2 = arith.constant 0 : i32
    return %c0_i32, %c0_i32_0, %c0_i32_1 : i32, i32, i32
  }
  func.func @transform_8(%arg0: i32) -> (i32, i32, i32) {
    %c0_i32 = arith.constant 0 : i32
    %c0_i32_0 = arith.constant 0 : i32
    %c0_i32_1 = arith.constant 0 : i32
    %c0_i32_2 = arith.constant 0 : i32
    return %c0_i32, %c0_i32_0, %c0_i32_1 : i32, i32, i32
  }
  func.func @transform_9(%arg0: i32) -> (i32, i32, i32) {
    %c0_i32 = arith.constant 0 : i32
    %c0_i32_0 = arith.constant 0 : i32
    %c0_i32_1 = arith.constant 0 : i32
    %c0_i32_2 = arith.constant 0 : i32
    return %c0_i32, %c0_i32_0, %c0_i32_1 : i32, i32, i32
  }
  func.func @transform_10(%arg0: i32) -> (i32, i32, i32) {
    %c0_i32 = arith.constant 0 : i32
    %c0_i32_0 = arith.constant 0 : i32
    %c0_i32_1 = arith.constant 0 : i32
    %c0_i32_2 = arith.constant 0 : i32
    return %c0_i32, %c0_i32_0, %c0_i32_1 : i32, i32, i32
  }
  func.func @transform_11(%arg0: i32) -> (i32, i32, i32) {
    %c0_i32 = arith.constant 0 : i32
    %c0_i32_0 = arith.constant 0 : i32
    %c0_i32_1 = arith.constant 0 : i32
    %c0_i32_2 = arith.constant 0 : i32
    return %c0_i32, %c0_i32_0, %c0_i32_1 : i32, i32, i32
  }
  func.func @transform_12(%arg0: i32) -> (i32, i32, i32) {
    %c0_i32 = arith.constant 0 : i32
    %c0_i32_0 = arith.constant 0 : i32
    %c0_i32_1 = arith.constant 0 : i32
    %c0_i32_2 = arith.constant 0 : i32
    return %c0_i32, %c0_i32_0, %c0_i32_1 : i32, i32, i32
  }
  func.func @transform_13(%arg0: i32) -> (i32, i32, i32) {
    %c0_i32 = arith.constant 0 : i32
    %c0_i32_0 = arith.constant 0 : i32
    %c0_i32_1 = arith.constant 0 : i32
    %c0_i32_2 = arith.constant 0 : i32
    return %c0_i32, %c0_i32_0, %c0_i32_1 : i32, i32, i32
  }
  func.func @transform_14(%arg0: i32) -> (i32, i32, i32) {
    %c0_i32 = arith.constant 0 : i32
    %c0_i32_0 = arith.constant 0 : i32
    %c0_i32_1 = arith.constant 0 : i32
    %c0_i32_2 = arith.constant 0 : i32
    return %c0_i32, %c0_i32_0, %c0_i32_1 : i32, i32, i32
  }
  func.func @transform_15(%arg0: i32) -> (i32, i32) {
    %c0_i32 = arith.constant 0 : i32
    %c0_i32_0 = arith.constant 0 : i32
    %c0_i32_1 = arith.constant 0 : i32
    return %c0_i32, %c0_i32_0 : i32, i32
  }
  func.func @transform_16(%arg0: i32) -> (i32, i32) {
    %c0_i32 = arith.constant 0 : i32
    %c0_i32_0 = arith.constant 0 : i32
    %c0_i32_1 = arith.constant 0 : i32
    return %c0_i32, %c0_i32_0 : i32, i32
  }
  func.func @transform_17(%arg0: i32) -> (i32, i32) {
    %c0_i32 = arith.constant 0 : i32
    %c0_i32_0 = arith.constant 0 : i32
    %c0_i32_1 = arith.constant 0 : i32
    return %c0_i32, %c0_i32_0 : i32, i32
  }
  func.func @transform_18(%arg0: i32) -> (i32, i32) {
    %c0_i32 = arith.constant 0 : i32
    %c0_i32_0 = arith.constant 0 : i32
    %c0_i32_1 = arith.constant 0 : i32
    return %c0_i32, %c0_i32_0 : i32, i32
  }
  func.func @transform_19(%arg0: i32) -> (i32, i32) {
    %c0_i32 = arith.constant 0 : i32
    %c0_i32_0 = arith.constant 0 : i32
    return %arg0, %c0_i32 : i32, i32
  }
}

</mosaic_0001>

<llo_original>
// kernel: tpu_custom_call.1
$region0: #{tpu_custom_call.1}
  #allocation0 [shape = 'u32[]', space=smem, size = 0x4, offset = 0x4, fixed_abs, tag = 'smem constant byte address 0x4 - core index']
  #allocation1 [shape = 'u32[72,128]{1,0:T(1,128)}', space=vmem, size = 0x9000, scoped, tag = 'internal scratch']
  %s0 = inlined_call_operand.vmem [shape: bf16[128,48], index: 0, kind: input, shape index: {}]
  %s1 = inlined_call_operand.vmem [shape: bf16[48,32], index: 1, kind: input, shape index: {}]
  %s2 = inlined_call_operand.vmem [shape: f32[1,32], index: 2, kind: input, shape index: {}]
  %s3 = inlined_call_operand.vmem [shape: f32[2,1,32], index: 3, kind: input, shape index: {}]
  %s4 = inlined_call_operand.vmem [shape: f32[2,1,32], index: 4, kind: input, shape index: {}]
  %s5 = inlined_call_operand.vmem [shape: bf16[2,16,64], index: 5, kind: input, shape index: {}]
  %s6 = inlined_call_operand.vmem [shape: f32[2,1,64], index: 6, kind: input, shape index: {}]
  %s7 = inlined_call_operand.vmem [shape: bf16[2,64,16], index: 7, kind: input, shape index: {}]
  %s8 = inlined_call_operand.vmem [shape: f32[2,1,16], index: 8, kind: input, shape index: {}]
  %s9 = inlined_call_operand.vmem [shape: f32[2,1,32], index: 9, kind: input, shape index: {}]
  %s10 = inlined_call_operand.vmem [shape: f32[2,1,32], index: 10, kind: input, shape index: {}]
  %s11 = inlined_call_operand.vmem [shape: bf16[2,32,16], index: 11, kind: input, shape index: {}]
  %s12 = inlined_call_operand.vmem [shape: f32[2,1,16], index: 12, kind: input, shape index: {}]
  %s13 = inlined_call_operand.vmem [shape: bf16[2,16,32], index: 13, kind: input, shape index: {}]
  %s14 = inlined_call_operand.vmem [shape: f32[2,1,32], index: 14, kind: input, shape index: {}]
  %s15 = inlined_call_operand.vmem [shape: f32[1,32], index: 15, kind: input, shape index: {}]
  %s16 = inlined_call_operand.vmem [shape: f32[1,32], index: 16, kind: input, shape index: {}]
  %s17 = inlined_call_operand.vmem [shape: bf16[32,128], index: 17, kind: input, shape index: {}]
  %s18 = inlined_call_operand.vmem [shape: f32[1,128], index: 18, kind: input, shape index: {}]
  %s19 = inlined_call_operand.hbm [shape: f32[8,128], index: 19, kind: output, shape index: {}]
  %s20 = sld [smem:[#allocation0]]
  $region86: #{tpu_custom_call.1} parent=0
    _
  %s22 = ssub.s32 1, %s20
  %s23 = scalar_select 0, %s22, %s20
  $region1: #{tpu_custom_call.1} parent=0
    #allocation2 [shape = 'u8[4096]{0}', space=vmem, size = 0x1000, scoped, tag = 'output window, operand 0, single buffered']
    #allocation3 [shape = 's32[1]{0}', space=sflag, size = 0x4, scoped, tag = 'scoped memory for tpu_custom_call.1']
    %24 = vsyncpa [#allocation3], 0
    // Predicated region
    $region2: #{tpu_custom_call.1} parent=1 // pred_check
      _
    $region3: #{tpu_custom_call.1} parent=1 // pred_check_branch
      %26 = sbr.rel (0) target = $region5
    $region4: #{tpu_custom_call.1} parent=1 // pred_region
      _
    $region5: #{tpu_custom_call.1} parent=1 // pred_fallthru
      _
    // Predicated region
    $region6: #{tpu_custom_call.1} parent=1 // pred_check
      _
    $region7: #{tpu_custom_call.1} parent=1 // pred_check_branch
      %28 = sbr.rel (0) target = $region9
    $region8: #{tpu_custom_call.1} parent=1 // pred_region
      _
    $region9: #{tpu_custom_call.1} parent=1 // pred_fallthru
      _
    // Predicated region
    $region10: #{tpu_custom_call.1} parent=1 // pred_check
      _
    $region11: #{tpu_custom_call.1} parent=1 // pred_check_branch
      %30 = sbr.rel (0) target = $region13
    $region12: #{tpu_custom_call.1} parent=1 // pred_region
      _
    $region13: #{tpu_custom_call.1} parent=1 // pred_fallthru
      _
    // Predicated region
    $region14: #{tpu_custom_call.1} parent=1 // pred_check
      _
    $region15: #{tpu_custom_call.1} parent=1 // pred_check_branch
      %32 = sbr.rel (0) target = $region17
    $region16: #{tpu_custom_call.1} parent=1 // pred_region
      _
    $region17: #{tpu_custom_call.1} parent=1 // pred_fallthru
      _
    // Predicated region
    $region18: #{tpu_custom_call.1} parent=1 // pred_check
      _
    $region19: #{tpu_custom_call.1} parent=1 // pred_check_branch
      %34 = sbr.rel (0) target = $region21
    $region20: #{tpu_custom_call.1} parent=1 // pred_region
      _
    $region21: #{tpu_custom_call.1} parent=1 // pred_fallthru
      _
    // Predicated region
    $region22: #{tpu_custom_call.1} parent=1 // pred_check
      _
    $region23: #{tpu_custom_call.1} parent=1 // pred_check_branch
      %36 = sbr.rel (0) target = $region25
    $region24: #{tpu_custom_call.1} parent=1 // pred_region
      _
    $region25: #{tpu_custom_call.1} parent=1 // pred_fallthru
      _
    // Predicated region
    $region26: #{tpu_custom_call.1} parent=1 // pred_check
      _
    $region27: #{tpu_custom_call.1} parent=1 // pred_check_branch
      %38 = sbr.rel (0) target = $region29
    $region28: #{tpu_custom_call.1} parent=1 // pred_region
      _
    $region29: #{tpu_custom_call.1} parent=1 // pred_fallthru
      _
    // Predicated region
    $region30: #{tpu_custom_call.1} parent=1 // pred_check
      _
    $region31: #{tpu_custom_call.1} parent=1 // pred_check_branch
      %40 = sbr.rel (0) target = $region33
    $region32: #{tpu_custom_call.1} parent=1 // pred_region
      _
    $region33: #{tpu_custom_call.1} parent=1 // pred_fallthru
      _
    // Predicated region
    $region34: #{tpu_custom_call.1} parent=1 // pred_check
      _
    $region35: #{tpu_custom_call.1} parent=1 // pred_check_branch
      %42 = sbr.rel (0) target = $region37
    $region36: #{tpu_custom_call.1} parent=1 // pred_region
      _
    $region37: #{tpu_custom_call.1} parent=1 // pred_fallthru
      _
    // Predicated region
    $region38: #{tpu_custom_call.1} parent=1 // pred_check
      _
    $region39: #{tpu_custom_call.1} parent=1 // pred_check_branch
      %44 = sbr.rel (0) target = $region41
    $region40: #{tpu_custom_call.1} parent=1 // pred_region
      _
    $region41: #{tpu_custom_call.1} parent=1 // pred_fallthru
      _
    // Predicated region
    $region42: #{tpu_custom_call.1} parent=1 // pred_check
      _
    $region43: #{tpu_custom_call.1} parent=1 // pred_check_branch
      %46 = sbr.rel (0) target = $region45
    $region44: #{tpu_custom_call.1} parent=1 // pred_region
      _
    $region45: #{tpu_custom_call.1} parent=1 // pred_fallthru
      _
    // Predicated region
    $region46: #{tpu_custom_call.1} parent=1 // pred_check
      _
    $region47: #{tpu_custom_call.1} parent=1 // pred_check_branch
      %48 = sbr.rel (0) target = $region49
    $region48: #{tpu_custom_call.1} parent=1 // pred_region
      _
    $region49: #{tpu_custom_call.1} parent=1 // pred_fallthru
      _
    // Predicated region
    $region50: #{tpu_custom_call.1} parent=1 // pred_check
      _
    $region51: #{tpu_custom_call.1} parent=1 // pred_check_branch
      %50 = sbr.rel (0) target = $region53
    $region52: #{tpu_custom_call.1} parent=1 // pred_region
      _
    $region53: #{tpu_custom_call.1} parent=1 // pred_fallthru
      _
    // Predicated region
    $region54: #{tpu_custom_call.1} parent=1 // pred_check
      _
    $region55: #{tpu_custom_call.1} parent=1 // pred_check_branch
      %52 = sbr.rel (0) target = $region57
    $region56: #{tpu_custom_call.1} parent=1 // pred_region
      _
    $region57: #{tpu_custom_call.1} parent=1 // pred_fallthru
      _
    // Predicated region
    $region58: #{tpu_custom_call.1} parent=1 // pred_check
      _
    $region59: #{tpu_custom_call.1} parent=1 // pred_check_branch
      %54 = sbr.rel (0) target = $region61
    $region60: #{tpu_custom_call.1} parent=1 // pred_region
      _
    $region61: #{tpu_custom_call.1} parent=1 // pred_fallthru
      _
    // Predicated region
    $region62: #{tpu_custom_call.1} parent=1 // pred_check
      _
    $region63: #{tpu_custom_call.1} parent=1 // pred_check_branch
      %56 = sbr.rel (0) target = $region65
    $region64: #{tpu_custom_call.1} parent=1 // pred_region
      _
    $region65: #{tpu_custom_call.1} parent=1 // pred_fallthru
      _
    // Predicated region
    $region66: #{tpu_custom_call.1} parent=1 // pred_check
      _
    $region67: #{tpu_custom_call.1} parent=1 // pred_check_branch
      %58 = sbr.rel (0) target = $region69
    $region68: #{tpu_custom_call.1} parent=1 // pred_region
      _
    $region69: #{tpu_custom_call.1} parent=1 // pred_fallthru
      _
    // Predicated region
    $region70: #{tpu_custom_call.1} parent=1 // pred_check
      _
    $region71: #{tpu_custom_call.1} parent=1 // pred_check_branch
      %60 = sbr.rel (0) target = $region73
    $region72: #{tpu_custom_call.1} parent=1 // pred_region
      _
    $region73: #{tpu_custom_call.1} parent=1 // pred_fallthru
      _
    // Predicated region
    $region74: #{tpu_custom_call.1} parent=1 // pred_check
      _
    $region75: #{tpu_custom_call.1} parent=1 // pred_check_branch
      %62 = sbr.rel (0) target = $region77
    $region76: #{tpu_custom_call.1} parent=1 // pred_region
      _
    $region77: #{tpu_custom_call.1} parent=1 // pred_fallthru
      _
    %v64 = vld [vmem:[%s0] sm:$0xf]
    %v65 = vld [vmem:[%s0 + $0x4] sm:$0xf]
    %v66 = vld [vmem:[%s0 + $0x8] sm:$0xf]
    %v67 = vld [vmem:[%s0 + $0xc] sm:$0xf]
    %v68 = vld [vmem:[%s0 + $0x10] sm:$0xf]
    %v69 = vld [vmem:[%s0 + $0x14] sm:$0xf]
    %v70 = vld [vmem:[%s0 + $0x18] sm:$0xf]
    %v71 = vld [vmem:[%s0 + $0x1c] sm:$0xf]
    %v72 = vld [vmem:[%s0 + $0x20] sm:$0xf]
    %v73 = vld [vmem:[%s0 + $0x24] sm:$0xf]
    %v74 = vld [vmem:[%s0 + $0x28] sm:$0xf]
    %v75 = vld [vmem:[%s0 + $0x2c] sm:$0xf]
    %v76 = vld [vmem:[%s0 + $0x30] sm:$0xf]
    %v77 = vld [vmem:[%s0 + $0x34] sm:$0xf]
    %v78 = vld [vmem:[%s0 + $0x38] sm:$0xf]
    %v79 = vld [vmem:[%s0 + $0x3c] sm:$0xf]
    %v80 = vld [vmem:[%s1] sm:$0xf]
    %v81 = vld [vmem:[%s1 + $0x4] sm:$0xf]
    %v82 = vld [vmem:[%s1 + $0x8] sm:$0xf]
    %v83 = vld [vmem:[%s1 + $0xc] sm:$0xf]
    %v84 = vld [vmem:[%s1 + $0x10] sm:$0xf]
    %v85 = vld [vmem:[%s1 + $0x14] sm:$0xf]
    %v86 = vld [vmem:[%s2] sm:$0x1]
    %v88 = vperm.slane %v86, 0
    %v106 = vunpack.c.l.b16 %v64
    %v107 = vunpack.c.l.b16 %v65
    %v108 = vunpack.c.l.b16 %v66
    %v109 = vunpack.c.l.b16 %v67
    %v110 = vunpack.c.l.b16 %v68
    %v111 = vunpack.c.l.b16 %v69
    %v112 = vunpack.c.l.b16 %v70
    %v113 = vunpack.c.l.b16 %v71
    %v114 = vunpack.c.l.b16 %v72
    %v115 = vunpack.c.l.b16 %v73
    %v116 = vunpack.c.l.b16 %v74
    %v117 = vunpack.c.l.b16 %v75
    %v118 = vunpack.c.l.b16 %v76
    %v119 = vunpack.c.l.b16 %v77
    %v120 = vunpack.c.l.b16 %v78
    %v121 = vunpack.c.l.b16 %v79
    %v122 = vpack.c.b16 %v107, %v106
    %v123 = vpack.c.b16 %v109, %v108
    %v124 = vpack.c.b16 %v111, %v110
    %v125 = vpack.c.b16 %v113, %v112
    %v126 = vpack.c.b16 %v115, %v114
    %v127 = vpack.c.b16 %v117, %v116
    %v128 = vpack.c.b16 %v119, %v118
    %v129 = vpack.c.b16 %v121, %v120
    %v136 = vunpack.c.l.b16 %v80
    %v137 = vunpack.c.l.b16 %v81
    %v138 = vunpack.c.l.b16 %v82
    %v139 = vunpack.c.l.b16 %v83
    %v140 = vunpack.c.l.b16 %v84
    %v141 = vunpack.c.l.b16 %v85
    %v142 = vpack.c.b16 %v137, %v136
    %v143 = vpack.c.b16 %v139, %v138
    %v144 = vpack.c.b16 %v141, %v140
    %vm148 = vcmask 392192
    %v150 = vsel %vm148, %v122, 0
    %v153 = vsel %vm148, %v123, 0
    %v156 = vsel %vm148, %v124, 0
    %v159 = vsel %vm148, %v125, 0
    %v162 = vsel %vm148, %v126, 0
    %v165 = vsel %vm148, %v127, 0
    %v168 = vsel %vm148, %v128, 0
    %v171 = vsel %vm148, %v129, 0
    %173 = vmatpush.bf16.msra.mxu0 0
    %174 = vmatpush.bf16.msra.mxu0 0
    %175 = vmatpush.bf16.msra.mxu0 0
    %176 = vmatpush.bf16.msra.mxu0 0
    %177 = vmatpush.bf16.msra.mxu0 0
    %178 = vmatpush.bf16.msra.mxu0 %v144
    %179 = vmatpush.bf16.msra.mxu0 %v143
    %180 = vmatpush.bf16.msra.mxu0 %v142
    %181 = vmatmul.bf16.gmra.mxu0 %v150
    %v182 = vpop.f32.mrf.mxu0
    %v183 = vadd.f32 %v88, %v182
    %v184 = vpop.f32.mrf.mxu0
    %v185 = vadd.f32 %v88, %v184
    %186 = vmatmul.bf16.gmra.mxu0 %v153
    %v187 = vpop.f32.mrf.mxu0
    %v188 = vadd.f32 %v88, %v187
    %v189 = vpop.f32.mrf.mxu0
    %v190 = vadd.f32 %v88, %v189
    %191 = vmatmul.bf16.gmra.mxu0 %v156
    %v192 = vpop.f32.mrf.mxu0
    %v193 = vadd.f32 %v88, %v192
    %v194 = vpop.f32.mrf.mxu0
    %v195 = vadd.f32 %v88, %v194
    %196 = vmatmul.bf16.gmra.mxu0 %v159
    %v197 = vpop.f32.mrf.mxu0
    %v198 = vadd.f32 %v88, %v197
    %v199 = vpop.f32.mrf.mxu0
    %v200 = vadd.f32 %v88, %v199
    %201 = vmatmul.bf16.gmra.mxu0 %v162
    %v202 = vpop.f32.mrf.mxu0
    %v203 = vadd.f32 %v88, %v202
    %v204 = vpop.f32.mrf.mxu0
    %v205 = vadd.f32 %v88, %v204
    %206 = vmatmul.bf16.gmra.mxu0 %v165
    %v207 = vpop.f32.mrf.mxu0
    %v208 = vadd.f32 %v88, %v207
    %v209 = vpop.f32.mrf.mxu0
    %v210 = vadd.f32 %v88, %v209
    %211 = vmatmul.bf16.gmra.mxu0 %v168
    %v212 = vpop.f32.mrf.mxu0
    %v213 = vadd.f32 %v88, %v212
    %v214 = vpop.f32.mrf.mxu0
    %v215 = vadd.f32 %v88, %v214
    %216 = vmatmul.bf16.gmra.mxu0 %v171
    %v217 = vpop.f32.mrf.mxu0
    %v218 = vadd.f32 %v88, %v217
    %v219 = vpop.f32.mrf.mxu0
    %v220 = vadd.f32 %v88, %v219
    %221 = vdwg.mxu0
    %v222 = vld [vmem:[%s3] sm:$0x1]
    %v223 = vld [vmem:[%s4] sm:$0x1]
    %vm224 = vcmask 261120
    %v225 = vsel %vm224, %v183, 0.0
    %226 = vadd.xlane.f32.xlu0 %v225
    %v227 = vpop.xlane.xlu0 %226
    %v228 = vsel %vm224, %v185, 0.0
    %229 = vadd.xlane.f32.xlu0 %v228
    %v230 = vpop.xlane.xlu0 %229
    %v231 = vsel %vm224, %v188, 0.0
    %232 = vadd.xlane.f32.xlu0 %v231
    %v233 = vpop.xlane.xlu0 %232
    %v234 = vsel %vm224, %v190, 0.0
    %235 = vadd.xlane.f32.xlu0 %v234
    %v236 = vpop.xlane.xlu0 %235
    %v237 = vsel %vm224, %v193, 0.0
    %238 = vadd.xlane.f32.xlu0 %v237
    %v239 = vpop.xlane.xlu0 %238
    %v240 = vsel %vm224, %v195, 0.0
    %241 = vadd.xlane.f32.xlu0 %v240
    %v242 = vpop.xlane.xlu0 %241
    %v243 = vsel %vm224, %v198, 0.0
    %244 = vadd.xlane.f32.xlu0 %v243
    %v245 = vpop.xlane.xlu0 %244
    %v246 = vsel %vm224, %v200, 0.0
    %247 = vadd.xlane.f32.xlu0 %v246
    %v248 = vpop.xlane.xlu0 %247
    %v249 = vsel %vm224, %v203, 0.0
    %250 = vadd.xlane.f32.xlu0 %v249
    %v251 = vpop.xlane.xlu0 %250
    %v252 = vsel %vm224, %v205, 0.0
    %253 = vadd.xlane.f32.xlu0 %v252
    %v254 = vpop.xlane.xlu0 %253
    %v255 = vsel %vm224, %v208, 0.0
    %256 = vadd.xlane.f32.xlu0 %v255
    %v257 = vpop.xlane.xlu0 %256
    %v258 = vsel %vm224, %v210, 0.0
    %259 = vadd.xlane.f32.xlu0 %v258
    %v260 = vpop.xlane.xlu0 %259
    %v261 = vsel %vm224, %v213, 0.0
    %262 = vadd.xlane.f32.xlu0 %v261
    %v263 = vpop.xlane.xlu0 %262
    %v264 = vsel %vm224, %v215, 0.0
    %265 = vadd.xlane.f32.xlu0 %v264
    %v266 = vpop.xlane.xlu0 %265
    %v267 = vsel %vm224, %v218, 0.0
    %268 = vadd.xlane.f32.xlu0 %v267
    %v269 = vpop.xlane.xlu0 %268
    %v270 = vsel %vm224, %v220, 0.0
    %271 = vadd.xlane.f32.xlu0 %v270
    %v272 = vpop.xlane.xlu0 %271
    %v273 = vrcp.pop 32.0
    %v274 = vmul.f32 32.0, %v273
    %v275 = vsub.f32 1.0, %v274
    %v276 = vmul.f32 %v273, %v275
    %v277 = vadd.f32 %v273, %v276
    %vm278 = vweird.f32 %v273
    %v279 = vsel %vm278, %v273, %v277
    %v280 = vmul.f32 %v227, %v279
    %v281 = vmul.f32 %v230, %v279
    %v282 = vmul.f32 %v233, %v279
    %v283 = vmul.f32 %v236, %v279
    %v284 = vmul.f32 %v239, %v279
    %v285 = vmul.f32 %v242, %v279
    %v286 = vmul.f32 %v245, %v279
    %v287 = vmul.f32 %v248, %v279
    %v288 = vmul.f32 %v251, %v279
    %v289 = vmul.f32 %v254, %v279
    %v290 = vmul.f32 %v257, %v279
    %v291 = vmul.f32 %v260, %v279
    %v292 = vmul.f32 %v263, %v279
    %v293 = vmul.f32 %v266, %v279
    %v294 = vmul.f32 %v269, %v279
    %v295 = vmul.f32 %v272, %v279
    %v296 = vmul.f32 %v183, %v183
    %v297 = vmul.f32 %v185, %v185
    %v298 = vmul.f32 %v188, %v188
    %v299 = vmul.f32 %v190, %v190
    %v300 = vmul.f32 %v193, %v193
    %v301 = vmul.f32 %v195, %v195
    %v302 = vmul.f32 %v198, %v198
    %v303 = vmul.f32 %v200, %v200
    %v304 = vmul.f32 %v203, %v203
    %v305 = vmul.f32 %v205, %v205
    %v306 = vmul.f32 %v208, %v208
    %v307 = vmul.f32 %v210, %v210
    %v308 = vmul.f32 %v213, %v213
    %v309 = vmul.f32 %v215, %v215
    %v310 = vmul.f32 %v218, %v218
    %v311 = vmul.f32 %v220, %v220
    %v312 = vsel %vm224, %v296, 0.0
    %313 = vadd.xlane.f32.xlu0 %v312
    %v314 = vpop.xlane.xlu0 %313
    %v315 = vsel %vm224, %v297, 0.0
    %316 = vadd.xlane.f32.xlu0 %v315
    %v317 = vpop.xlane.xlu0 %316
    %v318 = vsel %vm224, %v298, 0.0
    %319 = vadd.xlane.f32.xlu0 %v318
    %v320 = vpop.xlane.xlu0 %319
    %v321 = vsel %vm224, %v299, 0.0
    %322 = vadd.xlane.f32.xlu0 %v321
    %v323 = vpop.xlane.xlu0 %322
    %v324 = vsel %vm224, %v300, 0.0
    %325 = vadd.xlane.f32.xlu0 %v324
    %v326 = vpop.xlane.xlu0 %325
    %v327 = vsel %vm224, %v301, 0.0
    %328 = vadd.xlane.f32.xlu0 %v327
    %v329 = vpop.xlane.xlu0 %328
    %v330 = vsel %vm224, %v302, 0.0
    %331 = vadd.xlane.f32.xlu0 %v330
    %v332 = vpop.xlane.xlu0 %331
    %v333 = vsel %vm224, %v303, 0.0
    %334 = vadd.xlane.f32.xlu0 %v333
    %v335 = vpop.xlane.xlu0 %334
    %v336 = vsel %vm224, %v304, 0.0
    %337 = vadd.xlane.f32.xlu0 %v336
    %v338 = vpop.xlane.xlu0 %337
    %v339 = vsel %vm224, %v305, 0.0
    %340 = vadd.xlane.f32.xlu0 %v339
    %v341 = vpop.xlane.xlu0 %340
    %v342 = vsel %vm224, %v306, 0.0
    %343 = vadd.xlane.f32.xlu0 %v342
    %v344 = vpop.xlane.xlu0 %343
    %v345 = vsel %vm224, %v307, 0.0
    %346 = vadd.xlane.f32.xlu0 %v345
    %v347 = vpop.xlane.xlu0 %346
    %v348 = vsel %vm224, %v308, 0.0
    %349 = vadd.xlane.f32.xlu0 %v348
    %v350 = vpop.xlane.xlu0 %349
    %v351 = vsel %vm224, %v309, 0.0
    %352 = vadd.xlane.f32.xlu0 %v351
    %v353 = vpop.xlane.xlu0 %352
    %v354 = vsel %vm224, %v310, 0.0
    %355 = vadd.xlane.f32.xlu0 %v354
    %v356 = vpop.xlane.xlu0 %355
    %v357 = vsel %vm224, %v311, 0.0
    %358 = vadd.xlane.f32.xlu0 %v357
    %v359 = vpop.xlane.xlu0 %358
    %v360 = vmul.f32 %v314, %v279
    %v361 = vmul.f32 %v317, %v279
    %v362 = vmul.f32 %v320, %v279
    %v363 = vmul.f32 %v323, %v279
    %v364 = vmul.f32 %v326, %v279
    %v365 = vmul.f32 %v329, %v279
    %v366 = vmul.f32 %v332, %v279
    %v367 = vmul.f32 %v335, %v279
    %v368 = vmul.f32 %v338, %v279
    %v369 = vmul.f32 %v341, %v279
    %v370 = vmul.f32 %v344, %v279
    %v371 = vmul.f32 %v347, %v279
    %v372 = vmul.f32 %v350, %v279
    %v373 = vmul.f32 %v353, %v279
    %v374 = vmul.f32 %v356, %v279
    %v375 = vmul.f32 %v359, %v279
    %v376 = vmul.f32 %v280, %v280
    %v377 = vmul.f32 %v281, %v281
    %v378 = vmul.f32 %v282, %v282
    %v379 = vmul.f32 %v283, %v283
    %v380 = vmul.f32 %v284, %v284
    %v381 = vmul.f32 %v285, %v285
    %v382 = vmul.f32 %v286, %v286
    %v383 = vmul.f32 %v287, %v287
    %v384 = vmul.f32 %v288, %v288
    %v385 = vmul.f32 %v289, %v289
    %v386 = vmul.f32 %v290, %v290
    %v387 = vmul.f32 %v291, %v291
    %v388 = vmul.f32 %v292, %v292
    %v389 = vmul.f32 %v293, %v293
    %v390 = vmul.f32 %v294, %v294
    %v391 = vmul.f32 %v295, %v295
    %v392 = vsub.f32 %v360, %v376
    %v393 = vsub.f32 %v361, %v377
    %v394 = vsub.f32 %v362, %v378
    %v395 = vsub.f32 %v363, %v379
    %v396 = vsub.f32 %v364, %v380
    %v397 = vsub.f32 %v365, %v381
    %v398 = vsub.f32 %v366, %v382
    %v399 = vsub.f32 %v367, %v383
    %v400 = vsub.f32 %v368, %v384
    %v401 = vsub.f32 %v369, %v385
    %v402 = vsub.f32 %v370, %v386
    %v403 = vsub.f32 %v371, %v387
    %v404 = vsub.f32 %v372, %v388
    %v405 = vsub.f32 %v373, %v389
    %v406 = vsub.f32 %v374, %v390
    %v407 = vsub.f32 %v375, %v391
    %v408 = vsub.f32 %v183, %v280
    %v409 = vsub.f32 %v185, %v281
    %v410 = vsub.f32 %v188, %v282
    %v411 = vsub.f32 %v190, %v283
    %v412 = vsub.f32 %v193, %v284
    %v413 = vsub.f32 %v195, %v285
    %v414 = vsub.f32 %v198, %v286
    %v415 = vsub.f32 %v200, %v287
    %v416 = vsub.f32 %v203, %v288
    %v417 = vsub.f32 %v205, %v289
    %v418 = vsub.f32 %v208, %v290
    %v419 = vsub.f32 %v210, %v291
    %v420 = vsub.f32 %v213, %v292
    %v421 = vsub.f32 %v215, %v293
    %v422 = vsub.f32 %v218, %v294
    %v423 = vsub.f32 %v220, %v295
    %v424 = vadd.f32 %v392, 1e-05
    %v425 = vadd.f32 %v393, 1e-05
    %v426 = vadd.f32 %v394, 1e-05
    %v427 = vadd.f32 %v395, 1e-05
    %v428 = vadd.f32 %v396, 1e-05
    %v429 = vadd.f32 %v397, 1e-05
    %v430 = vadd.f32 %v398, 1e-05
    %v431 = vadd.f32 %v399, 1e-05
    %v432 = vadd.f32 %v400, 1e-05
    %v433 = vadd.f32 %v401, 1e-05
    %v434 = vadd.f32 %v402, 1e-05
    %v435 = vadd.f32 %v403, 1e-05
    %v436 = vadd.f32 %v404, 1e-05
    %v437 = vadd.f32 %v405, 1e-05
    %v438 = vadd.f32 %v406, 1e-05
    %v439 = vadd.f32 %v407, 1e-05
    %v440 = vrsqrt.pop %v424
    %v441 = vmul.f32 %v440, %v424
    %v442 = vmul.f32 %v441, %v440
    %v443 = vmul.f32 0.5, %v442
    %v444 = vsub.f32 1.5, %v443
    %v445 = vmul.f32 %v440, %v444
    %vm446 = vweird.f32 %v424
    %vm447 = vweird.f32 %v440
    %vm448 = vmor %vm446, %vm447
    %v449 = vsel %vm448, %v440, %v445
    %v450 = vrsqrt.pop %v425
    %v451 = vmul.f32 %v450, %v425
    %v452 = vmul.f32 %v451, %v450
    %v453 = vmul.f32 0.5, %v452
    %v454 = vsub.f32 1.5, %v453
    %v455 = vmul.f32 %v450, %v454
    %vm456 = vweird.f32 %v425
    %vm457 = vweird.f32 %v450
    %vm458 = vmor %vm456, %vm457
    %v459 = vsel %vm458, %v450, %v455
    %v460 = vrsqrt.pop %v426
    %v461 = vmul.f32 %v460, %v426
    %v462 = vmul.f32 %v461, %v460
    %v463 = vmul.f32 0.5, %v462
    %v464 = vsub.f32 1.5, %v463
    %v465 = vmul.f32 %v460, %v464
    %vm466 = vweird.f32 %v426
    %vm467 = vweird.f32 %v460
    %vm468 = vmor %vm466, %vm467
    %v469 = vsel %vm468, %v460, %v465
    %v470 = vrsqrt.pop %v427
    %v471 = vmul.f32 %v470, %v427
    %v472 = vmul.f32 %v471, %v470
    %v473 = vmul.f32 0.5, %v472
    %v474 = vsub.f32 1.5, %v473
    %v475 = vmul.f32 %v470, %v474
    %vm476 = vweird.f32 %v427
    %vm477 = vweird.f32 %v470
    %vm478 = vmor %vm476, %vm477
    %v479 = vsel %vm478, %v470, %v475
    %v480 = vrsqrt.pop %v428
    %v481 = vmul.f32 %v480, %v428
    %v482 = vmul.f32 %v481, %v480
    %v483 = vmul.f32 0.5, %v482
    %v484 = vsub.f32 1.5, %v483
    %v485 = vmul.f32 %v480, %v484
    %vm486 = vweird.f32 %v428
    %vm487 = vweird.f32 %v480
    %vm488 = vmor %vm486, %vm487
    %v489 = vsel %vm488, %v480, %v485
    %v490 = vrsqrt.pop %v429
    %v491 = vmul.f32 %v490, %v429
    %v492 = vmul.f32 %v491, %v490
    %v493 = vmul.f32 0.5, %v492
    %v494 = vsub.f32 1.5, %v493
    %v495 = vmul.f32 %v490, %v494
    %vm496 = vweird.f32 %v429
    %vm497 = vweird.f32 %v490
    %vm498 = vmor %vm496, %vm497
    %v499 = vsel %vm498, %v490, %v495
    %v500 = vrsqrt.pop %v430
    %v501 = vmul.f32 %v500, %v430
    %v502 = vmul.f32 %v501, %v500
    %v503 = vmul.f32 0.5, %v502
    %v504 = vsub.f32 1.5, %v503
    %v505 = vmul.f32 %v500, %v504
    %vm506 = vweird.f32 %v430
    %vm507 = vweird.f32 %v500
    %vm508 = vmor %vm506, %vm507
    %v509 = vsel %vm508, %v500, %v505
    %v510 = vrsqrt.pop %v431
    %v511 = vmul.f32 %v510, %v431
    %v512 = vmul.f32 %v511, %v510
    %v513 = vmul.f32 0.5, %v512
    %v514 = vsub.f32 1.5, %v513
    %v515 = vmul.f32 %v510, %v514
    %vm516 = vweird.f32 %v431
    %vm517 = vweird.f32 %v510
    %vm518 = vmor %vm516, %vm517
    %v519 = vsel %vm518, %v510, %v515
    %v520 = vrsqrt.pop %v432
    %v521 = vmul.f32 %v520, %v432
    %v522 = vmul.f32 %v521, %v520
    %v523 = vmul.f32 0.5, %v522
    %v524 = vsub.f32 1.5, %v523
    %v525 = vmul.f32 %v520, %v524
    %vm526 = vweird.f32 %v432
    %vm527 = vweird.f32 %v520
    %vm528 = vmor %vm526, %vm527
    %v529 = vsel %vm528, %v520, %v525
    %v530 = vrsqrt.pop %v433
    %v531 = vmul.f32 %v530, %v433
    %v532 = vmul.f32 %v531, %v530
    %v533 = vmul.f32 0.5, %v532
    %v534 = vsub.f32 1.5, %v533
    %v535 = vmul.f32 %v530, %v534
    %vm536 = vweird.f32 %v433
    %vm537 = vweird.f32 %v530
    %vm538 = vmor %vm536, %vm537
    %v539 = vsel %vm538, %v530, %v535
    %v540 = vrsqrt.pop %v434
    %v541 = vmul.f32 %v540, %v434
    %v542 = vmul.f32 %v541, %v540
    %v543 = vmul.f32 0.5, %v542
    %v544 = vsub.f32 1.5, %v543
    %v545 = vmul.f32 %v540, %v544
    %vm546 = vweird.f32 %v434
    %vm547 = vweird.f32 %v540
    %vm548 = vmor %vm546, %vm547
    %v549 = vsel %vm548, %v540, %v545
    %v550 = vrsqrt.pop %v435
    %v551 = vmul.f32 %v550, %v435
    %v552 = vmul.f32 %v551, %v550
    %v553 = vmul.f32 0.5, %v552
    %v554 = vsub.f32 1.5, %v553
    %v555 = vmul.f32 %v550, %v554
    %vm556 = vweird.f32 %v435
    %vm557 = vweird.f32 %v550
    %vm558 = vmor %vm556, %vm557
    %v559 = vsel %vm558, %v550, %v555
    %v560 = vrsqrt.pop %v436
    %v561 = vmul.f32 %v560, %v436
    %v562 = vmul.f32 %v561, %v560
    %v563 = vmul.f32 0.5, %v562
    %v564 = vsub.f32 1.5, %v563
    %v565 = vmul.f32 %v560, %v564
    %vm566 = vweird.f32 %v436
    %vm567 = vweird.f32 %v560
    %vm568 = vmor %vm566, %vm567
    %v569 = vsel %vm568, %v560, %v565
    %v570 = vrsqrt.pop %v437
    %v571 = vmul.f32 %v570, %v437
    %v572 = vmul.f32 %v571, %v570
    %v573 = vmul.f32 0.5, %v572
    %v574 = vsub.f32 1.5, %v573
    %v575 = vmul.f32 %v570, %v574
    %vm576 = vweird.f32 %v437
    %vm577 = vweird.f32 %v570
    %vm578 = vmor %vm576, %vm577
    %v579 = vsel %vm578, %v570, %v575
    %v580 = vrsqrt.pop %v438
    %v581 = vmul.f32 %v580, %v438
    %v582 = vmul.f32 %v581, %v580
    %v583 = vmul.f32 0.5, %v582
    %v584 = vsub.f32 1.5, %v583
    %v585 = vmul.f32 %v580, %v584
    %vm586 = vweird.f32 %v438
    %vm587 = vweird.f32 %v580
    %vm588 = vmor %vm586, %vm587
    %v589 = vsel %vm588, %v580, %v585
    %v590 = vrsqrt.pop %v439
    %v591 = vmul.f32 %v590, %v439
    %v592 = vmul.f32 %v591, %v590
    %v593 = vmul.f32 0.5, %v592
    %v594 = vsub.f32 1.5, %v593
    %v595 = vmul.f32 %v590, %v594
    %vm596 = vweird.f32 %v439
    %vm597 = vweird.f32 %v590
    %vm598 = vmor %vm596, %vm597
    %v599 = vsel %vm598, %v590, %v595
    %v600 = vmul.f32 %v408, %v449
    %v601 = vmul.f32 %v409, %v459
    %v602 = vmul.f32 %v410, %v469
    %v603 = vmul.f32 %v411, %v479
    %v604 = vmul.f32 %v412, %v489
    %v605 = vmul.f32 %v413, %v499
    %v606 = vmul.f32 %v414, %v509
    %v607 = vmul.f32 %v415, %v519
    %v608 = vmul.f32 %v416, %v529
    %v609 = vmul.f32 %v417, %v539
    %v610 = vmul.f32 %v418, %v549
    %v611 = vmul.f32 %v419, %v559
    %v612 = vmul.f32 %v420, %v569
    %v613 = vmul.f32 %v421, %v579
    %v614 = vmul.f32 %v422, %v589
    %v615 = vmul.f32 %v423, %v599
    %v617 = vperm.slane %v222, 0
    %v619 = vmul.f32 %v600, %v617
    %v620 = vmul.f32 %v601, %v617
    %v621 = vmul.f32 %v602, %v617
    %v622 = vmul.f32 %v603, %v617
    %v623 = vmul.f32 %v604, %v617
    %v624 = vmul.f32 %v605, %v617
    %v625 = vmul.f32 %v606, %v617
    %v626 = vmul.f32 %v607, %v617
    %v627 = vmul.f32 %v608, %v617
    %v628 = vmul.f32 %v609, %v617
    %v629 = vmul.f32 %v610, %v617
    %v630 = vmul.f32 %v611, %v617
    %v631 = vmul.f32 %v612, %v617
    %v632 = vmul.f32 %v613, %v617
    %v633 = vmul.f32 %v614, %v617
    %v634 = vmul.f32 %v615, %v617
    %v636 = vperm.slane %v223, 0
    %v638 = vadd.f32 %v619, %v636
    %v639 = vadd.f32 %v620, %v636
    %v640 = vadd.f32 %v621, %v636
    %v641 = vadd.f32 %v622, %v636
    %v642 = vadd.f32 %v623, %v636
    %v643 = vadd.f32 %v624, %v636
    %v644 = vadd.f32 %v625, %v636
    %v645 = vadd.f32 %v626, %v636
    %v646 = vadd.f32 %v627, %v636
    %v647 = vadd.f32 %v628, %v636
    %v648 = vadd.f32 %v629, %v636
    %v649 = vadd.f32 %v630, %v636
    %v650 = vadd.f32 %v631, %v636
    %v651 = vadd.f32 %v632, %v636
    %v652 = vadd.f32 %v633, %v636
    %v653 = vadd.f32 %v634, %v636
    %v654 = vpack.c.bf16 %v638, %v638
    %v655 = vpack.c.bf16 %v639, %v639
    %v656 = vpack.c.bf16 %v640, %v640
    %v657 = vpack.c.bf16 %v641, %v641
    %v658 = vpack.c.bf16 %v642, %v642
    %v659 = vpack.c.bf16 %v643, %v643
    %v660 = vpack.c.bf16 %v644, %v644
    %v661 = vpack.c.bf16 %v645, %v645
    %v662 = vpack.c.bf16 %v646, %v646
    %v663 = vpack.c.bf16 %v647, %v647
    %v664 = vpack.c.bf16 %v648, %v648
    %v665 = vpack.c.bf16 %v649, %v649
    %v666 = vpack.c.bf16 %v650, %v650
    %v667 = vpack.c.bf16 %v651, %v651
    %v668 = vpack.c.bf16 %v652, %v652
    %v669 = vpack.c.bf16 %v653, %v653
    %v686 = vunpack.c.l.b16 %v654
    %v687 = vunpack.c.l.b16 %v655
    %v688 = vunpack.c.l.b16 %v656
    %v689 = vunpack.c.l.b16 %v657
    %v690 = vunpack.c.l.b16 %v658
    %v691 = vunpack.c.l.b16 %v659
    %v692 = vunpack.c.l.b16 %v660
    %v693 = vunpack.c.l.b16 %v661
    %v694 = vunpack.c.l.b16 %v662
    %v695 = vunpack.c.l.b16 %v663
    %v696 = vunpack.c.l.b16 %v664
    %v697 = vunpack.c.l.b16 %v665
    %v698 = vunpack.c.l.b16 %v666
    %v699 = vunpack.c.l.b16 %v667
    %v700 = vunpack.c.l.b16 %v668
    %v701 = vunpack.c.l.b16 %v669
    %v702 = vpack.c.b16 %v687, %v686
    %v703 = vpack.c.b16 %v689, %v688
    %v704 = vpack.c.b16 %v691, %v690
    %v705 = vpack.c.b16 %v693, %v692
    %v706 = vpack.c.b16 %v695, %v694
    %v707 = vpack.c.b16 %v697, %v696
    %v708 = vpack.c.b16 %v699, %v698
    %v709 = vpack.c.b16 %v701, %v700
    %718 = vxpose.xlu0.c.b16.start [1/8] %v702, 128
    %719 = vxpose.xlu0.c.b16.cont [2/8] 0, 128
    %720 = vxpose.xlu0.c.b16.cont [3/8] 0, 128
    %721 = vxpose.xlu0.c.b16.cont [4/8] 0, 128
    %722 = vxpose.xlu0.c.b16.cont [5/8] 0, 128
    %723 = vxpose.xlu0.c.b16.cont [6/8] 0, 128
    %724 = vxpose.xlu0.c.b16.cont [7/8] 0, 128
    %725 = vxpose.xlu0.c.b16.end [8/8] 0, 128
    %v726 = vpop.trf.xlu0
    %v727 = vpop.trf.xlu0
    %v728 = vpop.trf.xlu0
    %v729 = vpop.trf.xlu0
    %v730 = vpop.trf.xlu0
    %v731 = vpop.trf.xlu0
    %v732 = vpop.trf.xlu0
    %v733 = vpop.trf.xlu0
    %734 = vxpose.xlu0.c.b16.start [1/8] %v703, 128
    %735 = vxpose.xlu0.c.b16.cont [2/8] 0, 128
    %736 = vxpose.xlu0.c.b16.cont [3/8] 0, 128
    %737 = vxpose.xlu0.c.b16.cont [4/8] 0, 128
    %738 = vxpose.xlu0.c.b16.cont [5/8] 0, 128
    %739 = vxpose.xlu0.c.b16.cont [6/8] 0, 128
    %740 = vxpose.xlu0.c.b16.cont [7/8] 0, 128
    %741 = vxpose.xlu0.c.b16.end [8/8] 0, 128
    %v742 = vpop.trf.xlu0
    %v743 = vpop.trf.xlu0
    %v744 = vpop.trf.xlu0
    %v745 = vpop.trf.xlu0
    %v746 = vpop.trf.xlu0
    %v747 = vpop.trf.xlu0
    %v748 = vpop.trf.xlu0
    %v749 = vpop.trf.xlu0
    %750 = vxpose.xlu0.c.b16.start [1/8] %v704, 128
    %751 = vxpose.xlu0.c.b16.cont [2/8] 0, 128
    %752 = vxpose.xlu0.c.b16.cont [3/8] 0, 128
    %753 = vxpose.xlu0.c.b16.cont [4/8] 0, 128
    %754 = vxpose.xlu0.c.b16.cont [5/8] 0, 128
    %755 = vxpose.xlu0.c.b16.cont [6/8] 0, 128
    %756 = vxpose.xlu0.c.b16.cont [7/8] 0, 128
    %757 = vxpose.xlu0.c.b16.end [8/8] 0, 128
    %v758 = vpop.trf.xlu0
    %v759 = vpop.trf.xlu0
    %v760 = vpop.trf.xlu0
    %v761 = vpop.trf.xlu0
    %v762 = vpop.trf.xlu0
    %v763 = vpop.trf.xlu0
    %v764 = vpop.trf.xlu0
    %v765 = vpop.trf.xlu0
    %766 = vxpose.xlu0.c.b16.start [1/8] %v705, 128
    %767 = vxpose.xlu0.c.b16.cont [2/8] 0, 128
    %768 = vxpose.xlu0.c.b16.cont [3/8] 0, 128
    %769 = vxpose.xlu0.c.b16.cont [4/8] 0, 128
    %770 = vxpose.xlu0.c.b16.cont [5/8] 0, 128
    %771 = vxpose.xlu0.c.b16.cont [6/8] 0, 128
    %772 = vxpose.xlu0.c.b16.cont [7/8] 0, 128
    %773 = vxpose.xlu0.c.b16.end [8/8] 0, 128
    %v774 = vpop.trf.xlu0
    %v775 = vpop.trf.xlu0
    %v776 = vpop.trf.xlu0
    %v777 = vpop.trf.xlu0
    %v778 = vpop.trf.xlu0
    %v779 = vpop.trf.xlu0
    %v780 = vpop.trf.xlu0
    %v781 = vpop.trf.xlu0
    %782 = vxpose.xlu0.c.b16.start [1/8] %v706, 128
    %783 = vxpose.xlu0.c.b16.cont [2/8] 0, 128
    %784 = vxpose.xlu0.c.b16.cont [3/8] 0, 128
    %785 = vxpose.xlu0.c.b16.cont [4/8] 0, 128
    %786 = vxpose.xlu0.c.b16.cont [5/8] 0, 128
    %787 = vxpose.xlu0.c.b16.cont [6/8] 0, 128
    %788 = vxpose.xlu0.c.b16.cont [7/8] 0, 128
    %789 = vxpose.xlu0.c.b16.end [8/8] 0, 128
    %v790 = vpop.trf.xlu0
    %v791 = vpop.trf.xlu0
    %v792 = vpop.trf.xlu0
    %v793 = vpop.trf.xlu0
    %v794 = vpop.trf.xlu0
    %v795 = vpop.trf.xlu0
    %v796 = vpop.trf.xlu0
    %v797 = vpop.trf.xlu0
    %798 = vxpose.xlu0.c.b16.start [1/8] %v707, 128
    %799 = vxpose.xlu0.c.b16.cont [2/8] 0, 128
    %800 = vxpose.xlu0.c.b16.cont [3/8] 0, 128
    %801 = vxpose.xlu0.c.b16.cont [4/8] 0, 128
    %802 = vxpose.xlu0.c.b16.cont [5/8] 0, 128
    %803 = vxpose.xlu0.c.b16.cont [6/8] 0, 128
    %804 = vxpose.xlu0.c.b16.cont [7/8] 0, 128
    %805 = vxpose.xlu0.c.b16.end [8/8] 0, 128
    %v806 = vpop.trf.xlu0
    %v807 = vpop.trf.xlu0
    %v808 = vpop.trf.xlu0
    %v809 = vpop.trf.xlu0
    %v810 = vpop.trf.xlu0
    %v811 = vpop.trf.xlu0
    %v812 = vpop.trf.xlu0
    %v813 = vpop.trf.xlu0
    %814 = vxpose.xlu0.c.b16.start [1/8] %v708, 128
    %815 = vxpose.xlu0.c.b16.cont [2/8] 0, 128
    %816 = vxpose.xlu0.c.b16.cont [3/8] 0, 128
    %817 = vxpose.xlu0.c.b16.cont [4/8] 0, 128
    %818 = vxpose.xlu0.c.b16.cont [5/8] 0, 128
    %819 = vxpose.xlu0.c.b16.cont [6/8] 0, 128
    %820 = vxpose.xlu0.c.b16.cont [7/8] 0, 128
    %821 = vxpose.xlu0.c.b16.end [8/8] 0, 128
    %v822 = vpop.trf.xlu0
    %v823 = vpop.trf.xlu0
    %v824 = vpop.trf.xlu0
    %v825 = vpop.trf.xlu0
    %v826 = vpop.trf.xlu0
    %v827 = vpop.trf.xlu0
    %v828 = vpop.trf.xlu0
    %v829 = vpop.trf.xlu0
    %830 = vxpose.xlu0.c.b16.start [1/8] %v709, 128
    %831 = vxpose.xlu0.c.b16.cont [2/8] 0, 128
    %832 = vxpose.xlu0.c.b16.cont [3/8] 0, 128
    %833 = vxpose.xlu0.c.b16.cont [4/8] 0, 128
    %834 = vxpose.xlu0.c.b16.cont [5/8] 0, 128
    %835 = vxpose.xlu0.c.b16.cont [6/8] 0, 128
    %836 = vxpose.xlu0.c.b16.cont [7/8] 0, 128
    %837 = vxpose.xlu0.c.b16.end [8/8] 0, 128
    %v838 = vpop.trf.xlu0
    %v839 = vpop.trf.xlu0
    %v840 = vpop.trf.xlu0
    %v841 = vpop.trf.xlu0
    %v842 = vpop.trf.xlu0
    %v843 = vpop.trf.xlu0
    %v844 = vpop.trf.xlu0
    %v845 = vpop.trf.xlu0
    %v846 = vld [vmem:[%s5] sm:$0xf]
    %v847 = vld [vmem:[%s5 + $0x4] sm:$0xf]
    %v848 = vld [vmem:[%s6] sm:$0x1]
    %v850 = vperm.slane %v848, 0
    %v854 = vunpack.c.l.b16 %v846
    %v855 = vunpack.c.l.b16 %v847
    %v856 = vpack.c.b16 %v855, %v854
    %vm858 = vcmask 130048
    %v860 = vsel %vm858, %v726, 0
    %v863 = vsel %vm858, %v727, 0
    %v866 = vsel %vm858, %v742, 0
    %v869 = vsel %vm858, %v743, 0
    %v872 = vsel %vm858, %v758, 0
    %v875 = vsel %vm858, %v759, 0
    %v878 = vsel %vm858, %v774, 0
    %v881 = vsel %vm858, %v775, 0
    %v884 = vsel %vm858, %v790, 0
    %v887 = vsel %vm858, %v791, 0
    %v890 = vsel %vm858, %v806, 0
    %v893 = vsel %vm858, %v807, 0
    %v896 = vsel %vm858, %v822, 0
    %v899 = vsel %vm858, %v823, 0
    %v902 = vsel %vm858, %v838, 0
    %v905 = vsel %vm858, %v839, 0
    %907 = vmatpush.bf16.msra.mxu0 0
    %908 = vmatpush.bf16.msra.mxu0 0
    %909 = vmatpush.bf16.msra.mxu0 0
    %910 = vmatpush.bf16.msra.mxu0 0
    %911 = vmatpush.bf16.msra.mxu0 0
    %912 = vmatpush.bf16.msra.mxu0 0
    %913 = vmatpush.bf16.msra.mxu0 0
    %914 = vmatpush.bf16.msra.mxu0 %v856
    %915 = vmatmul.bf16.gmra.mxu0 %v860
    %v916 = vpop.f32.mrf.mxu0
    %v917 = vadd.f32 %v850, %v916
    %v918 = vpop.f32.mrf.mxu0
    %v919 = vadd.f32 %v850, %v918
    %920 = vmatmul.bf16.gmra.mxu0 %v863
    %v921 = vpop.f32.mrf.mxu0
    %v922 = vadd.f32 %v850, %v921
    %v923 = vpop.f32.mrf.mxu0
    %v924 = vadd.f32 %v850, %v923
    %925 = vmatmul.bf16.gmra.mxu0 %v866
    %v926 = vpop.f32.mrf.mxu0
    %v927 = vadd.f32 %v850, %v926
    %v928 = vpop.f32.mrf.mxu0
    %v929 = vadd.f32 %v850, %v928
    %930 = vmatmul.bf16.gmra.mxu0 %v869
    %v931 = vpop.f32.mrf.mxu0
    %v932 = vadd.f32 %v850, %v931
    %v933 = vpop.f32.mrf.mxu0
    %v934 = vadd.f32 %v850, %v933
    %935 = vmatmul.bf16.gmra.mxu0 %v872
    %v936 = vpop.f32.mrf.mxu0
    %v937 = vadd.f32 %v850, %v936
    %v938 = vpop.f32.mrf.mxu0
    %v939 = vadd.f32 %v850, %v938
    %940 = vmatmul.bf16.gmra.mxu0 %v875
    %v941 = vpop.f32.mrf.mxu0
    %v942 = vadd.f32 %v850, %v941
    %v943 = vpop.f32.mrf.mxu0
    %v944 = vadd.f32 %v850, %v943
    %945 = vmatmul.bf16.gmra.mxu0 %v878
    %v946 = vpop.f32.mrf.mxu0
    %v947 = vadd.f32 %v850, %v946
    %v948 = vpop.f32.mrf.mxu0
    %v949 = vadd.f32 %v850, %v948
    %950 = vmatmul.bf16.gmra.mxu0 %v881
    %v951 = vpop.f32.mrf.mxu0
    %v952 = vadd.f32 %v850, %v951
    %v953 = vpop.f32.mrf.mxu0
    %v954 = vadd.f32 %v850, %v953
    %955 = vmatmul.bf16.gmra.mxu0 %v884
    %v956 = vpop.f32.mrf.mxu0
    %v957 = vadd.f32 %v850, %v956
    %v958 = vpop.f32.mrf.mxu0
    %v959 = vadd.f32 %v850, %v958
    %960 = vmatmul.bf16.gmra.mxu0 %v887
    %v961 = vpop.f32.mrf.mxu0
    %v962 = vadd.f32 %v850, %v961
    %v963 = vpop.f32.mrf.mxu0
    %v964 = vadd.f32 %v850, %v963
    %965 = vmatmul.bf16.gmra.mxu0 %v890
    %v966 = vpop.f32.mrf.mxu0
    %v967 = vadd.f32 %v850, %v966
    %v968 = vpop.f32.mrf.mxu0
    %v969 = vadd.f32 %v850, %v968
    %970 = vmatmul.bf16.gmra.mxu0 %v893
    %v971 = vpop.f32.mrf.mxu0
    %v972 = vadd.f32 %v850, %v971
    %v973 = vpop.f32.mrf.mxu0
    %v974 = vadd.f32 %v850, %v973
    %975 = vmatmul.bf16.gmra.mxu0 %v896
    %v976 = vpop.f32.mrf.mxu0
    %v977 = vadd.f32 %v850, %v976
    %v978 = vpop.f32.mrf.mxu0
    %v979 = vadd.f32 %v850, %v978
    %980 = vmatmul.bf16.gmra.mxu0 %v899
    %v981 = vpop.f32.mrf.mxu0
    %v982 = vadd.f32 %v850, %v981
    %v983 = vpop.f32.mrf.mxu0
    %v984 = vadd.f32 %v850, %v983
    %985 = vmatmul.bf16.gmra.mxu0 %v902
    %v986 = vpop.f32.mrf.mxu0
    %v987 = vadd.f32 %v850, %v986
    %v988 = vpop.f32.mrf.mxu0
    %v989 = vadd.f32 %v850, %v988
    %990 = vmatmul.bf16.gmra.mxu0 %v905
    %v991 = vpop.f32.mrf.mxu0
    %v992 = vadd.f32 %v850, %v991
    %v993 = vpop.f32.mrf.mxu0
    %v994 = vadd.f32 %v850, %v993
    %995 = vdwg.mxu0
    %v996 = vmul.f32 %v917, 0.5
    %v997 = vmul.f32 %v919, 0.5
    %v998 = vmul.f32 %v922, 0.5
    %v999 = vmul.f32 %v924, 0.5
    %v1000 = vmul.f32 %v927, 0.5
    %v1001 = vmul.f32 %v929, 0.5
    %v1002 = vmul.f32 %v932, 0.5
    %v1003 = vmul.f32 %v934, 0.5
    %v1004 = vmul.f32 %v937, 0.5
    %v1005 = vmul.f32 %v939, 0.5
    %v1006 = vmul.f32 %v942, 0.5
    %v1007 = vmul.f32 %v944, 0.5
    %v1008 = vmul.f32 %v947, 0.5
    %v1009 = vmul.f32 %v949, 0.5
    %v1010 = vmul.f32 %v952, 0.5
    %v1011 = vmul.f32 %v954, 0.5
    %v1012 = vmul.f32 %v957, 0.5
    %v1013 = vmul.f32 %v959, 0.5
    %v1014 = vmul.f32 %v962, 0.5
    %v1015 = vmul.f32 %v964, 0.5
    %v1016 = vmul.f32 %v967, 0.5
    %v1017 = vmul.f32 %v969, 0.5
    %v1018 = vmul.f32 %v972, 0.5
    %v1019 = vmul.f32 %v974, 0.5
    %v1020 = vmul.f32 %v977, 0.5
    %v1021 = vmul.f32 %v979, 0.5
    %v1022 = vmul.f32 %v982, 0.5
    %v1023 = vmul.f32 %v984, 0.5
    %v1024 = vmul.f32 %v987, 0.5
    %v1025 = vmul.f32 %v989, 0.5
    %v1026 = vmul.f32 %v992, 0.5
    %v1027 = vmul.f32 %v994, 0.5
    %v1028 = vmul.f32 %v917, 0.044715
    %v1029 = vmul.f32 %v919, 0.044715
    %v1030 = vmul.f32 %v922, 0.044715
    %v1031 = vmul.f32 %v924, 0.044715
    %v1032 = vmul.f32 %v927, 0.044715
    %v1033 = vmul.f32 %v929, 0.044715
    %v1034 = vmul.f32 %v932, 0.044715
    %v1035 = vmul.f32 %v934, 0.044715
    %v1036 = vmul.f32 %v937, 0.044715
    %v1037 = vmul.f32 %v939, 0.044715
    %v1038 = vmul.f32 %v942, 0.044715
    %v1039 = vmul.f32 %v944, 0.044715
    %v1040 = vmul.f32 %v947, 0.044715
    %v1041 = vmul.f32 %v949, 0.044715
    %v1042 = vmul.f32 %v952, 0.044715
    %v1043 = vmul.f32 %v954, 0.044715
    %v1044 = vmul.f32 %v957, 0.044715
    %v1045 = vmul.f32 %v959, 0.044715
    %v1046 = vmul.f32 %v962, 0.044715
    %v1047 = vmul.f32 %v964, 0.044715
    %v1048 = vmul.f32 %v967, 0.044715
    %v1049 = vmul.f32 %v969, 0.044715
    %v1050 = vmul.f32 %v972, 0.044715
    %v1051 = vmul.f32 %v974, 0.044715
    %v1052 = vmul.f32 %v977, 0.044715
    %v1053 = vmul.f32 %v979, 0.044715
    %v1054 = vmul.f32 %v982, 0.044715
    %v1055 = vmul.f32 %v984, 0.044715
    %v1056 = vmul.f32 %v987, 0.044715
    %v1057 = vmul.f32 %v989, 0.044715
    %v1058 = vmul.f32 %v992, 0.044715
    %v1059 = vmul.f32 %v994, 0.044715
    %v1060 = vmul.f32 %v1028, %v917
    %v1061 = vmul.f32 %v1029, %v919
    %v1062 = vmul.f32 %v1030, %v922
    %v1063 = vmul.f32 %v1031, %v924
    %v1064 = vmul.f32 %v1032, %v927
    %v1065 = vmul.f32 %v1033, %v929
    %v1066 = vmul.f32 %v1034, %v932
    %v1067 = vmul.f32 %v1035, %v934
    %v1068 = vmul.f32 %v1036, %v937
    %v1069 = vmul.f32 %v1037, %v939
    %v1070 = vmul.f32 %v1038, %v942
    %v1071 = vmul.f32 %v1039, %v944
    %v1072 = vmul.f32 %v1040, %v947
    %v1073 = vmul.f32 %v1041, %v949
    %v1074 = vmul.f32 %v1042, %v952
    %v1075 = vmul.f32 %v1043, %v954
    %v1076 = vmul.f32 %v1044, %v957
    %v1077 = vmul.f32 %v1045, %v959
    %v1078 = vmul.f32 %v1046, %v962
    %v1079 = vmul.f32 %v1047, %v964
    %v1080 = vmul.f32 %v1048, %v967
    %v1081 = vmul.f32 %v1049, %v969
    %v1082 = vmul.f32 %v1050, %v972
    %v1083 = vmul.f32 %v1051, %v974
    %v1084 = vmul.f32 %v1052, %v977
    %v1085 = vmul.f32 %v1053, %v979
    %v1086 = vmul.f32 %v1054, %v982
    %v1087 = vmul.f32 %v1055, %v984
    %v1088 = vmul.f32 %v1056, %v987
    %v1089 = vmul.f32 %v1057, %v989
    %v1090 = vmul.f32 %v1058, %v992
    %v1091 = vmul.f32 %v1059, %v994
    %v1092 = vmul.f32 %v1060, %v917
    %v1093 = vmul.f32 %v1061, %v919
    %v1094 = vmul.f32 %v1062, %v922
    %v1095 = vmul.f32 %v1063, %v924
    %v1096 = vmul.f32 %v1064, %v927
    %v1097 = vmul.f32 %v1065, %v929
    %v1098 = vmul.f32 %v1066, %v932
    %v1099 = vmul.f32 %v1067, %v934
    %v1100 = vmul.f32 %v1068, %v937
    %v1101 = vmul.f32 %v1069, %v939
    %v1102 = vmul.f32 %v1070, %v942
    %v1103 = vmul.f32 %v1071, %v944
    %v1104 = vmul.f32 %v1072, %v947
    %v1105 = vmul.f32 %v1073, %v949
    %v1106 = vmul.f32 %v1074, %v952
    %v1107 = vmul.f32 %v1075, %v954
    %v1108 = vmul.f32 %v1076, %v957
    %v1109 = vmul.f32 %v1077, %v959
    %v1110 = vmul.f32 %v1078, %v962
    %v1111 = vmul.f32 %v1079, %v964
    %v1112 = vmul.f32 %v1080, %v967
    %v1113 = vmul.f32 %v1081, %v969
    %v1114 = vmul.f32 %v1082, %v972
    %v1115 = vmul.f32 %v1083, %v974
    %v1116 = vmul.f32 %v1084, %v977
    %v1117 = vmul.f32 %v1085, %v979
    %v1118 = vmul.f32 %v1086, %v982
    %v1119 = vmul.f32 %v1087, %v984
    %v1120 = vmul.f32 %v1088, %v987
    %v1121 = vmul.f32 %v1089, %v989
    %v1122 = vmul.f32 %v1090, %v992
    %v1123 = vmul.f32 %v1091, %v994
    %v1124 = vadd.f32 %v917, %v1092
    %v1125 = vadd.f32 %v919, %v1093
    %v1126 = vadd.f32 %v922, %v1094
    %v1127 = vadd.f32 %v924, %v1095
    %v1128 = vadd.f32 %v927, %v1096
    %v1129 = vadd.f32 %v929, %v1097
    %v1130 = vadd.f32 %v932, %v1098
    %v1131 = vadd.f32 %v934, %v1099
    %v1132 = vadd.f32 %v937, %v1100
    %v1133 = vadd.f32 %v939, %v1101
    %v1134 = vadd.f32 %v942, %v1102
    %v1135 = vadd.f32 %v944, %v1103
    %v1136 = vadd.f32 %v947, %v1104
    %v1137 = vadd.f32 %v949, %v1105
    %v1138 = vadd.f32 %v952, %v1106
    %v1139 = vadd.f32 %v954, %v1107
    %v1140 = vadd.f32 %v957, %v1108
    %v1141 = vadd.f32 %v959, %v1109
    %v1142 = vadd.f32 %v962, %v1110
    %v1143 = vadd.f32 %v964, %v1111
    %v1144 = vadd.f32 %v967, %v1112
    %v1145 = vadd.f32 %v969, %v1113
    %v1146 = vadd.f32 %v972, %v1114
    %v1147 = vadd.f32 %v974, %v1115
    %v1148 = vadd.f32 %v977, %v1116
    %v1149 = vadd.f32 %v979, %v1117
    %v1150 = vadd.f32 %v982, %v1118
    %v1151 = vadd.f32 %v984, %v1119
    %v1152 = vadd.f32 %v987, %v1120
    %v1153 = vadd.f32 %v989, %v1121
    %v1154 = vadd.f32 %v992, %v1122
    %v1155 = vadd.f32 %v994, %v1123
    %v1156 = vmul.f32 %v1124, 0.7978846
    %v1157 = vmul.f32 %v1125, 0.7978846
    %v1158 = vmul.f32 %v1126, 0.7978846
    %v1159 = vmul.f32 %v1127, 0.7978846
    %v1160 = vmul.f32 %v1128, 0.7978846
    %v1161 = vmul.f32 %v1129, 0.7978846
    %v1162 = vmul.f32 %v1130, 0.7978846
    %v1163 = vmul.f32 %v1131, 0.7978846
    %v1164 = vmul.f32 %v1132, 0.7978846
    %v1165 = vmul.f32 %v1133, 0.7978846
    %v1166 = vmul.f32 %v1134, 0.7978846
    %v1167 = vmul.f32 %v1135, 0.7978846
    %v1168 = vmul.f32 %v1136, 0.7978846
    %v1169 = vmul.f32 %v1137, 0.7978846
    %v1170 = vmul.f32 %v1138, 0.7978846
    %v1171 = vmul.f32 %v1139, 0.7978846
    %v1172 = vmul.f32 %v1140, 0.7978846
    %v1173 = vmul.f32 %v1141, 0.7978846
    %v1174 = vmul.f32 %v1142, 0.7978846
    %v1175 = vmul.f32 %v1143, 0.7978846
    %v1176 = vmul.f32 %v1144, 0.7978846
    %v1177 = vmul.f32 %v1145, 0.7978846
    %v1178 = vmul.f32 %v1146, 0.7978846
    %v1179 = vmul.f32 %v1147, 0.7978846
    %v1180 = vmul.f32 %v1148, 0.7978846
    %v1181 = vmul.f32 %v1149, 0.7978846
    %v1182 = vmul.f32 %v1150, 0.7978846
    %v1183 = vmul.f32 %v1151, 0.7978846
    %v1184 = vmul.f32 %v1152, 0.7978846
    %v1185 = vmul.f32 %v1153, 0.7978846
    %v1186 = vmul.f32 %v1154, 0.7978846
    %v1187 = vmul.f32 %v1155, 0.7978846
    %v1188 = vtanh.pop %v1156
    %v1189 = vtanh.pop %v1157
    %v1190 = vtanh.pop %v1158
    %v1191 = vtanh.pop %v1159
    %v1192 = vtanh.pop %v1160
    %v1193 = vtanh.pop %v1161
    %v1194 = vtanh.pop %v1162
    %v1195 = vtanh.pop %v1163
    %v1196 = vtanh.pop %v1164
    %v1197 = vtanh.pop %v1165
    %v1198 = vtanh.pop %v1166
    %v1199 = vtanh.pop %v1167
    %v1200 = vtanh.pop %v1168
    %v1201 = vtanh.pop %v1169
    %v1202 = vtanh.pop %v1170
    %v1203 = vtanh.pop %v1171
    %v1204 = vtanh.pop %v1172
    %v1205 = vtanh.pop %v1173
    %v1206 = vtanh.pop %v1174
    %v1207 = vtanh.pop %v1175
    %v1208 = vtanh.pop %v1176
    %v1209 = vtanh.pop %v1177
    %v1210 = vtanh.pop %v1178
    %v1211 = vtanh.pop %v1179
    %v1212 = vtanh.pop %v1180
    %v1213 = vtanh.pop %v1181
    %v1214 = vtanh.pop %v1182
    %v1215 = vtanh.pop %v1183
    %v1216 = vtanh.pop %v1184
    %v1217 = vtanh.pop %v1185
    %v1218 = vtanh.pop %v1186
    %v1219 = vtanh.pop %v1187
    %v1220 = vadd.f32 %v1188, 1.0
    %v1221 = vadd.f32 %v1189, 1.0
    %v1222 = vadd.f32 %v1190, 1.0
    %v1223 = vadd.f32 %v1191, 1.0
    %v1224 = vadd.f32 %v1192, 1.0
    %v1225 = vadd.f32 %v1193, 1.0
    %v1226 = vadd.f32 %v1194, 1.0
    %v1227 = vadd.f32 %v1195, 1.0
    %v1228 = vadd.f32 %v1196, 1.0
    %v1229 = vadd.f32 %v1197, 1.0
    %v1230 = vadd.f32 %v1198, 1.0
    %v1231 = vadd.f32 %v1199, 1.0
    %v1232 = vadd.f32 %v1200, 1.0
    %v1233 = vadd.f32 %v1201, 1.0
    %v1234 = vadd.f32 %v1202, 1.0
    %v1235 = vadd.f32 %v1203, 1.0
    %v1236 = vadd.f32 %v1204, 1.0
    %v1237 = vadd.f32 %v1205, 1.0
    %v1238 = vadd.f32 %v1206, 1.0
    %v1239 = vadd.f32 %v1207, 1.0
    %v1240 = vadd.f32 %v1208, 1.0
    %v1241 = vadd.f32 %v1209, 1.0
    %v1242 = vadd.f32 %v1210, 1.0
    %v1243 = vadd.f32 %v1211, 1.0
    %v1244 = vadd.f32 %v1212, 1.0
    %v1245 = vadd.f32 %v1213, 1.0
    %v1246 = vadd.f32 %v1214, 1.0
    %v1247 = vadd.f32 %v1215, 1.0
    %v1248 = vadd.f32 %v1216, 1.0
    %v1249 = vadd.f32 %v1217, 1.0
    %v1250 = vadd.f32 %v1218, 1.0
    %v1251 = vadd.f32 %v1219, 1.0
    %v1252 = vmul.f32 %v996, %v1220
    %v1253 = vmul.f32 %v997, %v1221
    %v1254 = vmul.f32 %v998, %v1222
    %v1255 = vmul.f32 %v999, %v1223
    %v1256 = vmul.f32 %v1000, %v1224
    %v1257 = vmul.f32 %v1001, %v1225
    %v1258 = vmul.f32 %v1002, %v1226
    %v1259 = vmul.f32 %v1003, %v1227
    %v1260 = vmul.f32 %v1004, %v1228
    %v1261 = vmul.f32 %v1005, %v1229
    %v1262 = vmul.f32 %v1006, %v1230
    %v1263 = vmul.f32 %v1007, %v1231
    %v1264 = vmul.f32 %v1008, %v1232
    %v1265 = vmul.f32 %v1009, %v1233
    %v1266 = vmul.f32 %v1010, %v1234
    %v1267 = vmul.f32 %v1011, %v1235
    %v1268 = vmul.f32 %v1012, %v1236
    %v1269 = vmul.f32 %v1013, %v1237
    %v1270 = vmul.f32 %v1014, %v1238
    %v1271 = vmul.f32 %v1015, %v1239
    %v1272 = vmul.f32 %v1016, %v1240
    %v1273 = vmul.f32 %v1017, %v1241
    %v1274 = vmul.f32 %v1018, %v1242
    %v1275 = vmul.f32 %v1019, %v1243
    %v1276 = vmul.f32 %v1020, %v1244
    %v1277 = vmul.f32 %v1021, %v1245
    %v1278 = vmul.f32 %v1022, %v1246
    %v1279 = vmul.f32 %v1023, %v1247
    %v1280 = vmul.f32 %v1024, %v1248
    %v1281 = vmul.f32 %v1025, %v1249
    %v1282 = vmul.f32 %v1026, %v1250
    %v1283 = vmul.f32 %v1027, %v1251
    %v1284 = vpack.c.bf16 %v1253, %v1252
    %v1285 = vpack.c.bf16 %v1255, %v1254
    %v1286 = vpack.c.bf16 %v1257, %v1256
    %v1287 = vpack.c.bf16 %v1259, %v1258
    %v1288 = vpack.c.bf16 %v1261, %v1260
    %v1289 = vpack.c.bf16 %v1263, %v1262
    %v1290 = vpack.c.bf16 %v1265, %v1264
    %v1291 = vpack.c.bf16 %v1267, %v1266
    %v1292 = vpack.c.bf16 %v1269, %v1268
    %v1293 = vpack.c.bf16 %v1271, %v1270
    %v1294 = vpack.c.bf16 %v1273, %v1272
    %v1295 = vpack.c.bf16 %v1275, %v1274
    %v1296 = vpack.c.bf16 %v1277, %v1276
    %v1297 = vpack.c.bf16 %v1279, %v1278
    %v1298 = vpack.c.bf16 %v1281, %v1280
    %v1299 = vpack.c.bf16 %v1283, %v1282
    %v1300 = vld [vmem:[%s7] sm:$0xf]
    %v1301 = vld [vmem:[%s7 + $0x4] sm:$0xf]
    %v1302 = vld [vmem:[%s7 + $0x8] sm:$0xf]
    %v1303 = vld [vmem:[%s7 + $0xc] sm:$0xf]
    %v1304 = vld [vmem:[%s7 + $0x10] sm:$0xf]
    %v1305 = vld [vmem:[%s7 + $0x14] sm:$0xf]
    %v1306 = vld [vmem:[%s7 + $0x18] sm:$0xf]
    %v1307 = vld [vmem:[%s7 + $0x1c] sm:$0xf]
    %v1308 = vld [vmem:[%s8] sm:$0x1]
    %v1310 = vperm.slane %v1308, 0
    %v1320 = vunpack.c.l.b16 %v1300
    %v1321 = vunpack.c.l.b16 %v1301
    %v1322 = vunpack.c.l.b16 %v1302
    %v1323 = vunpack.c.l.b16 %v1303
    %v1324 = vunpack.c.l.b16 %v1304
    %v1325 = vunpack.c.l.b16 %v1305
    %v1326 = vunpack.c.l.b16 %v1306
    %v1327 = vunpack.c.l.b16 %v1307
    %v1328 = vpack.c.b16 %v1321, %v1320
    %v1329 = vpack.c.b16 %v1323, %v1322
    %v1330 = vpack.c.b16 %v1325, %v1324
    %v1331 = vpack.c.b16 %v1327, %v1326
    %vm1336 = vcmask 523264
    %v1338 = vsel %vm1336, %v1284, 0
    %v1341 = vsel %vm1336, %v1285, 0
    %v1344 = vsel %vm1336, %v1286, 0
    %v1347 = vsel %vm1336, %v1287, 0
    %v1350 = vsel %vm1336, %v1288, 0
    %v1353 = vsel %vm1336, %v1289, 0
    %v1356 = vsel %vm1336, %v1290, 0
    %v1359 = vsel %vm1336, %v1291, 0
    %v1362 = vsel %vm1336, %v1292, 0
    %v1365 = vsel %vm1336, %v1293, 0
    %v1368 = vsel %vm1336, %v1294, 0
    %v1371 = vsel %vm1336, %v1295, 0
    %v1374 = vsel %vm1336, %v1296, 0
    %v1377 = vsel %vm1336, %v1297, 0
    %v1380 = vsel %vm1336, %v1298, 0
    %v1383 = vsel %vm1336, %v1299, 0
    %1385 = vmatpush.bf16.msra.mxu0 0
    %1386 = vmatpush.bf16.msra.mxu0 0
    %1387 = vmatpush.bf16.msra.mxu0 0
    %1388 = vmatpush.bf16.msra.mxu0 0
    %1389 = vmatpush.bf16.msra.mxu0 %v1331
    %1390 = vmatpush.bf16.msra.mxu0 %v1330
    %1391 = vmatpush.bf16.msra.mxu0 %v1329
    %1392 = vmatpush.bf16.msra.mxu0 %v1328
    %1393 = vmatmul.bf16.gmra.mxu0 %v1338
    %v1394 = vpop.f32.mrf.mxu0
    %v1395 = vadd.f32 %v1310, %v1394
    %v1396 = vpop.f32.mrf.mxu0
    %v1397 = vadd.f32 %v1310, %v1396
    %1398 = vmatmul.bf16.gmra.mxu0 %v1341
    %v1399 = vpop.f32.mrf.mxu0
    %v1400 = vadd.f32 %v1310, %v1399
    %v1401 = vpop.f32.mrf.mxu0
    %v1402 = vadd.f32 %v1310, %v1401
    %1403 = vmatmul.bf16.gmra.mxu0 %v1344
    %v1404 = vpop.f32.mrf.mxu0
    %v1405 = vadd.f32 %v1310, %v1404
    %v1406 = vpop.f32.mrf.mxu0
    %v1407 = vadd.f32 %v1310, %v1406
    %1408 = vmatmul.bf16.gmra.mxu0 %v1347
    %v1409 = vpop.f32.mrf.mxu0
    %v1410 = vadd.f32 %v1310, %v1409
    %v1411 = vpop.f32.mrf.mxu0
    %v1412 = vadd.f32 %v1310, %v1411
    %1413 = vmatmul.bf16.gmra.mxu0 %v1350
    %v1414 = vpop.f32.mrf.mxu0
    %v1415 = vadd.f32 %v1310, %v1414
    %v1416 = vpop.f32.mrf.mxu0
    %v1417 = vadd.f32 %v1310, %v1416
    %1418 = vmatmul.bf16.gmra.mxu0 %v1353
    %v1419 = vpop.f32.mrf.mxu0
    %v1420 = vadd.f32 %v1310, %v1419
    %v1421 = vpop.f32.mrf.mxu0
    %v1422 = vadd.f32 %v1310, %v1421
    %1423 = vmatmul.bf16.gmra.mxu0 %v1356
    %v1424 = vpop.f32.mrf.mxu0
    %v1425 = vadd.f32 %v1310, %v1424
    %v1426 = vpop.f32.mrf.mxu0
    %v1427 = vadd.f32 %v1310, %v1426
    %1428 = vmatmul.bf16.gmra.mxu0 %v1359
    %v1429 = vpop.f32.mrf.mxu0
    %v1430 = vadd.f32 %v1310, %v1429
    %v1431 = vpop.f32.mrf.mxu0
    %v1432 = vadd.f32 %v1310, %v1431
    %1433 = vmatmul.bf16.gmra.mxu0 %v1362
    %v1434 = vpop.f32.mrf.mxu0
    %v1435 = vadd.f32 %v1310, %v1434
    %v1436 = vpop.f32.mrf.mxu0
    %v1437 = vadd.f32 %v1310, %v1436
    %1438 = vmatmul.bf16.gmra.mxu0 %v1365
    %v1439 = vpop.f32.mrf.mxu0
    %v1440 = vadd.f32 %v1310, %v1439
    %v1441 = vpop.f32.mrf.mxu0
    %v1442 = vadd.f32 %v1310, %v1441
    %1443 = vmatmul.bf16.gmra.mxu0 %v1368
    %v1444 = vpop.f32.mrf.mxu0
    %v1445 = vadd.f32 %v1310, %v1444
    %v1446 = vpop.f32.mrf.mxu0
    %v1447 = vadd.f32 %v1310, %v1446
    %1448 = vmatmul.bf16.gmra.mxu0 %v1371
    %v1449 = vpop.f32.mrf.mxu0
    %v1450 = vadd.f32 %v1310, %v1449
    %v1451 = vpop.f32.mrf.mxu0
    %v1452 = vadd.f32 %v1310, %v1451
    %1453 = vmatmul.bf16.gmra.mxu0 %v1374
    %v1454 = vpop.f32.mrf.mxu0
    %v1455 = vadd.f32 %v1310, %v1454
    %v1456 = vpop.f32.mrf.mxu0
    %v1457 = vadd.f32 %v1310, %v1456
    %1458 = vmatmul.bf16.gmra.mxu0 %v1377
    %v1459 = vpop.f32.mrf.mxu0
    %v1460 = vadd.f32 %v1310, %v1459
    %v1461 = vpop.f32.mrf.mxu0
    %v1462 = vadd.f32 %v1310, %v1461
    %1463 = vmatmul.bf16.gmra.mxu0 %v1380
    %v1464 = vpop.f32.mrf.mxu0
    %v1465 = vadd.f32 %v1310, %v1464
    %v1466 = vpop.f32.mrf.mxu0
    %v1467 = vadd.f32 %v1310, %v1466
    %1468 = vmatmul.bf16.gmra.mxu0 %v1383
    %v1469 = vpop.f32.mrf.mxu0
    %v1470 = vadd.f32 %v1310, %v1469
    %v1471 = vpop.f32.mrf.mxu0
    %v1472 = vadd.f32 %v1310, %v1471
    %1473 = vdwg.mxu0
    %v1474 = vpack.c.bf16 %v1395, %v1395
    %v1475 = vpack.c.bf16 %v1397, %v1397
    %v1476 = vpack.c.bf16 %v1400, %v1400
    %v1477 = vpack.c.bf16 %v1402, %v1402
    %v1478 = vpack.c.bf16 %v1405, %v1405
    %v1479 = vpack.c.bf16 %v1407, %v1407
    %v1480 = vpack.c.bf16 %v1410, %v1410
    %v1481 = vpack.c.bf16 %v1412, %v1412
    %v1482 = vpack.c.bf16 %v1415, %v1415
    %v1483 = vpack.c.bf16 %v1417, %v1417
    %v1484 = vpack.c.bf16 %v1420, %v1420
    %v1485 = vpack.c.bf16 %v1422, %v1422
    %v1486 = vpack.c.bf16 %v1425, %v1425
    %v1487 = vpack.c.bf16 %v1427, %v1427
    %v1488 = vpack.c.bf16 %v1430, %v1430
    %v1489 = vpack.c.bf16 %v1432, %v1432
    %v1490 = vpack.c.bf16 %v1435, %v1435
    %v1491 = vpack.c.bf16 %v1437, %v1437
    %v1492 = vpack.c.bf16 %v1440, %v1440
    %v1493 = vpack.c.bf16 %v1442, %v1442
    %v1494 = vpack.c.bf16 %v1445, %v1445
    %v1495 = vpack.c.bf16 %v1447, %v1447
    %v1496 = vpack.c.bf16 %v1450, %v1450
    %v1497 = vpack.c.bf16 %v1452, %v1452
    %v1498 = vpack.c.bf16 %v1455, %v1455
    %v1499 = vpack.c.bf16 %v1457, %v1457
    %v1500 = vpack.c.bf16 %v1460, %v1460
    %v1501 = vpack.c.bf16 %v1462, %v1462
    %v1502 = vpack.c.bf16 %v1465, %v1465
    %v1503 = vpack.c.bf16 %v1467, %v1467
    %v1504 = vpack.c.bf16 %v1470, %v1470
    %v1505 = vpack.c.bf16 %v1472, %v1472
    %v1538 = vunpack.c.l.b16 %v1474
    %v1539 = vunpack.c.l.b16 %v1475
    %v1540 = vunpack.c.l.b16 %v1476
    %v1541 = vunpack.c.l.b16 %v1477
    %v1542 = vunpack.c.l.b16 %v1478
    %v1543 = vunpack.c.l.b16 %v1479
    %v1544 = vunpack.c.l.b16 %v1480
    %v1545 = vunpack.c.l.b16 %v1481
    %v1546 = vunpack.c.l.b16 %v1482
    %v1547 = vunpack.c.l.b16 %v1483
    %v1548 = vunpack.c.l.b16 %v1484
    %v1549 = vunpack.c.l.b16 %v1485
    %v1550 = vunpack.c.l.b16 %v1486
    %v1551 = vunpack.c.l.b16 %v1487
    %v1552 = vunpack.c.l.b16 %v1488
    %v1553 = vunpack.c.l.b16 %v1489
    %v1554 = vunpack.c.l.b16 %v1490
    %v1555 = vunpack.c.l.b16 %v1491
    %v1556 = vunpack.c.l.b16 %v1492
    %v1557 = vunpack.c.l.b16 %v1493
    %v1558 = vunpack.c.l.b16 %v1494
    %v1559 = vunpack.c.l.b16 %v1495
    %v1560 = vunpack.c.l.b16 %v1496
    %v1561 = vunpack.c.l.b16 %v1497
    %v1562 = vunpack.c.l.b16 %v1498
    %v1563 = vunpack.c.l.b16 %v1499
    %v1564 = vunpack.c.l.b16 %v1500
    %v1565 = vunpack.c.l.b16 %v1501
    %v1566 = vunpack.c.l.b16 %v1502
    %v1567 = vunpack.c.l.b16 %v1503
    %v1568 = vunpack.c.l.b16 %v1504
    %v1569 = vunpack.c.l.b16 %v1505
    %v1570 = vpack.c.b16 %v1539, %v1538
    %v1571 = vpack.c.b16 %v1541, %v1540
    %v1572 = vpack.c.b16 %v1543, %v1542
    %v1573 = vpack.c.b16 %v1545, %v1544
    %v1574 = vpack.c.b16 %v1547, %v1546
    %v1575 = vpack.c.b16 %v1549, %v1548
    %v1576 = vpack.c.b16 %v1551, %v1550
    %v1577 = vpack.c.b16 %v1553, %v1552
    %v1578 = vpack.c.b16 %v1555, %v1554
    %v1579 = vpack.c.b16 %v1557, %v1556
    %v1580 = vpack.c.b16 %v1559, %v1558
    %v1581 = vpack.c.b16 %v1561, %v1560
    %v1582 = vpack.c.b16 %v1563, %v1562
    %v1583 = vpack.c.b16 %v1565, %v1564
    %v1584 = vpack.c.b16 %v1567, %v1566
    %v1585 = vpack.c.b16 %v1569, %v1568
    %1602 = vxpose.xlu0.c.b16.start [1/8] %v1570, 128
    %1603 = vxpose.xlu0.c.b16.cont [2/8] %v1571, 128
    %1604 = vxpose.xlu0.c.b16.cont [3/8] 0, 128
    %1605 = vxpose.xlu0.c.b16.cont [4/8] 0, 128
    %1606 = vxpose.xlu0.c.b16.cont [5/8] 0, 128
    %1607 = vxpose.xlu0.c.b16.cont [6/8] 0, 128
    %1608 = vxpose.xlu0.c.b16.cont [7/8] 0, 128
    %1609 = vxpose.xlu0.c.b16.end [8/8] 0, 128
    %v1610 = vpop.trf.xlu0
    %v1611 = vpop.trf.xlu0
    %v1612 = vpop.trf.xlu0
    %v1613 = vpop.trf.xlu0
    %v1614 = vpop.trf.xlu0
    %v1615 = vpop.trf.xlu0
    %v1616 = vpop.trf.xlu0
    %v1617 = vpop.trf.xlu0
    %1618 = vxpose.xlu0.c.b16.start [1/8] %v1572, 128
    %1619 = vxpose.xlu0.c.b16.cont [2/8] %v1573, 128
    %1620 = vxpose.xlu0.c.b16.cont [3/8] 0, 128
    %1621 = vxpose.xlu0.c.b16.cont [4/8] 0, 128
    %1622 = vxpose.xlu0.c.b16.cont [5/8] 0, 128
    %1623 = vxpose.xlu0.c.b16.cont [6/8] 0, 128
    %1624 = vxpose.xlu0.c.b16.cont [7/8] 0, 128
    %1625 = vxpose.xlu0.c.b16.end [8/8] 0, 128
    %v1626 = vpop.trf.xlu0
    %v1627 = vpop.trf.xlu0
    %v1628 = vpop.trf.xlu0
    %v1629 = vpop.trf.xlu0
    %v1630 = vpop.trf.xlu0
    %v1631 = vpop.trf.xlu0
    %v1632 = vpop.trf.xlu0
    %v1633 = vpop.trf.xlu0
    %1634 = vxpose.xlu0.c.b16.start [1/8] %v1574, 128
    %1635 = vxpose.xlu0.c.b16.cont [2/8] %v1575, 128
    %1636 = vxpose.xlu0.c.b16.cont [3/8] 0, 128
    %1637 = vxpose.xlu0.c.b16.cont [4/8] 0, 128
    %1638 = vxpose.xlu0.c.b16.cont [5/8] 0, 128
    %1639 = vxpose.xlu0.c.b16.cont [6/8] 0, 128
    %1640 = vxpose.xlu0.c.b16.cont [7/8] 0, 128
    %1641 = vxpose.xlu0.c.b16.end [8/8] 0, 128
    %v1642 = vpop.trf.xlu0
    %v1643 = vpop.trf.xlu0
    %v1644 = vpop.trf.xlu0
    %v1645 = vpop.trf.xlu0
    %v1646 = vpop.trf.xlu0
    %v1647 = vpop.trf.xlu0
    %v1648 = vpop.trf.xlu0
    %v1649 = vpop.trf.xlu0
    %1650 = vxpose.xlu0.c.b16.start [1/8] %v1576, 128
    %1651 = vxpose.xlu0.c.b16.cont [2/8] %v1577, 128
    %1652 = vxpose.xlu0.c.b16.cont [3/8] 0, 128
    %1653 = vxpose.xlu0.c.b16.cont [4/8] 0, 128
    %1654 = vxpose.xlu0.c.b16.cont [5/8] 0, 128
    %1655 = vxpose.xlu0.c.b16.cont [6/8] 0, 128
    %1656 = vxpose.xlu0.c.b16.cont [7/8] 0, 128
    %1657 = vxpose.xlu0.c.b16.end [8/8] 0, 128
    %v1658 = vpop.trf.xlu0
    %v1659 = vpop.trf.xlu0
    %v1660 = vpop.trf.xlu0
    %v1661 = vpop.trf.xlu0
    %v1662 = vpop.trf.xlu0
    %v1663 = vpop.trf.xlu0
    %v1664 = vpop.trf.xlu0
    %v1665 = vpop.trf.xlu0
    %1666 = vxpose.xlu0.c.b16.start [1/8] %v1578, 128
    %1667 = vxpose.xlu0.c.b16.cont [2/8] %v1579, 128
    %1668 = vxpose.xlu0.c.b16.cont [3/8] 0, 128
    %1669 = vxpose.xlu0.c.b16.cont [4/8] 0, 128
    %1670 = vxpose.xlu0.c.b16.cont [5/8] 0, 128
    %1671 = vxpose.xlu0.c.b16.cont [6/8] 0, 128
    %1672 = vxpose.xlu0.c.b16.cont [7/8] 0, 128
    %1673 = vxpose.xlu0.c.b16.end [8/8] 0, 128
    %v1674 = vpop.trf.xlu0
    %v1675 = vpop.trf.xlu0
    %v1676 = vpop.trf.xlu0
    %v1677 = vpop.trf.xlu0
    %v1678 = vpop.trf.xlu0
    %v1679 = vpop.trf.xlu0
    %v1680 = vpop.trf.xlu0
    %v1681 = vpop.trf.xlu0
    %1682 = vxpose.xlu0.c.b16.start [1/8] %v1580, 128
    %1683 = vxpose.xlu0.c.b16.cont [2/8] %v1581, 128
    %1684 = vxpose.xlu0.c.b16.cont [3/8] 0, 128
    %1685 = vxpose.xlu0.c.b16.cont [4/8] 0, 128
    %1686 = vxpose.xlu0.c.b16.cont [5/8] 0, 128
    %1687 = vxpose.xlu0.c.b16.cont [6/8] 0, 128
    %1688 = vxpose.xlu0.c.b16.cont [7/8] 0, 128
    %1689 = vxpose.xlu0.c.b16.end [8/8] 0, 128
    %v1690 = vpop.trf.xlu0
    %v1691 = vpop.trf.xlu0
    %v1692 = vpop.trf.xlu0
    %v1693 = vpop.trf.xlu0
    %v1694 = vpop.trf.xlu0
    %v1695 = vpop.trf.xlu0
    %v1696 = vpop.trf.xlu0
    %v1697 = vpop.trf.xlu0
    %1698 = vxpose.xlu0.c.b16.start [1/8] %v1582, 128
    %1699 = vxpose.xlu0.c.b16.cont [2/8] %v1583, 128
    %1700 = vxpose.xlu0.c.b16.cont [3/8] 0, 128
    %1701 = vxpose.xlu0.c.b16.cont [4/8] 0, 128
    %1702 = vxpose.xlu0.c.b16.cont [5/8] 0, 128
    %1703 = vxpose.xlu0.c.b16.cont [6/8] 0, 128
    %1704 = vxpose.xlu0.c.b16.cont [7/8] 0, 128
    %1705 = vxpose.xlu0.c.b16.end [8/8] 0, 128
    %v1706 = vpop.trf.xlu0
    %v1707 = vpop.trf.xlu0
    %v1708 = vpop.trf.xlu0
    %v1709 = vpop.trf.xlu0
    %v1710 = vpop.trf.xlu0
    %v1711 = vpop.trf.xlu0
    %v1712 = vpop.trf.xlu0
    %v1713 = vpop.trf.xlu0
    %1714 = vxpose.xlu0.c.b16.start [1/8] %v1584, 128
    %1715 = vxpose.xlu0.c.b16.cont [2/8] %v1585, 128
    %1716 = vxpose.xlu0.c.b16.cont [3/8] 0, 128
    %1717 = vxpose.xlu0.c.b16.cont [4/8] 0, 128
    %1718 = vxpose.xlu0.c.b16.cont [5/8] 0, 128
    %1719 = vxpose.xlu0.c.b16.cont [6/8] 0, 128
    %1720 = vxpose.xlu0.c.b16.cont [7/8] 0, 128
    %1721 = vxpose.xlu0.c.b16.end [8/8] 0, 128
    %v1722 = vpop.trf.xlu0
    %v1723 = vpop.trf.xlu0
    %v1724 = vpop.trf.xlu0
    %v1725 = vpop.trf.xlu0
    %v1726 = vpop.trf.xlu0
    %v1727 = vpop.trf.xlu0
    %v1728 = vpop.trf.xlu0
    %v1729 = vpop.trf.xlu0
    %v1730 = vld [vmem:[%s9] sm:$0x1]
    %v1731 = vld [vmem:[%s10] sm:$0x1]
    %v1732 = vunpack.c.l.bf16 %v1610
    %v1733 = vunpack.c.h.bf16 %v1610
    %v1734 = vunpack.c.l.bf16 %v1626
    %v1735 = vunpack.c.h.bf16 %v1626
    %v1736 = vunpack.c.l.bf16 %v1642
    %v1737 = vunpack.c.h.bf16 %v1642
    %v1738 = vunpack.c.l.bf16 %v1658
    %v1739 = vunpack.c.h.bf16 %v1658
    %v1740 = vunpack.c.l.bf16 %v1674
    %v1741 = vunpack.c.h.bf16 %v1674
    %v1742 = vunpack.c.l.bf16 %v1690
    %v1743 = vunpack.c.h.bf16 %v1690
    %v1744 = vunpack.c.l.bf16 %v1706
    %v1745 = vunpack.c.h.bf16 %v1706
    %v1746 = vunpack.c.l.bf16 %v1722
    %v1747 = vunpack.c.h.bf16 %v1722
    %v1748 = vsel %vm224, %v1732, 0.0
    %1749 = vadd.xlane.f32.xlu0 %v1748
    %v1750 = vpop.xlane.xlu0 %1749
    %v1751 = vsel %vm224, %v1733, 0.0
    %1752 = vadd.xlane.f32.xlu0 %v1751
    %v1753 = vpop.xlane.xlu0 %1752
    %v1754 = vsel %vm224, %v1734, 0.0
    %1755 = vadd.xlane.f32.xlu0 %v1754
    %v1756 = vpop.xlane.xlu0 %1755
    %v1757 = vsel %vm224, %v1735, 0.0
    %1758 = vadd.xlane.f32.xlu0 %v1757
    %v1759 = vpop.xlane.xlu0 %1758
    %v1760 = vsel %vm224, %v1736, 0.0
    %1761 = vadd.xlane.f32.xlu0 %v1760
    %v1762 = vpop.xlane.xlu0 %1761
    %v1763 = vsel %vm224, %v1737, 0.0
    %1764 = vadd.xlane.f32.xlu0 %v1763
    %v1765 = vpop.xlane.xlu0 %1764
    %v1766 = vsel %vm224, %v1738, 0.0
    %1767 = vadd.xlane.f32.xlu0 %v1766
    %v1768 = vpop.xlane.xlu0 %1767
    %v1769 = vsel %vm224, %v1739, 0.0
    %1770 = vadd.xlane.f32.xlu0 %v1769
    %v1771 = vpop.xlane.xlu0 %1770
    %v1772 = vsel %vm224, %v1740, 0.0
    %1773 = vadd.xlane.f32.xlu0 %v1772
    %v1774 = vpop.xlane.xlu0 %1773
    %v1775 = vsel %vm224, %v1741, 0.0
    %1776 = vadd.xlane.f32.xlu0 %v1775
    %v1777 = vpop.xlane.xlu0 %1776
    %v1778 = vsel %vm224, %v1742, 0.0
    %1779 = vadd.xlane.f32.xlu0 %v1778
    %v1780 = vpop.xlane.xlu0 %1779
    %v1781 = vsel %vm224, %v1743, 0.0
    %1782 = vadd.xlane.f32.xlu0 %v1781
    %v1783 = vpop.xlane.xlu0 %1782
    %v1784 = vsel %vm224, %v1744, 0.0
    %1785 = vadd.xlane.f32.xlu0 %v1784
    %v1786 = vpop.xlane.xlu0 %1785
    %v1787 = vsel %vm224, %v1745, 0.0
    %1788 = vadd.xlane.f32.xlu0 %v1787
    %v1789 = vpop.xlane.xlu0 %1788
    %v1790 = vsel %vm224, %v1746, 0.0
    %1791 = vadd.xlane.f32.xlu0 %v1790
    %v1792 = vpop.xlane.xlu0 %1791
    %v1793 = vsel %vm224, %v1747, 0.0
    %1794 = vadd.xlane.f32.xlu0 %v1793
    %v1795 = vpop.xlane.xlu0 %1794
    %v1796 = vmul.f32 %v1750, %v279
    %v1797 = vmul.f32 %v1753, %v279
    %v1798 = vmul.f32 %v1756, %v279
    %v1799 = vmul.f32 %v1759, %v279
    %v1800 = vmul.f32 %v1762, %v279
    %v1801 = vmul.f32 %v1765, %v279
    %v1802 = vmul.f32 %v1768, %v279
    %v1803 = vmul.f32 %v1771, %v279
    %v1804 = vmul.f32 %v1774, %v279
    %v1805 = vmul.f32 %v1777, %v279
    %v1806 = vmul.f32 %v1780, %v279
    %v1807 = vmul.f32 %v1783, %v279
    %v1808 = vmul.f32 %v1786, %v279
    %v1809 = vmul.f32 %v1789, %v279
    %v1810 = vmul.f32 %v1792, %v279
    %v1811 = vmul.f32 %v1795, %v279
    %v1812 = vmul.f32 %v1732, %v1732
    %v1813 = vmul.f32 %v1733, %v1733
    %v1814 = vmul.f32 %v1734, %v1734
    %v1815 = vmul.f32 %v1735, %v1735
    %v1816 = vmul.f32 %v1736, %v1736
    %v1817 = vmul.f32 %v1737, %v1737
    %v1818 = vmul.f32 %v1738, %v1738
    %v1819 = vmul.f32 %v1739, %v1739
    %v1820 = vmul.f32 %v1740, %v1740
    %v1821 = vmul.f32 %v1741, %v1741
    %v1822 = vmul.f32 %v1742, %v1742
    %v1823 = vmul.f32 %v1743, %v1743
    %v1824 = vmul.f32 %v1744, %v1744
    %v1825 = vmul.f32 %v1745, %v1745
    %v1826 = vmul.f32 %v1746, %v1746
    %v1827 = vmul.f32 %v1747, %v1747
    %v1828 = vsel %vm224, %v1812, 0.0
    %1829 = vadd.xlane.f32.xlu0 %v1828
    %v1830 = vpop.xlane.xlu0 %1829
    %v1831 = vsel %vm224, %v1813, 0.0
    %1832 = vadd.xlane.f32.xlu0 %v1831
    %v1833 = vpop.xlane.xlu0 %1832
    %v1834 = vsel %vm224, %v1814, 0.0
    %1835 = vadd.xlane.f32.xlu0 %v1834
    %v1836 = vpop.xlane.xlu0 %1835
    %v1837 = vsel %vm224, %v1815, 0.0
    %1838 = vadd.xlane.f32.xlu0 %v1837
    %v1839 = vpop.xlane.xlu0 %1838
    %v1840 = vsel %vm224, %v1816, 0.0
    %1841 = vadd.xlane.f32.xlu0 %v1840
    %v1842 = vpop.xlane.xlu0 %1841
    %v1843 = vsel %vm224, %v1817, 0.0
    %1844 = vadd.xlane.f32.xlu0 %v1843
    %v1845 = vpop.xlane.xlu0 %1844
    %v1846 = vsel %vm224, %v1818, 0.0
    %1847 = vadd.xlane.f32.xlu0 %v1846
    %v1848 = vpop.xlane.xlu0 %1847
    %v1849 = vsel %vm224, %v1819, 0.0
    %1850 = vadd.xlane.f32.xlu0 %v1849
    %v1851 = vpop.xlane.xlu0 %1850
    %v1852 = vsel %vm224, %v1820, 0.0
    %1853 = vadd.xlane.f32.xlu0 %v1852
    %v1854 = vpop.xlane.xlu0 %1853
    %v1855 = vsel %vm224, %v1821, 0.0
    %1856 = vadd.xlane.f32.xlu0 %v1855
    %v1857 = vpop.xlane.xlu0 %1856
    %v1858 = vsel %vm224, %v1822, 0.0
    %1859 = vadd.xlane.f32.xlu0 %v1858
    %v1860 = vpop.xlane.xlu0 %1859
    %v1861 = vsel %vm224, %v1823, 0.0
    %1862 = vadd.xlane.f32.xlu0 %v1861
    %v1863 = vpop.xlane.xlu0 %1862
    %v1864 = vsel %vm224, %v1824, 0.0
    %1865 = vadd.xlane.f32.xlu0 %v1864
    %v1866 = vpop.xlane.xlu0 %1865
    %v1867 = vsel %vm224, %v1825, 0.0
    %1868 = vadd.xlane.f32.xlu0 %v1867
    %v1869 = vpop.xlane.xlu0 %1868
    %v1870 = vsel %vm224, %v1826, 0.0
    %1871 = vadd.xlane.f32.xlu0 %v1870
    %v1872 = vpop.xlane.xlu0 %1871
    %v1873 = vsel %vm224, %v1827, 0.0
    %1874 = vadd.xlane.f32.xlu0 %v1873
    %v1875 = vpop.xlane.xlu0 %1874
    %v1876 = vmul.f32 %v1830, %v279
    %v1877 = vmul.f32 %v1833, %v279
    %v1878 = vmul.f32 %v1836, %v279
    %v1879 = vmul.f32 %v1839, %v279
    %v1880 = vmul.f32 %v1842, %v279
    %v1881 = vmul.f32 %v1845, %v279
    %v1882 = vmul.f32 %v1848, %v279
    %v1883 = vmul.f32 %v1851, %v279
    %v1884 = vmul.f32 %v1854, %v279
    %v1885 = vmul.f32 %v1857, %v279
    %v1886 = vmul.f32 %v1860, %v279
    %v1887 = vmul.f32 %v1863, %v279
    %v1888 = vmul.f32 %v1866, %v279
    %v1889 = vmul.f32 %v1869, %v279
    %v1890 = vmul.f32 %v1872, %v279
    %v1891 = vmul.f32 %v1875, %v279
    %v1892 = vmul.f32 %v1796, %v1796
    %v1893 = vmul.f32 %v1797, %v1797
    %v1894 = vmul.f32 %v1798, %v1798
    %v1895 = vmul.f32 %v1799, %v1799
    %v1896 = vmul.f32 %v1800, %v1800
    %v1897 = vmul.f32 %v1801, %v1801
    %v1898 = vmul.f32 %v1802, %v1802
    %v1899 = vmul.f32 %v1803, %v1803
    %v1900 = vmul.f32 %v1804, %v1804
    %v1901 = vmul.f32 %v1805, %v1805
    %v1902 = vmul.f32 %v1806, %v1806
    %v1903 = vmul.f32 %v1807, %v1807
    %v1904 = vmul.f32 %v1808, %v1808
    %v1905 = vmul.f32 %v1809, %v1809
    %v1906 = vmul.f32 %v1810, %v1810
    %v1907 = vmul.f32 %v1811, %v1811
    %v1908 = vsub.f32 %v1876, %v1892
    %v1909 = vsub.f32 %v1877, %v1893
    %v1910 = vsub.f32 %v1878, %v1894
    %v1911 = vsub.f32 %v1879, %v1895
    %v1912 = vsub.f32 %v1880, %v1896
    %v1913 = vsub.f32 %v1881, %v1897
    %v1914 = vsub.f32 %v1882, %v1898
    %v1915 = vsub.f32 %v1883, %v1899
    %v1916 = vsub.f32 %v1884, %v1900
    %v1917 = vsub.f32 %v1885, %v1901
    %v1918 = vsub.f32 %v1886, %v1902
    %v1919 = vsub.f32 %v1887, %v1903
    %v1920 = vsub.f32 %v1888, %v1904
    %v1921 = vsub.f32 %v1889, %v1905
    %v1922 = vsub.f32 %v1890, %v1906
    %v1923 = vsub.f32 %v1891, %v1907
    %v1924 = vsub.f32 %v1732, %v1796
    %v1925 = vsub.f32 %v1733, %v1797
    %v1926 = vsub.f32 %v1734, %v1798
    %v1927 = vsub.f32 %v1735, %v1799
    %v1928 = vsub.f32 %v1736, %v1800
    %v1929 = vsub.f32 %v1737, %v1801
    %v1930 = vsub.f32 %v1738, %v1802
    %v1931 = vsub.f32 %v1739, %v1803
    %v1932 = vsub.f32 %v1740, %v1804
    %v1933 = vsub.f32 %v1741, %v1805
    %v1934 = vsub.f32 %v1742, %v1806
    %v1935 = vsub.f32 %v1743, %v1807
    %v1936 = vsub.f32 %v1744, %v1808
    %v1937 = vsub.f32 %v1745, %v1809
    %v1938 = vsub.f32 %v1746, %v1810
    %v1939 = vsub.f32 %v1747, %v1811
    %v1940 = vadd.f32 %v1908, 1e-05
    %v1941 = vadd.f32 %v1909, 1e-05
    %v1942 = vadd.f32 %v1910, 1e-05
    %v1943 = vadd.f32 %v1911, 1e-05
    %v1944 = vadd.f32 %v1912, 1e-05
    %v1945 = vadd.f32 %v1913, 1e-05
    %v1946 = vadd.f32 %v1914, 1e-05
    %v1947 = vadd.f32 %v1915, 1e-05
    %v1948 = vadd.f32 %v1916, 1e-05
    %v1949 = vadd.f32 %v1917, 1e-05
    %v1950 = vadd.f32 %v1918, 1e-05
    %v1951 = vadd.f32 %v1919, 1e-05
    %v1952 = vadd.f32 %v1920, 1e-05
    %v1953 = vadd.f32 %v1921, 1e-05
    %v1954 = vadd.f32 %v1922, 1e-05
    %v1955 = vadd.f32 %v1923, 1e-05
    %v1956 = vrsqrt.pop %v1940
    %v1957 = vmul.f32 %v1956, %v1940
    %v1958 = vmul.f32 %v1957, %v1956
    %v1959 = vmul.f32 0.5, %v1958
    %v1960 = vsub.f32 1.5, %v1959
    %v1961 = vmul.f32 %v1956, %v1960
    %vm1962 = vweird.f32 %v1940
    %vm1963 = vweird.f32 %v1956
    %vm1964 = vmor %vm1962, %vm1963
    %v1965 = vsel %vm1964, %v1956, %v1961
    %v1966 = vrsqrt.pop %v1941
    %v1967 = vmul.f32 %v1966, %v1941
    %v1968 = vmul.f32 %v1967, %v1966
    %v1969 = vmul.f32 0.5, %v1968
    %v1970 = vsub.f32 1.5, %v1969
    %v1971 = vmul.f32 %v1966, %v1970
    %vm1972 = vweird.f32 %v1941
    %vm1973 = vweird.f32 %v1966
    %vm1974 = vmor %vm1972, %vm1973
    %v1975 = vsel %vm1974, %v1966, %v1971
    %v1976 = vrsqrt.pop %v1942
    %v1977 = vmul.f32 %v1976, %v1942
    %v1978 = vmul.f32 %v1977, %v1976
    %v1979 = vmul.f32 0.5, %v1978
    %v1980 = vsub.f32 1.5, %v1979
    %v1981 = vmul.f32 %v1976, %v1980
    %vm1982 = vweird.f32 %v1942
    %vm1983 = vweird.f32 %v1976
    %vm1984 = vmor %vm1982, %vm1983
    %v1985 = vsel %vm1984, %v1976, %v1981
    %v1986 = vrsqrt.pop %v1943
    %v1987 = vmul.f32 %v1986, %v1943
    %v1988 = vmul.f32 %v1987, %v1986
    %v1989 = vmul.f32 0.5, %v1988
    %v1990 = vsub.f32 1.5, %v1989
    %v1991 = vmul.f32 %v1986, %v1990
    %vm1992 = vweird.f32 %v1943
    %vm1993 = vweird.f32 %v1986
    %vm1994 = vmor %vm1992, %vm1993
    %v1995 = vsel %vm1994, %v1986, %v1991
    %v1996 = vrsqrt.pop %v1944
    %v1997 = vmul.f32 %v1996, %v1944
    %v1998 = vmul.f32 %v1997, %v1996
    %v1999 = vmul.f32 0.5, %v1998
    %v2000 = vsub.f32 1.5, %v1999
    %v2001 = vmul.f32 %v1996, %v2000
    %vm2002 = vweird.f32 %v1944
    %vm2003 = vweird.f32 %v1996
    %vm2004 = vmor %vm2002, %vm2003
    %v2005 = vsel %vm2004, %v1996, %v2001
    %v2006 = vrsqrt.pop %v1945
    %v2007 = vmul.f32 %v2006, %v1945
    %v2008 = vmul.f32 %v2007, %v2006
    %v2009 = vmul.f32 0.5, %v2008
    %v2010 = vsub.f32 1.5, %v2009
    %v2011 = vmul.f32 %v2006, %v2010
    %vm2012 = vweird.f32 %v1945
    %vm2013 = vweird.f32 %v2006
    %vm2014 = vmor %vm2012, %vm2013
    %v2015 = vsel %vm2014, %v2006, %v2011
    %v2016 = vrsqrt.pop %v1946
    %v2017 = vmul.f32 %v2016, %v1946
    %v2018 = vmul.f32 %v2017, %v2016
    %v2019 = vmul.f32 0.5, %v2018
    %v2020 = vsub.f32 1.5, %v2019
    %v2021 = vmul.f32 %v2016, %v2020
    %vm2022 = vweird.f32 %v1946
    %vm2023 = vweird.f32 %v2016
    %vm2024 = vmor %vm2022, %vm2023
    %v2025 = vsel %vm2024, %v2016, %v2021
    %v2026 = vrsqrt.pop %v1947
    %v2027 = vmul.f32 %v2026, %v1947
    %v2028 = vmul.f32 %v2027, %v2026
    %v2029 = vmul.f32 0.5, %v2028
    %v2030 = vsub.f32 1.5, %v2029
    %v2031 = vmul.f32 %v2026, %v2030
    %vm2032 = vweird.f32 %v1947
    %vm2033 = vweird.f32 %v2026
    %vm2034 = vmor %vm2032, %vm2033
    %v2035 = vsel %vm2034, %v2026, %v2031
    %v2036 = vrsqrt.pop %v1948
    %v2037 = vmul.f32 %v2036, %v1948
    %v2038 = vmul.f32 %v2037, %v2036
    %v2039 = vmul.f32 0.5, %v2038
    %v2040 = vsub.f32 1.5, %v2039
    %v2041 = vmul.f32 %v2036, %v2040
    %vm2042 = vweird.f32 %v1948
    %vm2043 = vweird.f32 %v2036
    %vm2044 = vmor %vm2042, %vm2043
    %v2045 = vsel %vm2044, %v2036, %v2041
    %v2046 = vrsqrt.pop %v1949
    %v2047 = vmul.f32 %v2046, %v1949
    %v2048 = vmul.f32 %v2047, %v2046
    %v2049 = vmul.f32 0.5, %v2048
    %v2050 = vsub.f32 1.5, %v2049
    %v2051 = vmul.f32 %v2046, %v2050
    %vm2052 = vweird.f32 %v1949
    %vm2053 = vweird.f32 %v2046
    %vm2054 = vmor %vm2052, %vm2053
    %v2055 = vsel %vm2054, %v2046, %v2051
    %v2056 = vrsqrt.pop %v1950
    %v2057 = vmul.f32 %v2056, %v1950
    %v2058 = vmul.f32 %v2057, %v2056
    %v2059 = vmul.f32 0.5, %v2058
    %v2060 = vsub.f32 1.5, %v2059
    %v2061 = vmul.f32 %v2056, %v2060
    %vm2062 = vweird.f32 %v1950
    %vm2063 = vweird.f32 %v2056
    %vm2064 = vmor %vm2062, %vm2063
    %v2065 = vsel %vm2064, %v2056, %v2061
    %v2066 = vrsqrt.pop %v1951
    %v2067 = vmul.f32 %v2066, %v1951
    %v2068 = vmul.f32 %v2067, %v2066
    %v2069 = vmul.f32 0.5, %v2068
    %v2070 = vsub.f32 1.5, %v2069
    %v2071 = vmul.f32 %v2066, %v2070
    %vm2072 = vweird.f32 %v1951
    %vm2073 = vweird.f32 %v2066
    %vm2074 = vmor %vm2072, %vm2073
    %v2075 = vsel %vm2074, %v2066, %v2071
    %v2076 = vrsqrt.pop %v1952
    %v2077 = vmul.f32 %v2076, %v1952
    %v2078 = vmul.f32 %v2077, %v2076
    %v2079 = vmul.f32 0.5, %v2078
    %v2080 = vsub.f32 1.5, %v2079
    %v2081 = vmul.f32 %v2076, %v2080
    %vm2082 = vweird.f32 %v1952
    %vm2083 = vweird.f32 %v2076
    %vm2084 = vmor %vm2082, %vm2083
    %v2085 = vsel %vm2084, %v2076, %v2081
    %v2086 = vrsqrt.pop %v1953
    %v2087 = vmul.f32 %v2086, %v1953
    %v2088 = vmul.f32 %v2087, %v2086
    %v2089 = vmul.f32 0.5, %v2088
    %v2090 = vsub.f32 1.5, %v2089
    %v2091 = vmul.f32 %v2086, %v2090
    %vm2092 = vweird.f32 %v1953
    %vm2093 = vweird.f32 %v2086
    %vm2094 = vmor %vm2092, %vm2093
    %v2095 = vsel %vm2094, %v2086, %v2091
    %v2096 = vrsqrt.pop %v1954
    %v2097 = vmul.f32 %v2096, %v1954
    %v2098 = vmul.f32 %v2097, %v2096
    %v2099 = vmul.f32 0.5, %v2098
    %v2100 = vsub.f32 1.5, %v2099
    %v2101 = vmul.f32 %v2096, %v2100
    %vm2102 = vweird.f32 %v1954
    %vm2103 = vweird.f32 %v2096
    %vm2104 = vmor %vm2102, %vm2103
    %v2105 = vsel %vm2104, %v2096, %v2101
    %v2106 = vrsqrt.pop %v1955
    %v2107 = vmul.f32 %v2106, %v1955
    %v2108 = vmul.f32 %v2107, %v2106
    %v2109 = vmul.f32 0.5, %v2108
    %v2110 = vsub.f32 1.5, %v2109
    %v2111 = vmul.f32 %v2106, %v2110
    %vm2112 = vweird.f32 %v1955
    %vm2113 = vweird.f32 %v2106
    %vm2114 = vmor %vm2112, %vm2113
    %v2115 = vsel %vm2114, %v2106, %v2111
    %v2116 = vmul.f32 %v1924, %v1965
    %v2117 = vmul.f32 %v1925, %v1975
    %v2118 = vmul.f32 %v1926, %v1985
    %v2119 = vmul.f32 %v1927, %v1995
    %v2120 = vmul.f32 %v1928, %v2005
    %v2121 = vmul.f32 %v1929, %v2015
    %v2122 = vmul.f32 %v1930, %v2025
    %v2123 = vmul.f32 %v1931, %v2035
    %v2124 = vmul.f32 %v1932, %v2045
    %v2125 = vmul.f32 %v1933, %v2055
    %v2126 = vmul.f32 %v1934, %v2065
    %v2127 = vmul.f32 %v1935, %v2075
    %v2128 = vmul.f32 %v1936, %v2085
    %v2129 = vmul.f32 %v1937, %v2095
    %v2130 = vmul.f32 %v1938, %v2105
    %v2131 = vmul.f32 %v1939, %v2115
    %v2133 = vperm.slane %v1730, 0
    %v2135 = vmul.f32 %v2116, %v2133
    %v2136 = vmul.f32 %v2117, %v2133
    %v2137 = vmul.f32 %v2118, %v2133
    %v2138 = vmul.f32 %v2119, %v2133
    %v2139 = vmul.f32 %v2120, %v2133
    %v2140 = vmul.f32 %v2121, %v2133
    %v2141 = vmul.f32 %v2122, %v2133
    %v2142 = vmul.f32 %v2123, %v2133
    %v2143 = vmul.f32 %v2124, %v2133
    %v2144 = vmul.f32 %v2125, %v2133
    %v2145 = vmul.f32 %v2126, %v2133
    %v2146 = vmul.f32 %v2127, %v2133
    %v2147 = vmul.f32 %v2128, %v2133
    %v2148 = vmul.f32 %v2129, %v2133
    %v2149 = vmul.f32 %v2130, %v2133
    %v2150 = vmul.f32 %v2131, %v2133
    %v2152 = vperm.slane %v1731, 0
    %v2154 = vadd.f32 %v2135, %v2152
    %v2155 = vadd.f32 %v2136, %v2152
    %v2156 = vadd.f32 %v2137, %v2152
    %v2157 = vadd.f32 %v2138, %v2152
    %v2158 = vadd.f32 %v2139, %v2152
    %v2159 = vadd.f32 %v2140, %v2152
    %v2160 = vadd.f32 %v2141, %v2152
    %v2161 = vadd.f32 %v2142, %v2152
    %v2162 = vadd.f32 %v2143, %v2152
    %v2163 = vadd.f32 %v2144, %v2152
    %v2164 = vadd.f32 %v2145, %v2152
    %v2165 = vadd.f32 %v2146, %v2152
    %v2166 = vadd.f32 %v2147, %v2152
    %v2167 = vadd.f32 %v2148, %v2152
    %v2168 = vadd.f32 %v2149, %v2152
    %v2169 = vadd.f32 %v2150, %v2152
    %v2170 = vpack.c.bf16 %v2155, %v2154
    %v2171 = vpack.c.bf16 %v2157, %v2156
    %v2172 = vpack.c.bf16 %v2159, %v2158
    %v2173 = vpack.c.bf16 %v2161, %v2160
    %v2174 = vpack.c.bf16 %v2163, %v2162
    %v2175 = vpack.c.bf16 %v2165, %v2164
    %v2176 = vpack.c.bf16 %v2167, %v2166
    %v2177 = vpack.c.bf16 %v2169, %v2168
    %v2178 = vld [vmem:[%s11] sm:$0xf]
    %v2179 = vld [vmem:[%s11 + $0x4] sm:$0xf]
    %v2180 = vld [vmem:[%s11 + $0x8] sm:$0xf]
    %v2181 = vld [vmem:[%s11 + $0xc] sm:$0xf]
    %v2182 = vld [vmem:[%s12] sm:$0x1]
    %v2184 = vperm.slane %v2182, 0
    %v2190 = vunpack.c.l.b16 %v2178
    %v2191 = vunpack.c.l.b16 %v2179
    %v2192 = vunpack.c.l.b16 %v2180
    %v2193 = vunpack.c.l.b16 %v2181
    %v2194 = vpack.c.b16 %v2191, %v2190
    %v2195 = vpack.c.b16 %v2193, %v2192
    %v2199 = vsel %vm224, %v2170, 0
    %v2202 = vsel %vm224, %v2171, 0
    %v2205 = vsel %vm224, %v2172, 0
    %v2208 = vsel %vm224, %v2173, 0
    %v2211 = vsel %vm224, %v2174, 0
    %v2214 = vsel %vm224, %v2175, 0
    %v2217 = vsel %vm224, %v2176, 0
    %v2220 = vsel %vm224, %v2177, 0
    %2222 = vmatpush.bf16.msra.mxu0 0
    %2223 = vmatpush.bf16.msra.mxu0 0
    %2224 = vmatpush.bf16.msra.mxu0 0
    %2225 = vmatpush.bf16.msra.mxu0 0
    %2226 = vmatpush.bf16.msra.mxu0 0
    %2227 = vmatpush.bf16.msra.mxu0 0
    %2228 = vmatpush.bf16.msra.mxu0 %v2195
    %2229 = vmatpush.bf16.msra.mxu0 %v2194
    %2230 = vmatmul.bf16.gmra.mxu0 %v2199
    %v2231 = vpop.f32.mrf.mxu0
    %v2232 = vadd.f32 %v2184, %v2231
    %v2233 = vpop.f32.mrf.mxu0
    %v2234 = vadd.f32 %v2184, %v2233
    %2235 = vmatmul.bf16.gmra.mxu0 %v2202
    %v2236 = vpop.f32.mrf.mxu0
    %v2237 = vadd.f32 %v2184, %v2236
    %v2238 = vpop.f32.mrf.mxu0
    %v2239 = vadd.f32 %v2184, %v2238
    %2240 = vmatmul.bf16.gmra.mxu0 %v2205
    %v2241 = vpop.f32.mrf.mxu0
    %v2242 = vadd.f32 %v2184, %v2241
    %v2243 = vpop.f32.mrf.mxu0
    %v2244 = vadd.f32 %v2184, %v2243
    %2245 = vmatmul.bf16.gmra.mxu0 %v2208
    %v2246 = vpop.f32.mrf.mxu0
    %v2247 = vadd.f32 %v2184, %v2246
    %v2248 = vpop.f32.mrf.mxu0
    %v2249 = vadd.f32 %v2184, %v2248
    %2250 = vmatmul.bf16.gmra.mxu0 %v2211
    %v2251 = vpop.f32.mrf.mxu0
    %v2252 = vadd.f32 %v2184, %v2251
    %v2253 = vpop.f32.mrf.mxu0
    %v2254 = vadd.f32 %v2184, %v2253
    %2255 = vmatmul.bf16.gmra.mxu0 %v2214
    %v2256 = vpop.f32.mrf.mxu0
    %v2257 = vadd.f32 %v2184, %v2256
    %v2258 = vpop.f32.mrf.mxu0
    %v2259 = vadd.f32 %v2184, %v2258
    %2260 = vmatmul.bf16.gmra.mxu0 %v2217
    %v2261 = vpop.f32.mrf.mxu0
    %v2262 = vadd.f32 %v2184, %v2261
    %v2263 = vpop.f32.mrf.mxu0
    %v2264 = vadd.f32 %v2184, %v2263
    %2265 = vmatmul.bf16.gmra.mxu0 %v2220
    %v2266 = vpop.f32.mrf.mxu0
    %v2267 = vadd.f32 %v2184, %v2266
    %v2268 = vpop.f32.mrf.mxu0
    %v2269 = vadd.f32 %v2184, %v2268
    %2270 = vdwg.mxu0
    %v2271 = vmul.f32 %v2232, 0.5
    %v2272 = vmul.f32 %v2234, 0.5
    %v2273 = vmul.f32 %v2237, 0.5
    %v2274 = vmul.f32 %v2239, 0.5
    %v2275 = vmul.f32 %v2242, 0.5
    %v2276 = vmul.f32 %v2244, 0.5
    %v2277 = vmul.f32 %v2247, 0.5
    %v2278 = vmul.f32 %v2249, 0.5
    %v2279 = vmul.f32 %v2252, 0.5
    %v2280 = vmul.f32 %v2254, 0.5
    %v2281 = vmul.f32 %v2257, 0.5
    %v2282 = vmul.f32 %v2259, 0.5
    %v2283 = vmul.f32 %v2262, 0.5
    %v2284 = vmul.f32 %v2264, 0.5
    %v2285 = vmul.f32 %v2267, 0.5
    %v2286 = vmul.f32 %v2269, 0.5
    %v2287 = vmul.f32 %v2232, 0.044715
    %v2288 = vmul.f32 %v2234, 0.044715
    %v2289 = vmul.f32 %v2237, 0.044715
    %v2290 = vmul.f32 %v2239, 0.044715
    %v2291 = vmul.f32 %v2242, 0.044715
    %v2292 = vmul.f32 %v2244, 0.044715
    %v2293 = vmul.f32 %v2247, 0.044715
    %v2294 = vmul.f32 %v2249, 0.044715
    %v2295 = vmul.f32 %v2252, 0.044715
    %v2296 = vmul.f32 %v2254, 0.044715
    %v2297 = vmul.f32 %v2257, 0.044715
    %v2298 = vmul.f32 %v2259, 0.044715
    %v2299 = vmul.f32 %v2262, 0.044715
    %v2300 = vmul.f32 %v2264, 0.044715
    %v2301 = vmul.f32 %v2267, 0.044715
    %v2302 = vmul.f32 %v2269, 0.044715
    %v2303 = vmul.f32 %v2287, %v2232
    %v2304 = vmul.f32 %v2288, %v2234
    %v2305 = vmul.f32 %v2289, %v2237
    %v2306 = vmul.f32 %v2290, %v2239
    %v2307 = vmul.f32 %v2291, %v2242
    %v2308 = vmul.f32 %v2292, %v2244
    %v2309 = vmul.f32 %v2293, %v2247
    %v2310 = vmul.f32 %v2294, %v2249
    %v2311 = vmul.f32 %v2295, %v2252
    %v2312 = vmul.f32 %v2296, %v2254
    %v2313 = vmul.f32 %v2297, %v2257
    %v2314 = vmul.f32 %v2298, %v2259
    %v2315 = vmul.f32 %v2299, %v2262
    %v2316 = vmul.f32 %v2300, %v2264
    %v2317 = vmul.f32 %v2301, %v2267
    %v2318 = vmul.f32 %v2302, %v2269
    %v2319 = vmul.f32 %v2303, %v2232
    %v2320 = vmul.f32 %v2304, %v2234
    %v2321 = vmul.f32 %v2305, %v2237
    %v2322 = vmul.f32 %v2306, %v2239
    %v2323 = vmul.f32 %v2307, %v2242
    %v2324 = vmul.f32 %v2308, %v2244
    %v2325 = vmul.f32 %v2309, %v2247
    %v2326 = vmul.f32 %v2310, %v2249
    %v2327 = vmul.f32 %v2311, %v2252
    %v2328 = vmul.f32 %v2312, %v2254
    %v2329 = vmul.f32 %v2313, %v2257
    %v2330 = vmul.f32 %v2314, %v2259
    %v2331 = vmul.f32 %v2315, %v2262
    %v2332 = vmul.f32 %v2316, %v2264
    %v2333 = vmul.f32 %v2317, %v2267
    %v2334 = vmul.f32 %v2318, %v2269
    %v2335 = vadd.f32 %v2232, %v2319
    %v2336 = vadd.f32 %v2234, %v2320
    %v2337 = vadd.f32 %v2237, %v2321
    %v2338 = vadd.f32 %v2239, %v2322
    %v2339 = vadd.f32 %v2242, %v2323
    %v2340 = vadd.f32 %v2244, %v2324
    %v2341 = vadd.f32 %v2247, %v2325
    %v2342 = vadd.f32 %v2249, %v2326
    %v2343 = vadd.f32 %v2252, %v2327
    %v2344 = vadd.f32 %v2254, %v2328
    %v2345 = vadd.f32 %v2257, %v2329
    %v2346 = vadd.f32 %v2259, %v2330
    %v2347 = vadd.f32 %v2262, %v2331
    %v2348 = vadd.f32 %v2264, %v2332
    %v2349 = vadd.f32 %v2267, %v2333
    %v2350 = vadd.f32 %v2269, %v2334
    %v2351 = vmul.f32 %v2335, 0.7978846
    %v2352 = vmul.f32 %v2336, 0.7978846
    %v2353 = vmul.f32 %v2337, 0.7978846
    %v2354 = vmul.f32 %v2338, 0.7978846
    %v2355 = vmul.f32 %v2339, 0.7978846
    %v2356 = vmul.f32 %v2340, 0.7978846
    %v2357 = vmul.f32 %v2341, 0.7978846
    %v2358 = vmul.f32 %v2342, 0.7978846
    %v2359 = vmul.f32 %v2343, 0.7978846
    %v2360 = vmul.f32 %v2344, 0.7978846
    %v2361 = vmul.f32 %v2345, 0.7978846
    %v2362 = vmul.f32 %v2346, 0.7978846
    %v2363 = vmul.f32 %v2347, 0.7978846
    %v2364 = vmul.f32 %v2348, 0.7978846
    %v2365 = vmul.f32 %v2349, 0.7978846
    %v2366 = vmul.f32 %v2350, 0.7978846
    %v2367 = vtanh.pop %v2351
    %v2368 = vtanh.pop %v2352
    %v2369 = vtanh.pop %v2353
    %v2370 = vtanh.pop %v2354
    %v2371 = vtanh.pop %v2355
    %v2372 = vtanh.pop %v2356
    %v2373 = vtanh.pop %v2357
    %v2374 = vtanh.pop %v2358
    %v2375 = vtanh.pop %v2359
    %v2376 = vtanh.pop %v2360
    %v2377 = vtanh.pop %v2361
    %v2378 = vtanh.pop %v2362
    %v2379 = vtanh.pop %v2363
    %v2380 = vtanh.pop %v2364
    %v2381 = vtanh.pop %v2365
    %v2382 = vtanh.pop %v2366
    %v2383 = vadd.f32 %v2367, 1.0
    %v2384 = vadd.f32 %v2368, 1.0
    %v2385 = vadd.f32 %v2369, 1.0
    %v2386 = vadd.f32 %v2370, 1.0
    %v2387 = vadd.f32 %v2371, 1.0
    %v2388 = vadd.f32 %v2372, 1.0
    %v2389 = vadd.f32 %v2373, 1.0
    %v2390 = vadd.f32 %v2374, 1.0
    %v2391 = vadd.f32 %v2375, 1.0
    %v2392 = vadd.f32 %v2376, 1.0
    %v2393 = vadd.f32 %v2377, 1.0
    %v2394 = vadd.f32 %v2378, 1.0
    %v2395 = vadd.f32 %v2379, 1.0
    %v2396 = vadd.f32 %v2380, 1.0
    %v2397 = vadd.f32 %v2381, 1.0
    %v2398 = vadd.f32 %v2382, 1.0
    %v2399 = vmul.f32 %v2271, %v2383
    %v2400 = vmul.f32 %v2272, %v2384
    %v2401 = vmul.f32 %v2273, %v2385
    %v2402 = vmul.f32 %v2274, %v2386
    %v2403 = vmul.f32 %v2275, %v2387
    %v2404 = vmul.f32 %v2276, %v2388
    %v2405 = vmul.f32 %v2277, %v2389
    %v2406 = vmul.f32 %v2278, %v2390
    %v2407 = vmul.f32 %v2279, %v2391
    %v2408 = vmul.f32 %v2280, %v2392
    %v2409 = vmul.f32 %v2281, %v2393
    %v2410 = vmul.f32 %v2282, %v2394
    %v2411 = vmul.f32 %v2283, %v2395
    %v2412 = vmul.f32 %v2284, %v2396
    %v2413 = vmul.f32 %v2285, %v2397
    %v2414 = vmul.f32 %v2286, %v2398
    %v2415 = vpack.c.bf16 %v2400, %v2399
    %v2416 = vpack.c.bf16 %v2402, %v2401
    %v2417 = vpack.c.bf16 %v2404, %v2403
    %v2418 = vpack.c.bf16 %v2406, %v2405
    %v2419 = vpack.c.bf16 %v2408, %v2407
    %v2420 = vpack.c.bf16 %v2410, %v2409
    %v2421 = vpack.c.bf16 %v2412, %v2411
    %v2422 = vpack.c.bf16 %v2414, %v2413
    %v2423 = vld [vmem:[%s13] sm:$0xf]
    %v2424 = vld [vmem:[%s13 + $0x4] sm:$0xf]
    %v2425 = vld [vmem:[%s14] sm:$0x1]
    %v2427 = vperm.slane %v2425, 0
    %v2431 = vunpack.c.l.b16 %v2423
    %v2432 = vunpack.c.l.b16 %v2424
    %v2433 = vpack.c.b16 %v2432, %v2431
    %v2436 = vsel %vm858, %v2415, 0
    %v2439 = vsel %vm858, %v2416, 0
    %v2442 = vsel %vm858, %v2417, 0
    %v2445 = vsel %vm858, %v2418, 0
    %v2448 = vsel %vm858, %v2419, 0
    %v2451 = vsel %vm858, %v2420, 0
    %v2454 = vsel %vm858, %v2421, 0
    %v2457 = vsel %vm858, %v2422, 0
    %2459 = vmatpush.bf16.msra.mxu0 0
    %2460 = vmatpush.bf16.msra.mxu0 0
    %2461 = vmatpush.bf16.msra.mxu0 0
    %2462 = vmatpush.bf16.msra.mxu0 0
    %2463 = vmatpush.bf16.msra.mxu0 0
    %2464 = vmatpush.bf16.msra.mxu0 0
    %2465 = vmatpush.bf16.msra.mxu0 0
    %2466 = vmatpush.bf16.msra.mxu0 %v2433
    %2467 = vmatmul.bf16.gmra.mxu0 %v2436
    %v2468 = vpop.f32.mrf.mxu0
    %v2469 = vadd.f32 %v2427, %v2468
    %v2470 = vpop.f32.mrf.mxu0
    %v2471 = vadd.f32 %v2427, %v2470
    %2472 = vmatmul.bf16.gmra.mxu0 %v2439
    %v2473 = vpop.f32.mrf.mxu0
    %v2474 = vadd.f32 %v2427, %v2473
    %v2475 = vpop.f32.mrf.mxu0
    %v2476 = vadd.f32 %v2427, %v2475
    %2477 = vmatmul.bf16.gmra.mxu0 %v2442
    %v2478 = vpop.f32.mrf.mxu0
    %v2479 = vadd.f32 %v2427, %v2478
    %v2480 = vpop.f32.mrf.mxu0
    %v2481 = vadd.f32 %v2427, %v2480
    %2482 = vmatmul.bf16.gmra.mxu0 %v2445
    %v2483 = vpop.f32.mrf.mxu0
    %v2484 = vadd.f32 %v2427, %v2483
    %v2485 = vpop.f32.mrf.mxu0
    %v2486 = vadd.f32 %v2427, %v2485
    %2487 = vmatmul.bf16.gmra.mxu0 %v2448
    %v2488 = vpop.f32.mrf.mxu0
    %v2489 = vadd.f32 %v2427, %v2488
    %v2490 = vpop.f32.mrf.mxu0
    %v2491 = vadd.f32 %v2427, %v2490
    %2492 = vmatmul.bf16.gmra.mxu0 %v2451
    %v2493 = vpop.f32.mrf.mxu0
    %v2494 = vadd.f32 %v2427, %v2493
    %v2495 = vpop.f32.mrf.mxu0
    %v2496 = vadd.f32 %v2427, %v2495
    %2497 = vmatmul.bf16.gmra.mxu0 %v2454
    %v2498 = vpop.f32.mrf.mxu0
    %v2499 = vadd.f32 %v2427, %v2498
    %v2500 = vpop.f32.mrf.mxu0
    %v2501 = vadd.f32 %v2427, %v2500
    %2502 = vmatmul.bf16.gmra.mxu0 %v2457
    %v2503 = vpop.f32.mrf.mxu0
    %v2504 = vadd.f32 %v2427, %v2503
    %v2505 = vpop.f32.mrf.mxu0
    %v2506 = vadd.f32 %v2427, %v2505
    %2507 = vdwg.mxu0
    %v2508 = vadd.f32 %v183, %v2469
    %v2509 = vadd.f32 %v185, %v2471
    %v2510 = vadd.f32 %v188, %v2474
    %v2511 = vadd.f32 %v190, %v2476
    %v2512 = vadd.f32 %v193, %v2479
    %v2513 = vadd.f32 %v195, %v2481
    %v2514 = vadd.f32 %v198, %v2484
    %v2515 = vadd.f32 %v200, %v2486
    %v2516 = vadd.f32 %v203, %v2489
    %v2517 = vadd.f32 %v205, %v2491
    %v2518 = vadd.f32 %v208, %v2494
    %v2519 = vadd.f32 %v210, %v2496
    %v2520 = vadd.f32 %v213, %v2499
    %v2521 = vadd.f32 %v215, %v2501
    %v2522 = vadd.f32 %v218, %v2504
    %v2523 = vadd.f32 %v220, %v2506
    %s2524 = scalar_lea.vmem %s3, 1
    %v2525 = vld [vmem:[%s2524] sm:$0x1]
    %s2526 = scalar_lea.vmem %s4, 1
    %v2527 = vld [vmem:[%s2526] sm:$0x1]
    %v2528 = vsel %vm224, %v2508, 0.0
    %2529 = vadd.xlane.f32.xlu0 %v2528
    %v2530 = vpop.xlane.xlu0 %2529
    %v2531 = vsel %vm224, %v2509, 0.0
    %2532 = vadd.xlane.f32.xlu0 %v2531
    %v2533 = vpop.xlane.xlu0 %2532
    %v2534 = vsel %vm224, %v2510, 0.0
    %2535 = vadd.xlane.f32.xlu0 %v2534
    %v2536 = vpop.xlane.xlu0 %2535
    %v2537 = vsel %vm224, %v2511, 0.0
    %2538 = vadd.xlane.f32.xlu0 %v2537
    %v2539 = vpop.xlane.xlu0 %2538
    %v2540 = vsel %vm224, %v2512, 0.0
    %2541 = vadd.xlane.f32.xlu0 %v2540
    %v2542 = vpop.xlane.xlu0 %2541
    %v2543 = vsel %vm224, %v2513, 0.0
    %2544 = vadd.xlane.f32.xlu0 %v2543
    %v2545 = vpop.xlane.xlu0 %2544
    %v2546 = vsel %vm224, %v2514, 0.0
    %2547 = vadd.xlane.f32.xlu0 %v2546
    %v2548 = vpop.xlane.xlu0 %2547
    %v2549 = vsel %vm224, %v2515, 0.0
    %2550 = vadd.xlane.f32.xlu0 %v2549
    %v2551 = vpop.xlane.xlu0 %2550
    %v2552 = vsel %vm224, %v2516, 0.0
    %2553 = vadd.xlane.f32.xlu0 %v2552
    %v2554 = vpop.xlane.xlu0 %2553
    %v2555 = vsel %vm224, %v2517, 0.0
    %2556 = vadd.xlane.f32.xlu0 %v2555
    %v2557 = vpop.xlane.xlu0 %2556
    %v2558 = vsel %vm224, %v2518, 0.0
    %2559 = vadd.xlane.f32.xlu0 %v2558
    %v2560 = vpop.xlane.xlu0 %2559
    %v2561 = vsel %vm224, %v2519, 0.0
    %2562 = vadd.xlane.f32.xlu0 %v2561
    %v2563 = vpop.xlane.xlu0 %2562
    %v2564 = vsel %vm224, %v2520, 0.0
    %2565 = vadd.xlane.f32.xlu0 %v2564
    %v2566 = vpop.xlane.xlu0 %2565
    %v2567 = vsel %vm224, %v2521, 0.0
    %2568 = vadd.xlane.f32.xlu0 %v2567
    %v2569 = vpop.xlane.xlu0 %2568
    %v2570 = vsel %vm224, %v2522, 0.0
    %2571 = vadd.xlane.f32.xlu0 %v2570
    %v2572 = vpop.xlane.xlu0 %2571
    %v2573 = vsel %vm224, %v2523, 0.0
    %2574 = vadd.xlane.f32.xlu0 %v2573
    %v2575 = vpop.xlane.xlu0 %2574
    %v2576 = vmul.f32 %v2530, %v279
    %v2577 = vmul.f32 %v2533, %v279
    %v2578 = vmul.f32 %v2536, %v279
    %v2579 = vmul.f32 %v2539, %v279
    %v2580 = vmul.f32 %v2542, %v279
    %v2581 = vmul.f32 %v2545, %v279
    %v2582 = vmul.f32 %v2548, %v279
    %v2583 = vmul.f32 %v2551, %v279
    %v2584 = vmul.f32 %v2554, %v279
    %v2585 = vmul.f32 %v2557, %v279
    %v2586 = vmul.f32 %v2560, %v279
    %v2587 = vmul.f32 %v2563, %v279
    %v2588 = vmul.f32 %v2566, %v279
    %v2589 = vmul.f32 %v2569, %v279
    %v2590 = vmul.f32 %v2572, %v279
    %v2591 = vmul.f32 %v2575, %v279
    %v2592 = vmul.f32 %v2508, %v2508
    %v2593 = vmul.f32 %v2509, %v2509
    %v2594 = vmul.f32 %v2510, %v2510
    %v2595 = vmul.f32 %v2511, %v2511
    %v2596 = vmul.f32 %v2512, %v2512
    %v2597 = vmul.f32 %v2513, %v2513
    %v2598 = vmul.f32 %v2514, %v2514
    %v2599 = vmul.f32 %v2515, %v2515
    %v2600 = vmul.f32 %v2516, %v2516
    %v2601 = vmul.f32 %v2517, %v2517
    %v2602 = vmul.f32 %v2518, %v2518
    %v2603 = vmul.f32 %v2519, %v2519
    %v2604 = vmul.f32 %v2520, %v2520
    %v2605 = vmul.f32 %v2521, %v2521
    %v2606 = vmul.f32 %v2522, %v2522
    %v2607 = vmul.f32 %v2523, %v2523
    %v2608 = vsel %vm224, %v2592, 0.0
    %2609 = vadd.xlane.f32.xlu0 %v2608
    %v2610 = vpop.xlane.xlu0 %2609
    %v2611 = vsel %vm224, %v2593, 0.0
    %2612 = vadd.xlane.f32.xlu0 %v2611
    %v2613 = vpop.xlane.xlu0 %2612
    %v2614 = vsel %vm224, %v2594, 0.0
    %2615 = vadd.xlane.f32.xlu0 %v2614
    %v2616 = vpop.xlane.xlu0 %2615
    %v2617 = vsel %vm224, %v2595, 0.0
    %2618 = vadd.xlane.f32.xlu0 %v2617
    %v2619 = vpop.xlane.xlu0 %2618
    %v2620 = vsel %vm224, %v2596, 0.0
    %2621 = vadd.xlane.f32.xlu0 %v2620
    %v2622 = vpop.xlane.xlu0 %2621
    %v2623 = vsel %vm224, %v2597, 0.0
    %2624 = vadd.xlane.f32.xlu0 %v2623
    %v2625 = vpop.xlane.xlu0 %2624
    %v2626 = vsel %vm224, %v2598, 0.0
    %2627 = vadd.xlane.f32.xlu0 %v2626
    %v2628 = vpop.xlane.xlu0 %2627
    %v2629 = vsel %vm224, %v2599, 0.0
    %2630 = vadd.xlane.f32.xlu0 %v2629
    %v2631 = vpop.xlane.xlu0 %2630
    %v2632 = vsel %vm224, %v2600, 0.0
    %2633 = vadd.xlane.f32.xlu0 %v2632
    %v2634 = vpop.xlane.xlu0 %2633
    %v2635 = vsel %vm224, %v2601, 0.0
    %2636 = vadd.xlane.f32.xlu0 %v2635
    %v2637 = vpop.xlane.xlu0 %2636
    %v2638 = vsel %vm224, %v2602, 0.0
    %2639 = vadd.xlane.f32.xlu0 %v2638
    %v2640 = vpop.xlane.xlu0 %2639
    %v2641 = vsel %vm224, %v2603, 0.0
    %2642 = vadd.xlane.f32.xlu0 %v2641
    %v2643 = vpop.xlane.xlu0 %2642
    %v2644 = vsel %vm224, %v2604, 0.0
    %2645 = vadd.xlane.f32.xlu0 %v2644
    %v2646 = vpop.xlane.xlu0 %2645
    %v2647 = vsel %vm224, %v2605, 0.0
    %2648 = vadd.xlane.f32.xlu0 %v2647
    %v2649 = vpop.xlane.xlu0 %2648
    %v2650 = vsel %vm224, %v2606, 0.0
    %2651 = vadd.xlane.f32.xlu0 %v2650
    %v2652 = vpop.xlane.xlu0 %2651
    %v2653 = vsel %vm224, %v2607, 0.0
    %2654 = vadd.xlane.f32.xlu0 %v2653
    %v2655 = vpop.xlane.xlu0 %2654
    %v2656 = vmul.f32 %v2610, %v279
    %v2657 = vmul.f32 %v2613, %v279
    %v2658 = vmul.f32 %v2616, %v279
    %v2659 = vmul.f32 %v2619, %v279
    %v2660 = vmul.f32 %v2622, %v279
    %v2661 = vmul.f32 %v2625, %v279
    %v2662 = vmul.f32 %v2628, %v279
    %v2663 = vmul.f32 %v2631, %v279
    %v2664 = vmul.f32 %v2634, %v279
    %v2665 = vmul.f32 %v2637, %v279
    %v2666 = vmul.f32 %v2640, %v279
    %v2667 = vmul.f32 %v2643, %v279
    %v2668 = vmul.f32 %v2646, %v279
    %v2669 = vmul.f32 %v2649, %v279
    %v2670 = vmul.f32 %v2652, %v279
    %v2671 = vmul.f32 %v2655, %v279
    %v2672 = vmul.f32 %v2576, %v2576
    %v2673 = vmul.f32 %v2577, %v2577
    %v2674 = vmul.f32 %v2578, %v2578
    %v2675 = vmul.f32 %v2579, %v2579
    %v2676 = vmul.f32 %v2580, %v2580
    %v2677 = vmul.f32 %v2581, %v2581
    %v2678 = vmul.f32 %v2582, %v2582
    %v2679 = vmul.f32 %v2583, %v2583
    %v2680 = vmul.f32 %v2584, %v2584
    %v2681 = vmul.f32 %v2585, %v2585
    %v2682 = vmul.f32 %v2586, %v2586
    %v2683 = vmul.f32 %v2587, %v2587
    %v2684 = vmul.f32 %v2588, %v2588
    %v2685 = vmul.f32 %v2589, %v2589
    %v2686 = vmul.f32 %v2590, %v2590
    %v2687 = vmul.f32 %v2591, %v2591
    %v2688 = vsub.f32 %v2656, %v2672
    %v2689 = vsub.f32 %v2657, %v2673
    %v2690 = vsub.f32 %v2658, %v2674
    %v2691 = vsub.f32 %v2659, %v2675
    %v2692 = vsub.f32 %v2660, %v2676
    %v2693 = vsub.f32 %v2661, %v2677
    %v2694 = vsub.f32 %v2662, %v2678
    %v2695 = vsub.f32 %v2663, %v2679
    %v2696 = vsub.f32 %v2664, %v2680
    %v2697 = vsub.f32 %v2665, %v2681
    %v2698 = vsub.f32 %v2666, %v2682
    %v2699 = vsub.f32 %v2667, %v2683
    %v2700 = vsub.f32 %v2668, %v2684
    %v2701 = vsub.f32 %v2669, %v2685
    %v2702 = vsub.f32 %v2670, %v2686
    %v2703 = vsub.f32 %v2671, %v2687
    %v2704 = vsub.f32 %v2508, %v2576
    %v2705 = vsub.f32 %v2509, %v2577
    %v2706 = vsub.f32 %v2510, %v2578
    %v2707 = vsub.f32 %v2511, %v2579
    %v2708 = vsub.f32 %v2512, %v2580
    %v2709 = vsub.f32 %v2513, %v2581
    %v2710 = vsub.f32 %v2514, %v2582
    %v2711 = vsub.f32 %v2515, %v2583
    %v2712 = vsub.f32 %v2516, %v2584
    %v2713 = vsub.f32 %v2517, %v2585
    %v2714 = vsub.f32 %v2518, %v2586
    %v2715 = vsub.f32 %v2519, %v2587
    %v2716 = vsub.f32 %v2520, %v2588
    %v2717 = vsub.f32 %v2521, %v2589
    %v2718 = vsub.f32 %v2522, %v2590
    %v2719 = vsub.f32 %v2523, %v2591
    %v2720 = vadd.f32 %v2688, 1e-05
    %v2721 = vadd.f32 %v2689, 1e-05
    %v2722 = vadd.f32 %v2690, 1e-05
    %v2723 = vadd.f32 %v2691, 1e-05
    %v2724 = vadd.f32 %v2692, 1e-05
    %v2725 = vadd.f32 %v2693, 1e-05
    %v2726 = vadd.f32 %v2694, 1e-05
    %v2727 = vadd.f32 %v2695, 1e-05
    %v2728 = vadd.f32 %v2696, 1e-05
    %v2729 = vadd.f32 %v2697, 1e-05
    %v2730 = vadd.f32 %v2698, 1e-05
    %v2731 = vadd.f32 %v2699, 1e-05
    %v2732 = vadd.f32 %v2700, 1e-05
    %v2733 = vadd.f32 %v2701, 1e-05
    %v2734 = vadd.f32 %v2702, 1e-05
    %v2735 = vadd.f32 %v2703, 1e-05
    %v2736 = vrsqrt.pop %v2720
    %v2737 = vmul.f32 %v2736, %v2720
    %v2738 = vmul.f32 %v2737, %v2736
    %v2739 = vmul.f32 0.5, %v2738
    %v2740 = vsub.f32 1.5, %v2739
    %v2741 = vmul.f32 %v2736, %v2740
    %vm2742 = vweird.f32 %v2720
    %vm2743 = vweird.f32 %v2736
    %vm2744 = vmor %vm2742, %vm2743
    %v2745 = vsel %vm2744, %v2736, %v2741
    %v2746 = vrsqrt.pop %v2721
    %v2747 = vmul.f32 %v2746, %v2721
    %v2748 = vmul.f32 %v2747, %v2746
    %v2749 = vmul.f32 0.5, %v2748
    %v2750 = vsub.f32 1.5, %v2749
    %v2751 = vmul.f32 %v2746, %v2750
    %vm2752 = vweird.f32 %v2721
    %vm2753 = vweird.f32 %v2746
    %vm2754 = vmor %vm2752, %vm2753
    %v2755 = vsel %vm2754, %v2746, %v2751
    %v2756 = vrsqrt.pop %v2722
    %v2757 = vmul.f32 %v2756, %v2722
    %v2758 = vmul.f32 %v2757, %v2756
    %v2759 = vmul.f32 0.5, %v2758
    %v2760 = vsub.f32 1.5, %v2759
    %v2761 = vmul.f32 %v2756, %v2760
    %vm2762 = vweird.f32 %v2722
    %vm2763 = vweird.f32 %v2756
    %vm2764 = vmor %vm2762, %vm2763
    %v2765 = vsel %vm2764, %v2756, %v2761
    %v2766 = vrsqrt.pop %v2723
    %v2767 = vmul.f32 %v2766, %v2723
    %v2768 = vmul.f32 %v2767, %v2766
    %v2769 = vmul.f32 0.5, %v2768
    %v2770 = vsub.f32 1.5, %v2769
    %v2771 = vmul.f32 %v2766, %v2770
    %vm2772 = vweird.f32 %v2723
    %vm2773 = vweird.f32 %v2766
    %vm2774 = vmor %vm2772, %vm2773
    %v2775 = vsel %vm2774, %v2766, %v2771
    %v2776 = vrsqrt.pop %v2724
    %v2777 = vmul.f32 %v2776, %v2724
    %v2778 = vmul.f32 %v2777, %v2776
    %v2779 = vmul.f32 0.5, %v2778
    %v2780 = vsub.f32 1.5, %v2779
    %v2781 = vmul.f32 %v2776, %v2780
    %vm2782 = vweird.f32 %v2724
    %vm2783 = vweird.f32 %v2776
    %vm2784 = vmor %vm2782, %vm2783
    %v2785 = vsel %vm2784, %v2776, %v2781
    %v2786 = vrsqrt.pop %v2725
    %v2787 = vmul.f32 %v2786, %v2725
    %v2788 = vmul.f32 %v2787, %v2786
    %v2789 = vmul.f32 0.5, %v2788
    %v2790 = vsub.f32 1.5, %v2789
    %v2791 = vmul.f32 %v2786, %v2790
    %vm2792 = vweird.f32 %v2725
    %vm2793 = vweird.f32 %v2786
    %vm2794 = vmor %vm2792, %vm2793
    %v2795 = vsel %vm2794, %v2786, %v2791
    %v2796 = vrsqrt.pop %v2726
    %v2797 = vmul.f32 %v2796, %v2726
    %v2798 = vmul.f32 %v2797, %v2796
    %v2799 = vmul.f32 0.5, %v2798
    %v2800 = vsub.f32 1.5, %v2799
    %v2801 = vmul.f32 %v2796, %v2800
    %vm2802 = vweird.f32 %v2726
    %vm2803 = vweird.f32 %v2796
    %vm2804 = vmor %vm2802, %vm2803
    %v2805 = vsel %vm2804, %v2796, %v2801
    %v2806 = vrsqrt.pop %v2727
    %v2807 = vmul.f32 %v2806, %v2727
    %v2808 = vmul.f32 %v2807, %v2806
    %v2809 = vmul.f32 0.5, %v2808
    %v2810 = vsub.f32 1.5, %v2809
    %v2811 = vmul.f32 %v2806, %v2810
    %vm2812 = vweird.f32 %v2727
    %vm2813 = vweird.f32 %v2806
    %vm2814 = vmor %vm2812, %vm2813
    %v2815 = vsel %vm2814, %v2806, %v2811
    %v2816 = vrsqrt.pop %v2728
    %v2817 = vmul.f32 %v2816, %v2728
    %v2818 = vmul.f32 %v2817, %v2816
    %v2819 = vmul.f32 0.5, %v2818
    %v2820 = vsub.f32 1.5, %v2819
    %v2821 = vmul.f32 %v2816, %v2820
    %vm2822 = vweird.f32 %v2728
    %vm2823 = vweird.f32 %v2816
    %vm2824 = vmor %vm2822, %vm2823
    %v2825 = vsel %vm2824, %v2816, %v2821
    %v2826 = vrsqrt.pop %v2729
    %v2827 = vmul.f32 %v2826, %v2729
    %v2828 = vmul.f32 %v2827, %v2826
    %v2829 = vmul.f32 0.5, %v2828
    %v2830 = vsub.f32 1.5, %v2829
    %v2831 = vmul.f32 %v2826, %v2830
    %vm2832 = vweird.f32 %v2729
    %vm2833 = vweird.f32 %v2826
    %vm2834 = vmor %vm2832, %vm2833
    %v2835 = vsel %vm2834, %v2826, %v2831
    %v2836 = vrsqrt.pop %v2730
    %v2837 = vmul.f32 %v2836, %v2730
    %v2838 = vmul.f32 %v2837, %v2836
    %v2839 = vmul.f32 0.5, %v2838
    %v2840 = vsub.f32 1.5, %v2839
    %v2841 = vmul.f32 %v2836, %v2840
    %vm2842 = vweird.f32 %v2730
    %vm2843 = vweird.f32 %v2836
    %vm2844 = vmor %vm2842, %vm2843
    %v2845 = vsel %vm2844, %v2836, %v2841
    %v2846 = vrsqrt.pop %v2731
    %v2847 = vmul.f32 %v2846, %v2731
    %v2848 = vmul.f32 %v2847, %v2846
    %v2849 = vmul.f32 0.5, %v2848
    %v2850 = vsub.f32 1.5, %v2849
    %v2851 = vmul.f32 %v2846, %v2850
    %vm2852 = vweird.f32 %v2731
    %vm2853 = vweird.f32 %v2846
    %vm2854 = vmor %vm2852, %vm2853
    %v2855 = vsel %vm2854, %v2846, %v2851
    %v2856 = vrsqrt.pop %v2732
    %v2857 = vmul.f32 %v2856, %v2732
    %v2858 = vmul.f32 %v2857, %v2856
    %v2859 = vmul.f32 0.5, %v2858
    %v2860 = vsub.f32 1.5, %v2859
    %v2861 = vmul.f32 %v2856, %v2860
    %vm2862 = vweird.f32 %v2732
    %vm2863 = vweird.f32 %v2856
    %vm2864 = vmor %vm2862, %vm2863
    %v2865 = vsel %vm2864, %v2856, %v2861
    %v2866 = vrsqrt.pop %v2733
    %v2867 = vmul.f32 %v2866, %v2733
    %v2868 = vmul.f32 %v2867, %v2866
    %v2869 = vmul.f32 0.5, %v2868
    %v2870 = vsub.f32 1.5, %v2869
    %v2871 = vmul.f32 %v2866, %v2870
    %vm2872 = vweird.f32 %v2733
    %vm2873 = vweird.f32 %v2866
    %vm2874 = vmor %vm2872, %vm2873
    %v2875 = vsel %vm2874, %v2866, %v2871
    %v2876 = vrsqrt.pop %v2734
    %v2877 = vmul.f32 %v2876, %v2734
    %v2878 = vmul.f32 %v2877, %v2876
    %v2879 = vmul.f32 0.5, %v2878
    %v2880 = vsub.f32 1.5, %v2879
    %v2881 = vmul.f32 %v2876, %v2880
    %vm2882 = vweird.f32 %v2734
    %vm2883 = vweird.f32 %v2876
    %vm2884 = vmor %vm2882, %vm2883
    %v2885 = vsel %vm2884, %v2876, %v2881
    %v2886 = vrsqrt.pop %v2735
    %v2887 = vmul.f32 %v2886, %v2735
    %v2888 = vmul.f32 %v2887, %v2886
    %v2889 = vmul.f32 0.5, %v2888
    %v2890 = vsub.f32 1.5, %v2889
    %v2891 = vmul.f32 %v2886, %v2890
    %vm2892 = vweird.f32 %v2735
    %vm2893 = vweird.f32 %v2886
    %vm2894 = vmor %vm2892, %vm2893
    %v2895 = vsel %vm2894, %v2886, %v2891
    %v2896 = vmul.f32 %v2704, %v2745
    %v2897 = vmul.f32 %v2705, %v2755
    %v2898 = vmul.f32 %v2706, %v2765
    %v2899 = vmul.f32 %v2707, %v2775
    %v2900 = vmul.f32 %v2708, %v2785
    %v2901 = vmul.f32 %v2709, %v2795
    %v2902 = vmul.f32 %v2710, %v2805
    %v2903 = vmul.f32 %v2711, %v2815
    %v2904 = vmul.f32 %v2712, %v2825
    %v2905 = vmul.f32 %v2713, %v2835
    %v2906 = vmul.f32 %v2714, %v2845
    %v2907 = vmul.f32 %v2715, %v2855
    %v2908 = vmul.f32 %v2716, %v2865
    %v2909 = vmul.f32 %v2717, %v2875
    %v2910 = vmul.f32 %v2718, %v2885
    %v2911 = vmul.f32 %v2719, %v2895
    %v2913 = vperm.slane %v2525, 0
    %v2915 = vmul.f32 %v2896, %v2913
    %v2916 = vmul.f32 %v2897, %v2913
    %v2917 = vmul.f32 %v2898, %v2913
    %v2918 = vmul.f32 %v2899, %v2913
    %v2919 = vmul.f32 %v2900, %v2913
    %v2920 = vmul.f32 %v2901, %v2913
    %v2921 = vmul.f32 %v2902, %v2913
    %v2922 = vmul.f32 %v2903, %v2913
    %v2923 = vmul.f32 %v2904, %v2913
    %v2924 = vmul.f32 %v2905, %v2913
    %v2925 = vmul.f32 %v2906, %v2913
    %v2926 = vmul.f32 %v2907, %v2913
    %v2927 = vmul.f32 %v2908, %v2913
    %v2928 = vmul.f32 %v2909, %v2913
    %v2929 = vmul.f32 %v2910, %v2913
    %v2930 = vmul.f32 %v2911, %v2913
    %v2932 = vperm.slane %v2527, 0
    %v2934 = vadd.f32 %v2915, %v2932
    %v2935 = vadd.f32 %v2916, %v2932
    %v2936 = vadd.f32 %v2917, %v2932
    %v2937 = vadd.f32 %v2918, %v2932
    %v2938 = vadd.f32 %v2919, %v2932
    %v2939 = vadd.f32 %v2920, %v2932
    %v2940 = vadd.f32 %v2921, %v2932
    %v2941 = vadd.f32 %v2922, %v2932
    %v2942 = vadd.f32 %v2923, %v2932
    %v2943 = vadd.f32 %v2924, %v2932
    %v2944 = vadd.f32 %v2925, %v2932
    %v2945 = vadd.f32 %v2926, %v2932
    %v2946 = vadd.f32 %v2927, %v2932
    %v2947 = vadd.f32 %v2928, %v2932
    %v2948 = vadd.f32 %v2929, %v2932
    %v2949 = vadd.f32 %v2930, %v2932
    %v2950 = vpack.c.bf16 %v2934, %v2934
    %v2951 = vpack.c.bf16 %v2935, %v2935
    %v2952 = vpack.c.bf16 %v2936, %v2936
    %v2953 = vpack.c.bf16 %v2937, %v2937
    %v2954 = vpack.c.bf16 %v2938, %v2938
    %v2955 = vpack.c.bf16 %v2939, %v2939
    %v2956 = vpack.c.bf16 %v2940, %v2940
    %v2957 = vpack.c.bf16 %v2941, %v2941
    %v2958 = vpack.c.bf16 %v2942, %v2942
    %v2959 = vpack.c.bf16 %v2943, %v2943
    %v2960 = vpack.c.bf16 %v2944, %v2944
    %v2961 = vpack.c.bf16 %v2945, %v2945
    %v2962 = vpack.c.bf16 %v2946, %v2946
    %v2963 = vpack.c.bf16 %v2947, %v2947
    %v2964 = vpack.c.bf16 %v2948, %v2948
    %v2965 = vpack.c.bf16 %v2949, %v2949
    %v2982 = vunpack.c.l.b16 %v2950
    %v2983 = vunpack.c.l.b16 %v2951
    %v2984 = vunpack.c.l.b16 %v2952
    %v2985 = vunpack.c.l.b16 %v2953
    %v2986 = vunpack.c.l.b16 %v2954
    %v2987 = vunpack.c.l.b16 %v2955
    %v2988 = vunpack.c.l.b16 %v2956
    %v2989 = vunpack.c.l.b16 %v2957
    %v2990 = vunpack.c.l.b16 %v2958
    %v2991 = vunpack.c.l.b16 %v2959
    %v2992 = vunpack.c.l.b16 %v2960
    %v2993 = vunpack.c.l.b16 %v2961
    %v2994 = vunpack.c.l.b16 %v2962
    %v2995 = vunpack.c.l.b16 %v2963
    %v2996 = vunpack.c.l.b16 %v2964
    %v2997 = vunpack.c.l.b16 %v2965
    %v2998 = vpack.c.b16 %v2983, %v2982
    %v2999 = vpack.c.b16 %v2985, %v2984
    %v3000 = vpack.c.b16 %v2987, %v2986
    %v3001 = vpack.c.b16 %v2989, %v2988
    %v3002 = vpack.c.b16 %v2991, %v2990
    %v3003 = vpack.c.b16 %v2993, %v2992
    %v3004 = vpack.c.b16 %v2995, %v2994
    %v3005 = vpack.c.b16 %v2997, %v2996
    %3014 = vxpose.xlu0.c.b16.start [1/8] %v2998, 128
    %3015 = vxpose.xlu0.c.b16.cont [2/8] 0, 128
    %3016 = vxpose.xlu0.c.b16.cont [3/8] 0, 128
    %3017 = vxpose.xlu0.c.b16.cont [4/8] 0, 128
    %3018 = vxpose.xlu0.c.b16.cont [5/8] 0, 128
    %3019 = vxpose.xlu0.c.b16.cont [6/8] 0, 128
    %3020 = vxpose.xlu0.c.b16.cont [7/8] 0, 128
    %3021 = vxpose.xlu0.c.b16.end [8/8] 0, 128
    %v3022 = vpop.trf.xlu0
    %v3023 = vpop.trf.xlu0
    %v3024 = vpop.trf.xlu0
    %v3025 = vpop.trf.xlu0
    %v3026 = vpop.trf.xlu0
    %v3027 = vpop.trf.xlu0
    %v3028 = vpop.trf.xlu0
    %v3029 = vpop.trf.xlu0
    %3030 = vxpose.xlu0.c.b16.start [1/8] %v2999, 128
    %3031 = vxpose.xlu0.c.b16.cont [2/8] 0, 128
    %3032 = vxpose.xlu0.c.b16.cont [3/8] 0, 128
    %3033 = vxpose.xlu0.c.b16.cont [4/8] 0, 128
    %3034 = vxpose.xlu0.c.b16.cont [5/8] 0, 128
    %3035 = vxpose.xlu0.c.b16.cont [6/8] 0, 128
    %3036 = vxpose.xlu0.c.b16.cont [7/8] 0, 128
    %3037 = vxpose.xlu0.c.b16.end [8/8] 0, 128
    %v3038 = vpop.trf.xlu0
    %v3039 = vpop.trf.xlu0
    %v3040 = vpop.trf.xlu0
    %v3041 = vpop.trf.xlu0
    %v3042 = vpop.trf.xlu0
    %v3043 = vpop.trf.xlu0
    %v3044 = vpop.trf.xlu0
    %v3045 = vpop.trf.xlu0
    %3046 = vxpose.xlu0.c.b16.start [1/8] %v3000, 128
    %3047 = vxpose.xlu0.c.b16.cont [2/8] 0, 128
    %3048 = vxpose.xlu0.c.b16.cont [3/8] 0, 128
    %3049 = vxpose.xlu0.c.b16.cont [4/8] 0, 128
    %3050 = vxpose.xlu0.c.b16.cont [5/8] 0, 128
    %3051 = vxpose.xlu0.c.b16.cont [6/8] 0, 128
    %3052 = vxpose.xlu0.c.b16.cont [7/8] 0, 128
    %3053 = vxpose.xlu0.c.b16.end [8/8] 0, 128
    %v3054 = vpop.trf.xlu0
    %v3055 = vpop.trf.xlu0
    %v3056 = vpop.trf.xlu0
    %v3057 = vpop.trf.xlu0
    %v3058 = vpop.trf.xlu0
    %v3059 = vpop.trf.xlu0
    %v3060 = vpop.trf.xlu0
    %v3061 = vpop.trf.xlu0
    %3062 = vxpose.xlu0.c.b16.start [1/8] %v3001, 128
    %3063 = vxpose.xlu0.c.b16.cont [2/8] 0, 128
    %3064 = vxpose.xlu0.c.b16.cont [3/8] 0, 128
    %3065 = vxpose.xlu0.c.b16.cont [4/8] 0, 128
    %3066 = vxpose.xlu0.c.b16.cont [5/8] 0, 128
    %3067 = vxpose.xlu0.c.b16.cont [6/8] 0, 128
    %3068 = vxpose.xlu0.c.b16.cont [7/8] 0, 128
    %3069 = vxpose.xlu0.c.b16.end [8/8] 0, 128
    %v3070 = vpop.trf.xlu0
    %v3071 = vpop.trf.xlu0
    %v3072 = vpop.trf.xlu0
    %v3073 = vpop.trf.xlu0
    %v3074 = vpop.trf.xlu0
    %v3075 = vpop.trf.xlu0
    %v3076 = vpop.trf.xlu0
    %v3077 = vpop.trf.xlu0
    %3078 = vxpose.xlu0.c.b16.start [1/8] %v3002, 128
    %3079 = vxpose.xlu0.c.b16.cont [2/8] 0, 128
    %3080 = vxpose.xlu0.c.b16.cont [3/8] 0, 128
    %3081 = vxpose.xlu0.c.b16.cont [4/8] 0, 128
    %3082 = vxpose.xlu0.c.b16.cont [5/8] 0, 128
    %3083 = vxpose.xlu0.c.b16.cont [6/8] 0, 128
    %3084 = vxpose.xlu0.c.b16.cont [7/8] 0, 128
    %3085 = vxpose.xlu0.c.b16.end [8/8] 0, 128
    %v3086 = vpop.trf.xlu0
    %v3087 = vpop.trf.xlu0
    %v3088 = vpop.trf.xlu0
    %v3089 = vpop.trf.xlu0
    %v3090 = vpop.trf.xlu0
    %v3091 = vpop.trf.xlu0
    %v3092 = vpop.trf.xlu0
    %v3093 = vpop.trf.xlu0
    %3094 = vxpose.xlu0.c.b16.start [1/8] %v3003, 128
    %3095 = vxpose.xlu0.c.b16.cont [2/8] 0, 128
    %3096 = vxpose.xlu0.c.b16.cont [3/8] 0, 128
    %3097 = vxpose.xlu0.c.b16.cont [4/8] 0, 128
    %3098 = vxpose.xlu0.c.b16.cont [5/8] 0, 128
    %3099 = vxpose.xlu0.c.b16.cont [6/8] 0, 128
    %3100 = vxpose.xlu0.c.b16.cont [7/8] 0, 128
    %3101 = vxpose.xlu0.c.b16.end [8/8] 0, 128
    %v3102 = vpop.trf.xlu0
    %v3103 = vpop.trf.xlu0
    %v3104 = vpop.trf.xlu0
    %v3105 = vpop.trf.xlu0
    %v3106 = vpop.trf.xlu0
    %v3107 = vpop.trf.xlu0
    %v3108 = vpop.trf.xlu0
    %v3109 = vpop.trf.xlu0
    %3110 = vxpose.xlu0.c.b16.start [1/8] %v3004, 128
    %3111 = vxpose.xlu0.c.b16.cont [2/8] 0, 128
    %3112 = vxpose.xlu0.c.b16.cont [3/8] 0, 128
    %3113 = vxpose.xlu0.c.b16.cont [4/8] 0, 128
    %3114 = vxpose.xlu0.c.b16.cont [5/8] 0, 128
    %3115 = vxpose.xlu0.c.b16.cont [6/8] 0, 128
    %3116 = vxpose.xlu0.c.b16.cont [7/8] 0, 128
    %3117 = vxpose.xlu0.c.b16.end [8/8] 0, 128
    %v3118 = vpop.trf.xlu0
    %v3119 = vpop.trf.xlu0
    %v3120 = vpop.trf.xlu0
    %v3121 = vpop.trf.xlu0
    %v3122 = vpop.trf.xlu0
    %v3123 = vpop.trf.xlu0
    %v3124 = vpop.trf.xlu0
    %v3125 = vpop.trf.xlu0
    %3126 = vxpose.xlu0.c.b16.start [1/8] %v3005, 128
    %3127 = vxpose.xlu0.c.b16.cont [2/8] 0, 128
    %3128 = vxpose.xlu0.c.b16.cont [3/8] 0, 128
    %3129 = vxpose.xlu0.c.b16.cont [4/8] 0, 128
    %3130 = vxpose.xlu0.c.b16.cont [5/8] 0, 128
    %3131 = vxpose.xlu0.c.b16.cont [6/8] 0, 128
    %3132 = vxpose.xlu0.c.b16.cont [7/8] 0, 128
    %3133 = vxpose.xlu0.c.b16.end [8/8] 0, 128
    %v3134 = vpop.trf.xlu0
    %v3135 = vpop.trf.xlu0
    %v3136 = vpop.trf.xlu0
    %v3137 = vpop.trf.xlu0
    %v3138 = vpop.trf.xlu0
    %v3139 = vpop.trf.xlu0
    %v3140 = vpop.trf.xlu0
    %v3141 = vpop.trf.xlu0
    %s3142 = scalar_lea.vmem %s5, 8
    %v3143 = vld [vmem:[%s3142] sm:$0xf]
    %v3144 = vld [vmem:[%s3142 + $0x4] sm:$0xf]
    %s3145 = scalar_lea.vmem %s6, 1
    %v3146 = vld [vmem:[%s3145] sm:$0x1]
    %v3148 = vperm.slane %v3146, 0
    %v3152 = vunpack.c.l.b16 %v3143
    %v3153 = vunpack.c.l.b16 %v3144
    %v3154 = vpack.c.b16 %v3153, %v3152
    %v3157 = vsel %vm858, %v3022, 0
    %v3160 = vsel %vm858, %v3023, 0
    %v3163 = vsel %vm858, %v3038, 0
    %v3166 = vsel %vm858, %v3039, 0
    %v3169 = vsel %vm858, %v3054, 0
    %v3172 = vsel %vm858, %v3055, 0
    %v3175 = vsel %vm858, %v3070, 0
    %v3178 = vsel %vm858, %v3071, 0
    %v3181 = vsel %vm858, %v3086, 0
    %v3184 = vsel %vm858, %v3087, 0
    %v3187 = vsel %vm858, %v3102, 0
    %v3190 = vsel %vm858, %v3103, 0
    %v3193 = vsel %vm858, %v3118, 0
    %v3196 = vsel %vm858, %v3119, 0
    %v3199 = vsel %vm858, %v3134, 0
    %v3202 = vsel %vm858, %v3135, 0
    %3204 = vmatpush.bf16.msra.mxu0 0
    %3205 = vmatpush.bf16.msra.mxu0 0
    %3206 = vmatpush.bf16.msra.mxu0 0
    %3207 = vmatpush.bf16.msra.mxu0 0
    %3208 = vmatpush.bf16.msra.mxu0 0
    %3209 = vmatpush.bf16.msra.mxu0 0
    %3210 = vmatpush.bf16.msra.mxu0 0
    %3211 = vmatpush.bf16.msra.mxu0 %v3154
    %3212 = vmatmul.bf16.gmra.mxu0 %v3157
    %v3213 = vpop.f32.mrf.mxu0
    %v3214 = vadd.f32 %v3148, %v3213
    %v3215 = vpop.f32.mrf.mxu0
    %v3216 = vadd.f32 %v3148, %v3215
    %3217 = vmatmul.bf16.gmra.mxu0 %v3160
    %v3218 = vpop.f32.mrf.mxu0
    %v3219 = vadd.f32 %v3148, %v3218
    %v3220 = vpop.f32.mrf.mxu0
    %v3221 = vadd.f32 %v3148, %v3220
    %3222 = vmatmul.bf16.gmra.mxu0 %v3163
    %v3223 = vpop.f32.mrf.mxu0
    %v3224 = vadd.f32 %v3148, %v3223
    %v3225 = vpop.f32.mrf.mxu0
    %v3226 = vadd.f32 %v3148, %v3225
    %3227 = vmatmul.bf16.gmra.mxu0 %v3166
    %v3228 = vpop.f32.mrf.mxu0
    %v3229 = vadd.f32 %v3148, %v3228
    %v3230 = vpop.f32.mrf.mxu0
    %v3231 = vadd.f32 %v3148, %v3230
    %3232 = vmatmul.bf16.gmra.mxu0 %v3169
    %v3233 = vpop.f32.mrf.mxu0
    %v3234 = vadd.f32 %v3148, %v3233
    %v3235 = vpop.f32.mrf.mxu0
    %v3236 = vadd.f32 %v3148, %v3235
    %3237 = vmatmul.bf16.gmra.mxu0 %v3172
    %v3238 = vpop.f32.mrf.mxu0
    %v3239 = vadd.f32 %v3148, %v3238
    %v3240 = vpop.f32.mrf.mxu0
    %v3241 = vadd.f32 %v3148, %v3240
    %3242 = vmatmul.bf16.gmra.mxu0 %v3175
    %v3243 = vpop.f32.mrf.mxu0
    %v3244 = vadd.f32 %v3148, %v3243
    %v3245 = vpop.f32.mrf.mxu0
    %v3246 = vadd.f32 %v3148, %v3245
    %3247 = vmatmul.bf16.gmra.mxu0 %v3178
    %v3248 = vpop.f32.mrf.mxu0
    %v3249 = vadd.f32 %v3148, %v3248
    %v3250 = vpop.f32.mrf.mxu0
    %v3251 = vadd.f32 %v3148, %v3250
    %3252 = vmatmul.bf16.gmra.mxu0 %v3181
    %v3253 = vpop.f32.mrf.mxu0
    %v3254 = vadd.f32 %v3148, %v3253
    %v3255 = vpop.f32.mrf.mxu0
    %v3256 = vadd.f32 %v3148, %v3255
    %3257 = vmatmul.bf16.gmra.mxu0 %v3184
    %v3258 = vpop.f32.mrf.mxu0
    %v3259 = vadd.f32 %v3148, %v3258
    %v3260 = vpop.f32.mrf.mxu0
    %v3261 = vadd.f32 %v3148, %v3260
    %3262 = vmatmul.bf16.gmra.mxu0 %v3187
    %v3263 = vpop.f32.mrf.mxu0
    %v3264 = vadd.f32 %v3148, %v3263
    %v3265 = vpop.f32.mrf.mxu0
    %v3266 = vadd.f32 %v3148, %v3265
    %3267 = vmatmul.bf16.gmra.mxu0 %v3190
    %v3268 = vpop.f32.mrf.mxu0
    %v3269 = vadd.f32 %v3148, %v3268
    %v3270 = vpop.f32.mrf.mxu0
    %v3271 = vadd.f32 %v3148, %v3270
    %3272 = vmatmul.bf16.gmra.mxu0 %v3193
    %v3273 = vpop.f32.mrf.mxu0
    %v3274 = vadd.f32 %v3148, %v3273
    %v3275 = vpop.f32.mrf.mxu0
    %v3276 = vadd.f32 %v3148, %v3275
    %3277 = vmatmul.bf16.gmra.mxu0 %v3196
    %v3278 = vpop.f32.mrf.mxu0
    %v3279 = vadd.f32 %v3148, %v3278
    %v3280 = vpop.f32.mrf.mxu0
    %v3281 = vadd.f32 %v3148, %v3280
    %3282 = vmatmul.bf16.gmra.mxu0 %v3199
    %v3283 = vpop.f32.mrf.mxu0
    %v3284 = vadd.f32 %v3148, %v3283
    %v3285 = vpop.f32.mrf.mxu0
    %v3286 = vadd.f32 %v3148, %v3285
    %3287 = vmatmul.bf16.gmra.mxu0 %v3202
    %v3288 = vpop.f32.mrf.mxu0
    %v3289 = vadd.f32 %v3148, %v3288
    %v3290 = vpop.f32.mrf.mxu0
    %v3291 = vadd.f32 %v3148, %v3290
    %3292 = vdwg.mxu0
    %v3293 = vmul.f32 %v3214, 0.5
    %v3294 = vmul.f32 %v3216, 0.5
    %v3295 = vmul.f32 %v3219, 0.5
    %v3296 = vmul.f32 %v3221, 0.5
    %v3297 = vmul.f32 %v3224, 0.5
    %v3298 = vmul.f32 %v3226, 0.5
    %v3299 = vmul.f32 %v3229, 0.5
    %v3300 = vmul.f32 %v3231, 0.5
    %v3301 = vmul.f32 %v3234, 0.5
    %v3302 = vmul.f32 %v3236, 0.5
    %v3303 = vmul.f32 %v3239, 0.5
    %v3304 = vmul.f32 %v3241, 0.5
    %v3305 = vmul.f32 %v3244, 0.5
    %v3306 = vmul.f32 %v3246, 0.5
    %v3307 = vmul.f32 %v3249, 0.5
    %v3308 = vmul.f32 %v3251, 0.5
    %v3309 = vmul.f32 %v3254, 0.5
    %v3310 = vmul.f32 %v3256, 0.5
    %v3311 = vmul.f32 %v3259, 0.5
    %v3312 = vmul.f32 %v3261, 0.5
    %v3313 = vmul.f32 %v3264, 0.5
    %v3314 = vmul.f32 %v3266, 0.5
    %v3315 = vmul.f32 %v3269, 0.5
    %v3316 = vmul.f32 %v3271, 0.5
    %v3317 = vmul.f32 %v3274, 0.5
    %v3318 = vmul.f32 %v3276, 0.5
    %v3319 = vmul.f32 %v3279, 0.5
    %v3320 = vmul.f32 %v3281, 0.5
    %v3321 = vmul.f32 %v3284, 0.5
    %v3322 = vmul.f32 %v3286, 0.5
    %v3323 = vmul.f32 %v3289, 0.5
    %v3324 = vmul.f32 %v3291, 0.5
    %v3325 = vmul.f32 %v3214, 0.044715
    %v3326 = vmul.f32 %v3216, 0.044715
    %v3327 = vmul.f32 %v3219, 0.044715
    %v3328 = vmul.f32 %v3221, 0.044715
    %v3329 = vmul.f32 %v3224, 0.044715
    %v3330 = vmul.f32 %v3226, 0.044715
    %v3331 = vmul.f32 %v3229, 0.044715
    %v3332 = vmul.f32 %v3231, 0.044715
    %v3333 = vmul.f32 %v3234, 0.044715
    %v3334 = vmul.f32 %v3236, 0.044715
    %v3335 = vmul.f32 %v3239, 0.044715
    %v3336 = vmul.f32 %v3241, 0.044715
    %v3337 = vmul.f32 %v3244, 0.044715
    %v3338 = vmul.f32 %v3246, 0.044715
    %v3339 = vmul.f32 %v3249, 0.044715
    %v3340 = vmul.f32 %v3251, 0.044715
    %v3341 = vmul.f32 %v3254, 0.044715
    %v3342 = vmul.f32 %v3256, 0.044715
    %v3343 = vmul.f32 %v3259, 0.044715
    %v3344 = vmul.f32 %v3261, 0.044715
    %v3345 = vmul.f32 %v3264, 0.044715
    %v3346 = vmul.f32 %v3266, 0.044715
    %v3347 = vmul.f32 %v3269, 0.044715
    %v3348 = vmul.f32 %v3271, 0.044715
    %v3349 = vmul.f32 %v3274, 0.044715
    %v3350 = vmul.f32 %v3276, 0.044715
    %v3351 = vmul.f32 %v3279, 0.044715
    %v3352 = vmul.f32 %v3281, 0.044715
    %v3353 = vmul.f32 %v3284, 0.044715
    %v3354 = vmul.f32 %v3286, 0.044715
    %v3355 = vmul.f32 %v3289, 0.044715
    %v3356 = vmul.f32 %v3291, 0.044715
    %v3357 = vmul.f32 %v3325, %v3214
    %v3358 = vmul.f32 %v3326, %v3216
    %v3359 = vmul.f32 %v3327, %v3219
    %v3360 = vmul.f32 %v3328, %v3221
    %v3361 = vmul.f32 %v3329, %v3224
    %v3362 = vmul.f32 %v3330, %v3226
    %v3363 = vmul.f32 %v3331, %v3229
    %v3364 = vmul.f32 %v3332, %v3231
    %v3365 = vmul.f32 %v3333, %v3234
    %v3366 = vmul.f32 %v3334, %v3236
    %v3367 = vmul.f32 %v3335, %v3239
    %v3368 = vmul.f32 %v3336, %v3241
    %v3369 = vmul.f32 %v3337, %v3244
    %v3370 = vmul.f32 %v3338, %v3246
    %v3371 = vmul.f32 %v3339, %v3249
    %v3372 = vmul.f32 %v3340, %v3251
    %v3373 = vmul.f32 %v3341, %v3254
    %v3374 = vmul.f32 %v3342, %v3256
    %v3375 = vmul.f32 %v3343, %v3259
    %v3376 = vmul.f32 %v3344, %v3261
    %v3377 = vmul.f32 %v3345, %v3264
    %v3378 = vmul.f32 %v3346, %v3266
    %v3379 = vmul.f32 %v3347, %v3269
    %v3380 = vmul.f32 %v3348, %v3271
    %v3381 = vmul.f32 %v3349, %v3274
    %v3382 = vmul.f32 %v3350, %v3276
    %v3383 = vmul.f32 %v3351, %v3279
    %v3384 = vmul.f32 %v3352, %v3281
    %v3385 = vmul.f32 %v3353, %v3284
    %v3386 = vmul.f32 %v3354, %v3286
    %v3387 = vmul.f32 %v3355, %v3289
    %v3388 = vmul.f32 %v3356, %v3291
    %v3389 = vmul.f32 %v3357, %v3214
    %v3390 = vmul.f32 %v3358, %v3216
    %v3391 = vmul.f32 %v3359, %v3219
    %v3392 = vmul.f32 %v3360, %v3221
    %v3393 = vmul.f32 %v3361, %v3224
    %v3394 = vmul.f32 %v3362, %v3226
    %v3395 = vmul.f32 %v3363, %v3229
    %v3396 = vmul.f32 %v3364, %v3231
    %v3397 = vmul.f32 %v3365, %v3234
    %v3398 = vmul.f32 %v3366, %v3236
    %v3399 = vmul.f32 %v3367, %v3239
    %v3400 = vmul.f32 %v3368, %v3241
    %v3401 = vmul.f32 %v3369, %v3244
    %v3402 = vmul.f32 %v3370, %v3246
    %v3403 = vmul.f32 %v3371, %v3249
    %v3404 = vmul.f32 %v3372, %v3251
    %v3405 = vmul.f32 %v3373, %v3254
    %v3406 = vmul.f32 %v3374, %v3256
    %v3407 = vmul.f32 %v3375, %v3259
    %v3408 = vmul.f32 %v3376, %v3261
    %v3409 = vmul.f32 %v3377, %v3264
    %v3410 = vmul.f32 %v3378, %v3266
    %v3411 = vmul.f32 %v3379, %v3269
    %v3412 = vmul.f32 %v3380, %v3271
    %v3413 = vmul.f32 %v3381, %v3274
    %v3414 = vmul.f32 %v3382, %v3276
    %v3415 = vmul.f32 %v3383, %v3279
    %v3416 = vmul.f32 %v3384, %v3281
    %v3417 = vmul.f32 %v3385, %v3284
    %v3418 = vmul.f32 %v3386, %v3286
    %v3419 = vmul.f32 %v3387, %v3289
    %v3420 = vmul.f32 %v3388, %v3291
    %v3421 = vadd.f32 %v3214, %v3389
    %v3422 = vadd.f32 %v3216, %v3390
    %v3423 = vadd.f32 %v3219, %v3391
    %v3424 = vadd.f32 %v3221, %v3392
    %v3425 = vadd.f32 %v3224, %v3393
    %v3426 = vadd.f32 %v3226, %v3394
    %v3427 = vadd.f32 %v3229, %v3395
    %v3428 = vadd.f32 %v3231, %v3396
    %v3429 = vadd.f32 %v3234, %v3397
    %v3430 = vadd.f32 %v3236, %v3398
    %v3431 = vadd.f32 %v3239, %v3399
    %v3432 = vadd.f32 %v3241, %v3400
    %v3433 = vadd.f32 %v3244, %v3401
    %v3434 = vadd.f32 %v3246, %v3402
    %v3435 = vadd.f32 %v3249, %v3403
    %v3436 = vadd.f32 %v3251, %v3404
    %v3437 = vadd.f32 %v3254, %v3405
    %v3438 = vadd.f32 %v3256, %v3406
    %v3439 = vadd.f32 %v3259, %v3407
    %v3440 = vadd.f32 %v3261, %v3408
    %v3441 = vadd.f32 %v3264, %v3409
    %v3442 = vadd.f32 %v3266, %v3410
    %v3443 = vadd.f32 %v3269, %v3411
    %v3444 = vadd.f32 %v3271, %v3412
    %v3445 = vadd.f32 %v3274, %v3413
    %v3446 = vadd.f32 %v3276, %v3414
    %v3447 = vadd.f32 %v3279, %v3415
    %v3448 = vadd.f32 %v3281, %v3416
    %v3449 = vadd.f32 %v3284, %v3417
    %v3450 = vadd.f32 %v3286, %v3418
    %v3451 = vadd.f32 %v3289, %v3419
    %v3452 = vadd.f32 %v3291, %v3420
    %v3453 = vmul.f32 %v3421, 0.7978846
    %v3454 = vmul.f32 %v3422, 0.7978846
    %v3455 = vmul.f32 %v3423, 0.7978846
    %v3456 = vmul.f32 %v3424, 0.7978846
    %v3457 = vmul.f32 %v3425, 0.7978846
    %v3458 = vmul.f32 %v3426, 0.7978846
    %v3459 = vmul.f32 %v3427, 0.7978846
    %v3460 = vmul.f32 %v3428, 0.7978846
    %v3461 = vmul.f32 %v3429, 0.7978846
    %v3462 = vmul.f32 %v3430, 0.7978846
    %v3463 = vmul.f32 %v3431, 0.7978846
    %v3464 = vmul.f32 %v3432, 0.7978846
    %v3465 = vmul.f32 %v3433, 0.7978846
    %v3466 = vmul.f32 %v3434, 0.7978846
    %v3467 = vmul.f32 %v3435, 0.7978846
    %v3468 = vmul.f32 %v3436, 0.7978846
    %v3469 = vmul.f32 %v3437, 0.7978846
    %v3470 = vmul.f32 %v3438, 0.7978846
    %v3471 = vmul.f32 %v3439, 0.7978846
    %v3472 = vmul.f32 %v3440, 0.7978846
    %v3473 = vmul.f32 %v3441, 0.7978846
    %v3474 = vmul.f32 %v3442, 0.7978846
    %v3475 = vmul.f32 %v3443, 0.7978846
    %v3476 = vmul.f32 %v3444, 0.7978846
    %v3477 = vmul.f32 %v3445, 0.7978846
    %v3478 = vmul.f32 %v3446, 0.7978846
    %v3479 = vmul.f32 %v3447, 0.7978846
    %v3480 = vmul.f32 %v3448, 0.7978846
    %v3481 = vmul.f32 %v3449, 0.7978846
    %v3482 = vmul.f32 %v3450, 0.7978846
    %v3483 = vmul.f32 %v3451, 0.7978846
    %v3484 = vmul.f32 %v3452, 0.7978846
    %v3485 = vtanh.pop %v3453
    %v3486 = vtanh.pop %v3454
    %v3487 = vtanh.pop %v3455
    %v3488 = vtanh.pop %v3456
    %v3489 = vtanh.pop %v3457
    %v3490 = vtanh.pop %v3458
    %v3491 = vtanh.pop %v3459
    %v3492 = vtanh.pop %v3460
    %v3493 = vtanh.pop %v3461
    %v3494 = vtanh.pop %v3462
    %v3495 = vtanh.pop %v3463
    %v3496 = vtanh.pop %v3464
    %v3497 = vtanh.pop %v3465
    %v3498 = vtanh.pop %v3466
    %v3499 = vtanh.pop %v3467
    %v3500 = vtanh.pop %v3468
    %v3501 = vtanh.pop %v3469
    %v3502 = vtanh.pop %v3470
    %v3503 = vtanh.pop %v3471
    %v3504 = vtanh.pop %v3472
    %v3505 = vtanh.pop %v3473
    %v3506 = vtanh.pop %v3474
    %v3507 = vtanh.pop %v3475
    %v3508 = vtanh.pop %v3476
    %v3509 = vtanh.pop %v3477
    %v3510 = vtanh.pop %v3478
    %v3511 = vtanh.pop %v3479
    %v3512 = vtanh.pop %v3480
    %v3513 = vtanh.pop %v3481
    %v3514 = vtanh.pop %v3482
    %v3515 = vtanh.pop %v3483
    %v3516 = vtanh.pop %v3484
    %v3517 = vadd.f32 %v3485, 1.0
    %v3518 = vadd.f32 %v3486, 1.0
    %v3519 = vadd.f32 %v3487, 1.0
    %v3520 = vadd.f32 %v3488, 1.0
    %v3521 = vadd.f32 %v3489, 1.0
    %v3522 = vadd.f32 %v3490, 1.0
    %v3523 = vadd.f32 %v3491, 1.0
    %v3524 = vadd.f32 %v3492, 1.0
    %v3525 = vadd.f32 %v3493, 1.0
    %v3526 = vadd.f32 %v3494, 1.0
    %v3527 = vadd.f32 %v3495, 1.0
    %v3528 = vadd.f32 %v3496, 1.0
    %v3529 = vadd.f32 %v3497, 1.0
    %v3530 = vadd.f32 %v3498, 1.0
    %v3531 = vadd.f32 %v3499, 1.0
    %v3532 = vadd.f32 %v3500, 1.0
    %v3533 = vadd.f32 %v3501, 1.0
    %v3534 = vadd.f32 %v3502, 1.0
    %v3535 = vadd.f32 %v3503, 1.0
    %v3536 = vadd.f32 %v3504, 1.0
    %v3537 = vadd.f32 %v3505, 1.0
    %v3538 = vadd.f32 %v3506, 1.0
    %v3539 = vadd.f32 %v3507, 1.0
    %v3540 = vadd.f32 %v3508, 1.0
    %v3541 = vadd.f32 %v3509, 1.0
    %v3542 = vadd.f32 %v3510, 1.0
    %v3543 = vadd.f32 %v3511, 1.0
    %v3544 = vadd.f32 %v3512, 1.0
    %v3545 = vadd.f32 %v3513, 1.0
    %v3546 = vadd.f32 %v3514, 1.0
    %v3547 = vadd.f32 %v3515, 1.0
    %v3548 = vadd.f32 %v3516, 1.0
    %v3549 = vmul.f32 %v3293, %v3517
    %v3550 = vmul.f32 %v3294, %v3518
    %v3551 = vmul.f32 %v3295, %v3519
    %v3552 = vmul.f32 %v3296, %v3520
    %v3553 = vmul.f32 %v3297, %v3521
    %v3554 = vmul.f32 %v3298, %v3522
    %v3555 = vmul.f32 %v3299, %v3523
    %v3556 = vmul.f32 %v3300, %v3524
    %v3557 = vmul.f32 %v3301, %v3525
    %v3558 = vmul.f32 %v3302, %v3526
    %v3559 = vmul.f32 %v3303, %v3527
    %v3560 = vmul.f32 %v3304, %v3528
    %v3561 = vmul.f32 %v3305, %v3529
    %v3562 = vmul.f32 %v3306, %v3530
    %v3563 = vmul.f32 %v3307, %v3531
    %v3564 = vmul.f32 %v3308, %v3532
    %v3565 = vmul.f32 %v3309, %v3533
    %v3566 = vmul.f32 %v3310, %v3534
    %v3567 = vmul.f32 %v3311, %v3535
    %v3568 = vmul.f32 %v3312, %v3536
    %v3569 = vmul.f32 %v3313, %v3537
    %v3570 = vmul.f32 %v3314, %v3538
    %v3571 = vmul.f32 %v3315, %v3539
    %v3572 = vmul.f32 %v3316, %v3540
    %v3573 = vmul.f32 %v3317, %v3541
    %v3574 = vmul.f32 %v3318, %v3542
    %v3575 = vmul.f32 %v3319, %v3543
    %v3576 = vmul.f32 %v3320, %v3544
    %v3577 = vmul.f32 %v3321, %v3545
    %v3578 = vmul.f32 %v3322, %v3546
    %v3579 = vmul.f32 %v3323, %v3547
    %v3580 = vmul.f32 %v3324, %v3548
    %v3581 = vpack.c.bf16 %v3550, %v3549
    %v3582 = vpack.c.bf16 %v3552, %v3551
    %v3583 = vpack.c.bf16 %v3554, %v3553
    %v3584 = vpack.c.bf16 %v3556, %v3555
    %v3585 = vpack.c.bf16 %v3558, %v3557
    %v3586 = vpack.c.bf16 %v3560, %v3559
    %v3587 = vpack.c.bf16 %v3562, %v3561
    %v3588 = vpack.c.bf16 %v3564, %v3563
    %v3589 = vpack.c.bf16 %v3566, %v3565
    %v3590 = vpack.c.bf16 %v3568, %v3567
    %v3591 = vpack.c.bf16 %v3570, %v3569
    %v3592 = vpack.c.bf16 %v3572, %v3571
    %v3593 = vpack.c.bf16 %v3574, %v3573
    %v3594 = vpack.c.bf16 %v3576, %v3575
    %v3595 = vpack.c.bf16 %v3578, %v3577
    %v3596 = vpack.c.bf16 %v3580, %v3579
    %s3597 = scalar_lea.vmem %s7, 32
    %v3598 = vld [vmem:[%s3597] sm:$0xf]
    %v3599 = vld [vmem:[%s3597 + $0x4] sm:$0xf]
    %v3600 = vld [vmem:[%s3597 + $0x8] sm:$0xf]
    %v3601 = vld [vmem:[%s3597 + $0xc] sm:$0xf]
    %v3602 = vld [vmem:[%s3597 + $0x10] sm:$0xf]
    %v3603 = vld [vmem:[%s3597 + $0x14] sm:$0xf]
    %v3604 = vld [vmem:[%s3597 + $0x18] sm:$0xf]
    %v3605 = vld [vmem:[%s3597 + $0x1c] sm:$0xf]
    %s3606 = scalar_lea.vmem %s8, 1
    %v3607 = vld [vmem:[%s3606] sm:$0x1]
    %v3609 = vperm.slane %v3607, 0
    %v3619 = vunpack.c.l.b16 %v3598
    %v3620 = vunpack.c.l.b16 %v3599
    %v3621 = vunpack.c.l.b16 %v3600
    %v3622 = vunpack.c.l.b16 %v3601
    %v3623 = vunpack.c.l.b16 %v3602
    %v3624 = vunpack.c.l.b16 %v3603
    %v3625 = vunpack.c.l.b16 %v3604
    %v3626 = vunpack.c.l.b16 %v3605
    %v3627 = vpack.c.b16 %v3620, %v3619
    %v3628 = vpack.c.b16 %v3622, %v3621
    %v3629 = vpack.c.b16 %v3624, %v3623
    %v3630 = vpack.c.b16 %v3626, %v3625
    %v3636 = vsel %vm1336, %v3581, 0
    %v3639 = vsel %vm1336, %v3582, 0
    %v3642 = vsel %vm1336, %v3583, 0
    %v3645 = vsel %vm1336, %v3584, 0
    %v3648 = vsel %vm1336, %v3585, 0
    %v3651 = vsel %vm1336, %v3586, 0
    %v3654 = vsel %vm1336, %v3587, 0
    %v3657 = vsel %vm1336, %v3588, 0
    %v3660 = vsel %vm1336, %v3589, 0
    %v3663 = vsel %vm1336, %v3590, 0
    %v3666 = vsel %vm1336, %v3591, 0
    %v3669 = vsel %vm1336, %v3592, 0
    %v3672 = vsel %vm1336, %v3593, 0
    %v3675 = vsel %vm1336, %v3594, 0
    %v3678 = vsel %vm1336, %v3595, 0
    %v3681 = vsel %vm1336, %v3596, 0
    %3683 = vmatpush.bf16.msra.mxu0 0
    %3684 = vmatpush.bf16.msra.mxu0 0
    %3685 = vmatpush.bf16.msra.mxu0 0
    %3686 = vmatpush.bf16.msra.mxu0 0
    %3687 = vmatpush.bf16.msra.mxu0 %v3630
    %3688 = vmatpush.bf16.msra.mxu0 %v3629
    %3689 = vmatpush.bf16.msra.mxu0 %v3628
    %3690 = vmatpush.bf16.msra.mxu0 %v3627
    %3691 = vmatmul.bf16.gmra.mxu0 %v3636
    %v3692 = vpop.f32.mrf.mxu0
    %v3693 = vadd.f32 %v3609, %v3692
    %v3694 = vpop.f32.mrf.mxu0
    %v3695 = vadd.f32 %v3609, %v3694
    %3696 = vmatmul.bf16.gmra.mxu0 %v3639
    %v3697 = vpop.f32.mrf.mxu0
    %v3698 = vadd.f32 %v3609, %v3697
    %v3699 = vpop.f32.mrf.mxu0
    %v3700 = vadd.f32 %v3609, %v3699
    %3701 = vmatmul.bf16.gmra.mxu0 %v3642
    %v3702 = vpop.f32.mrf.mxu0
    %v3703 = vadd.f32 %v3609, %v3702
    %v3704 = vpop.f32.mrf.mxu0
    %v3705 = vadd.f32 %v3609, %v3704
    %3706 = vmatmul.bf16.gmra.mxu0 %v3645
    %v3707 = vpop.f32.mrf.mxu0
    %v3708 = vadd.f32 %v3609, %v3707
    %v3709 = vpop.f32.mrf.mxu0
    %v3710 = vadd.f32 %v3609, %v3709
    %3711 = vmatmul.bf16.gmra.mxu0 %v3648
    %v3712 = vpop.f32.mrf.mxu0
    %v3713 = vadd.f32 %v3609, %v3712
    %v3714 = vpop.f32.mrf.mxu0
    %v3715 = vadd.f32 %v3609, %v3714
    %3716 = vmatmul.bf16.gmra.mxu0 %v3651
    %v3717 = vpop.f32.mrf.mxu0
    %v3718 = vadd.f32 %v3609, %v3717
    %v3719 = vpop.f32.mrf.mxu0
    %v3720 = vadd.f32 %v3609, %v3719
    %3721 = vmatmul.bf16.gmra.mxu0 %v3654
    %v3722 = vpop.f32.mrf.mxu0
    %v3723 = vadd.f32 %v3609, %v3722
    %v3724 = vpop.f32.mrf.mxu0
    %v3725 = vadd.f32 %v3609, %v3724
    %3726 = vmatmul.bf16.gmra.mxu0 %v3657
    %v3727 = vpop.f32.mrf.mxu0
    %v3728 = vadd.f32 %v3609, %v3727
    %v3729 = vpop.f32.mrf.mxu0
    %v3730 = vadd.f32 %v3609, %v3729
    %3731 = vmatmul.bf16.gmra.mxu0 %v3660
    %v3732 = vpop.f32.mrf.mxu0
    %v3733 = vadd.f32 %v3609, %v3732
    %v3734 = vpop.f32.mrf.mxu0
    %v3735 = vadd.f32 %v3609, %v3734
    %3736 = vmatmul.bf16.gmra.mxu0 %v3663
    %v3737 = vpop.f32.mrf.mxu0
    %v3738 = vadd.f32 %v3609, %v3737
    %v3739 = vpop.f32.mrf.mxu0
    %v3740 = vadd.f32 %v3609, %v3739
    %3741 = vmatmul.bf16.gmra.mxu0 %v3666
    %v3742 = vpop.f32.mrf.mxu0
    %v3743 = vadd.f32 %v3609, %v3742
    %v3744 = vpop.f32.mrf.mxu0
    %v3745 = vadd.f32 %v3609, %v3744
    %3746 = vmatmul.bf16.gmra.mxu0 %v3669
    %v3747 = vpop.f32.mrf.mxu0
    %v3748 = vadd.f32 %v3609, %v3747
    %v3749 = vpop.f32.mrf.mxu0
    %v3750 = vadd.f32 %v3609, %v3749
    %3751 = vmatmul.bf16.gmra.mxu0 %v3672
    %v3752 = vpop.f32.mrf.mxu0
    %v3753 = vadd.f32 %v3609, %v3752
    %v3754 = vpop.f32.mrf.mxu0
    %v3755 = vadd.f32 %v3609, %v3754
    %3756 = vmatmul.bf16.gmra.mxu0 %v3675
    %v3757 = vpop.f32.mrf.mxu0
    %v3758 = vadd.f32 %v3609, %v3757
    %v3759 = vpop.f32.mrf.mxu0
    %v3760 = vadd.f32 %v3609, %v3759
    %3761 = vmatmul.bf16.gmra.mxu0 %v3678
    %v3762 = vpop.f32.mrf.mxu0
    %v3763 = vadd.f32 %v3609, %v3762
    %v3764 = vpop.f32.mrf.mxu0
    %v3765 = vadd.f32 %v3609, %v3764
    %3766 = vmatmul.bf16.gmra.mxu0 %v3681
    %v3767 = vpop.f32.mrf.mxu0
    %v3768 = vadd.f32 %v3609, %v3767
    %v3769 = vpop.f32.mrf.mxu0
    %v3770 = vadd.f32 %v3609, %v3769
    %3771 = vdwg.mxu0
    %v3772 = vpack.c.bf16 %v3693, %v3693
    %v3773 = vpack.c.bf16 %v3695, %v3695
    %v3774 = vpack.c.bf16 %v3698, %v3698
    %v3775 = vpack.c.bf16 %v3700, %v3700
    %v3776 = vpack.c.bf16 %v3703, %v3703
    %v3777 = vpack.c.bf16 %v3705, %v3705
    %v3778 = vpack.c.bf16 %v3708, %v3708
    %v3779 = vpack.c.bf16 %v3710, %v3710
    %v3780 = vpack.c.bf16 %v3713, %v3713
    %v3781 = vpack.c.bf16 %v3715, %v3715
    %v3782 = vpack.c.bf16 %v3718, %v3718
    %v3783 = vpack.c.bf16 %v3720, %v3720
    %v3784 = vpack.c.bf16 %v3723, %v3723
    %v3785 = vpack.c.bf16 %v3725, %v3725
    %v3786 = vpack.c.bf16 %v3728, %v3728
    %v3787 = vpack.c.bf16 %v3730, %v3730
    %v3788 = vpack.c.bf16 %v3733, %v3733
    %v3789 = vpack.c.bf16 %v3735, %v3735
    %v3790 = vpack.c.bf16 %v3738, %v3738
    %v3791 = vpack.c.bf16 %v3740, %v3740
    %v3792 = vpack.c.bf16 %v3743, %v3743
    %v3793 = vpack.c.bf16 %v3745, %v3745
    %v3794 = vpack.c.bf16 %v3748, %v3748
    %v3795 = vpack.c.bf16 %v3750, %v3750
    %v3796 = vpack.c.bf16 %v3753, %v3753
    %v3797 = vpack.c.bf16 %v3755, %v3755
    %v3798 = vpack.c.bf16 %v3758, %v3758
    %v3799 = vpack.c.bf16 %v3760, %v3760
    %v3800 = vpack.c.bf16 %v3763, %v3763
    %v3801 = vpack.c.bf16 %v3765, %v3765
    %v3802 = vpack.c.bf16 %v3768, %v3768
    %v3803 = vpack.c.bf16 %v3770, %v3770
    %v3836 = vunpack.c.l.b16 %v3772
    %v3837 = vunpack.c.l.b16 %v3773
    %v3838 = vunpack.c.l.b16 %v3774
    %v3839 = vunpack.c.l.b16 %v3775
    %v3840 = vunpack.c.l.b16 %v3776
    %v3841 = vunpack.c.l.b16 %v3777
    %v3842 = vunpack.c.l.b16 %v3778
    %v3843 = vunpack.c.l.b16 %v3779
    %v3844 = vunpack.c.l.b16 %v3780
    %v3845 = vunpack.c.l.b16 %v3781
    %v3846 = vunpack.c.l.b16 %v3782
    %v3847 = vunpack.c.l.b16 %v3783
    %v3848 = vunpack.c.l.b16 %v3784
    %v3849 = vunpack.c.l.b16 %v3785
    %v3850 = vunpack.c.l.b16 %v3786
    %v3851 = vunpack.c.l.b16 %v3787
    %v3852 = vunpack.c.l.b16 %v3788
    %v3853 = vunpack.c.l.b16 %v3789
    %v3854 = vunpack.c.l.b16 %v3790
    %v3855 = vunpack.c.l.b16 %v3791
    %v3856 = vunpack.c.l.b16 %v3792
    %v3857 = vunpack.c.l.b16 %v3793
    %v3858 = vunpack.c.l.b16 %v3794
    %v3859 = vunpack.c.l.b16 %v3795
    %v3860 = vunpack.c.l.b16 %v3796
    %v3861 = vunpack.c.l.b16 %v3797
    %v3862 = vunpack.c.l.b16 %v3798
    %v3863 = vunpack.c.l.b16 %v3799
    %v3864 = vunpack.c.l.b16 %v3800
    %v3865 = vunpack.c.l.b16 %v3801
    %v3866 = vunpack.c.l.b16 %v3802
    %v3867 = vunpack.c.l.b16 %v3803
    %v3868 = vpack.c.b16 %v3837, %v3836
    %v3869 = vpack.c.b16 %v3839, %v3838
    %v3870 = vpack.c.b16 %v3841, %v3840
    %v3871 = vpack.c.b16 %v3843, %v3842
    %v3872 = vpack.c.b16 %v3845, %v3844
    %v3873 = vpack.c.b16 %v3847, %v3846
    %v3874 = vpack.c.b16 %v3849, %v3848
    %v3875 = vpack.c.b16 %v3851, %v3850
    %v3876 = vpack.c.b16 %v3853, %v3852
    %v3877 = vpack.c.b16 %v3855, %v3854
    %v3878 = vpack.c.b16 %v3857, %v3856
    %v3879 = vpack.c.b16 %v3859, %v3858
    %v3880 = vpack.c.b16 %v3861, %v3860
    %v3881 = vpack.c.b16 %v3863, %v3862
    %v3882 = vpack.c.b16 %v3865, %v3864
    %v3883 = vpack.c.b16 %v3867, %v3866
    %3900 = vxpose.xlu0.c.b16.start [1/8] %v3868, 128
    %3901 = vxpose.xlu0.c.b16.cont [2/8] %v3869, 128
    %3902 = vxpose.xlu0.c.b16.cont [3/8] 0, 128
    %3903 = vxpose.xlu0.c.b16.cont [4/8] 0, 128
    %3904 = vxpose.xlu0.c.b16.cont [5/8] 0, 128
    %3905 = vxpose.xlu0.c.b16.cont [6/8] 0, 128
    %3906 = vxpose.xlu0.c.b16.cont [7/8] 0, 128
    %3907 = vxpose.xlu0.c.b16.end [8/8] 0, 128
    %v3908 = vpop.trf.xlu0
    %v3909 = vpop.trf.xlu0
    %v3910 = vpop.trf.xlu0
    %v3911 = vpop.trf.xlu0
    %v3912 = vpop.trf.xlu0
    %v3913 = vpop.trf.xlu0
    %v3914 = vpop.trf.xlu0
    %v3915 = vpop.trf.xlu0
    %3916 = vxpose.xlu0.c.b16.start [1/8] %v3870, 128
    %3917 = vxpose.xlu0.c.b16.cont [2/8] %v3871, 128
    %3918 = vxpose.xlu0.c.b16.cont [3/8] 0, 128
    %3919 = vxpose.xlu0.c.b16.cont [4/8] 0, 128
    %3920 = vxpose.xlu0.c.b16.cont [5/8] 0, 128
    %3921 = vxpose.xlu0.c.b16.cont [6/8] 0, 128
    %3922 = vxpose.xlu0.c.b16.cont [7/8] 0, 128
    %3923 = vxpose.xlu0.c.b16.end [8/8] 0, 128
    %v3924 = vpop.trf.xlu0
    %v3925 = vpop.trf.xlu0
    %v3926 = vpop.trf.xlu0
    %v3927 = vpop.trf.xlu0
    %v3928 = vpop.trf.xlu0
    %v3929 = vpop.trf.xlu0
    %v3930 = vpop.trf.xlu0
    %v3931 = vpop.trf.xlu0
    %3932 = vxpose.xlu0.c.b16.start [1/8] %v3872, 128
    %3933 = vxpose.xlu0.c.b16.cont [2/8] %v3873, 128
    %3934 = vxpose.xlu0.c.b16.cont [3/8] 0, 128
    %3935 = vxpose.xlu0.c.b16.cont [4/8] 0, 128
    %3936 = vxpose.xlu0.c.b16.cont [5/8] 0, 128
    %3937 = vxpose.xlu0.c.b16.cont [6/8] 0, 128
    %3938 = vxpose.xlu0.c.b16.cont [7/8] 0, 128
    %3939 = vxpose.xlu0.c.b16.end [8/8] 0, 128
    %v3940 = vpop.trf.xlu0
    %v3941 = vpop.trf.xlu0
    %v3942 = vpop.trf.xlu0
    %v3943 = vpop.trf.xlu0
    %v3944 = vpop.trf.xlu0
    %v3945 = vpop.trf.xlu0
    %v3946 = vpop.trf.xlu0
    %v3947 = vpop.trf.xlu0
    %3948 = vxpose.xlu0.c.b16.start [1/8] %v3874, 128
    %3949 = vxpose.xlu0.c.b16.cont [2/8] %v3875, 128
    %3950 = vxpose.xlu0.c.b16.cont [3/8] 0, 128
    %3951 = vxpose.xlu0.c.b16.cont [4/8] 0, 128
    %3952 = vxpose.xlu0.c.b16.cont [5/8] 0, 128
    %3953 = vxpose.xlu0.c.b16.cont [6/8] 0, 128
    %3954 = vxpose.xlu0.c.b16.cont [7/8] 0, 128
    %3955 = vxpose.xlu0.c.b16.end [8/8] 0, 128
    %v3956 = vpop.trf.xlu0
    %v3957 = vpop.trf.xlu0
    %v3958 = vpop.trf.xlu0
    %v3959 = vpop.trf.xlu0
    %v3960 = vpop.trf.xlu0
    %v3961 = vpop.trf.xlu0
    %v3962 = vpop.trf.xlu0
    %v3963 = vpop.trf.xlu0
    %3964 = vxpose.xlu0.c.b16.start [1/8] %v3876, 128
    %3965 = vxpose.xlu0.c.b16.cont [2/8] %v3877, 128
    %3966 = vxpose.xlu0.c.b16.cont [3/8] 0, 128
    %3967 = vxpose.xlu0.c.b16.cont [4/8] 0, 128
    %3968 = vxpose.xlu0.c.b16.cont [5/8] 0, 128
    %3969 = vxpose.xlu0.c.b16.cont [6/8] 0, 128
    %3970 = vxpose.xlu0.c.b16.cont [7/8] 0, 128
    %3971 = vxpose.xlu0.c.b16.end [8/8] 0, 128
    %v3972 = vpop.trf.xlu0
    %v3973 = vpop.trf.xlu0
    %v3974 = vpop.trf.xlu0
    %v3975 = vpop.trf.xlu0
    %v3976 = vpop.trf.xlu0
    %v3977 = vpop.trf.xlu0
    %v3978 = vpop.trf.xlu0
    %v3979 = vpop.trf.xlu0
    %3980 = vxpose.xlu0.c.b16.start [1/8] %v3878, 128
    %3981 = vxpose.xlu0.c.b16.cont [2/8] %v3879, 128
    %3982 = vxpose.xlu0.c.b16.cont [3/8] 0, 128
    %3983 = vxpose.xlu0.c.b16.cont [4/8] 0, 128
    %3984 = vxpose.xlu0.c.b16.cont [5/8] 0, 128
    %3985 = vxpose.xlu0.c.b16.cont [6/8] 0, 128
    %3986 = vxpose.xlu0.c.b16.cont [7/8] 0, 128
    %3987 = vxpose.xlu0.c.b16.end [8/8] 0, 128
    %v3988 = vpop.trf.xlu0
    %v3989 = vpop.trf.xlu0
    %v3990 = vpop.trf.xlu0
    %v3991 = vpop.trf.xlu0
    %v3992 = vpop.trf.xlu0
    %v3993 = vpop.trf.xlu0
    %v3994 = vpop.trf.xlu0
    %v3995 = vpop.trf.xlu0
    %3996 = vxpose.xlu0.c.b16.start [1/8] %v3880, 128
    %3997 = vxpose.xlu0.c.b16.cont [2/8] %v3881, 128
    %3998 = vxpose.xlu0.c.b16.cont [3/8] 0, 128
    %3999 = vxpose.xlu0.c.b16.cont [4/8] 0, 128
    %4000 = vxpose.xlu0.c.b16.cont [5/8] 0, 128
    %4001 = vxpose.xlu0.c.b16.cont [6/8] 0, 128
    %4002 = vxpose.xlu0.c.b16.cont [7/8] 0, 128
    %4003 = vxpose.xlu0.c.b16.end [8/8] 0, 128
    %v4004 = vpop.trf.xlu0
    %v4005 = vpop.trf.xlu0
    %v4006 = vpop.trf.xlu0
    %v4007 = vpop.trf.xlu0
    %v4008 = vpop.trf.xlu0
    %v4009 = vpop.trf.xlu0
    %v4010 = vpop.trf.xlu0
    %v4011 = vpop.trf.xlu0
    %4012 = vxpose.xlu0.c.b16.start [1/8] %v3882, 128
    %4013 = vxpose.xlu0.c.b16.cont [2/8] %v3883, 128
    %4014 = vxpose.xlu0.c.b16.cont [3/8] 0, 128
    %4015 = vxpose.xlu0.c.b16.cont [4/8] 0, 128
    %4016 = vxpose.xlu0.c.b16.cont [5/8] 0, 128
    %4017 = vxpose.xlu0.c.b16.cont [6/8] 0, 128
    %4018 = vxpose.xlu0.c.b16.cont [7/8] 0, 128
    %4019 = vxpose.xlu0.c.b16.end [8/8] 0, 128
    %v4020 = vpop.trf.xlu0
    %v4021 = vpop.trf.xlu0
    %v4022 = vpop.trf.xlu0
    %v4023 = vpop.trf.xlu0
    %v4024 = vpop.trf.xlu0
    %v4025 = vpop.trf.xlu0
    %v4026 = vpop.trf.xlu0
    %v4027 = vpop.trf.xlu0
    %s4028 = scalar_lea.vmem %s9, 1
    %v4029 = vld [vmem:[%s4028] sm:$0x1]
    %s4030 = scalar_lea.vmem %s10, 1
    %v4031 = vld [vmem:[%s4030] sm:$0x1]
    %v4032 = vunpack.c.l.bf16 %v3908
    %v4033 = vunpack.c.h.bf16 %v3908
    %v4034 = vunpack.c.l.bf16 %v3924
    %v4035 = vunpack.c.h.bf16 %v3924
    %v4036 = vunpack.c.l.bf16 %v3940
    %v4037 = vunpack.c.h.bf16 %v3940
    %v4038 = vunpack.c.l.bf16 %v3956
    %v4039 = vunpack.c.h.bf16 %v3956
    %v4040 = vunpack.c.l.bf16 %v3972
    %v4041 = vunpack.c.h.bf16 %v3972
    %v4042 = vunpack.c.l.bf16 %v3988
    %v4043 = vunpack.c.h.bf16 %v3988
    %v4044 = vunpack.c.l.bf16 %v4004
    %v4045 = vunpack.c.h.bf16 %v4004
    %v4046 = vunpack.c.l.bf16 %v4020
    %v4047 = vunpack.c.h.bf16 %v4020
    %v4048 = vsel %vm224, %v4032, 0.0
    %4049 = vadd.xlane.f32.xlu0 %v4048
    %v4050 = vpop.xlane.xlu0 %4049
    %v4051 = vsel %vm224, %v4033, 0.0
    %4052 = vadd.xlane.f32.xlu0 %v4051
    %v4053 = vpop.xlane.xlu0 %4052
    %v4054 = vsel %vm224, %v4034, 0.0
    %4055 = vadd.xlane.f32.xlu0 %v4054
    %v4056 = vpop.xlane.xlu0 %4055
    %v4057 = vsel %vm224, %v4035, 0.0
    %4058 = vadd.xlane.f32.xlu0 %v4057
    %v4059 = vpop.xlane.xlu0 %4058
    %v4060 = vsel %vm224, %v4036, 0.0
    %4061 = vadd.xlane.f32.xlu0 %v4060
    %v4062 = vpop.xlane.xlu0 %4061
    %v4063 = vsel %vm224, %v4037, 0.0
    %4064 = vadd.xlane.f32.xlu0 %v4063
    %v4065 = vpop.xlane.xlu0 %4064
    %v4066 = vsel %vm224, %v4038, 0.0
    %4067 = vadd.xlane.f32.xlu0 %v4066
    %v4068 = vpop.xlane.xlu0 %4067
    %v4069 = vsel %vm224, %v4039, 0.0
    %4070 = vadd.xlane.f32.xlu0 %v4069
    %v4071 = vpop.xlane.xlu0 %4070
    %v4072 = vsel %vm224, %v4040, 0.0
    %4073 = vadd.xlane.f32.xlu0 %v4072
    %v4074 = vpop.xlane.xlu0 %4073
    %v4075 = vsel %vm224, %v4041, 0.0
    %4076 = vadd.xlane.f32.xlu0 %v4075
    %v4077 = vpop.xlane.xlu0 %4076
    %v4078 = vsel %vm224, %v4042, 0.0
    %4079 = vadd.xlane.f32.xlu0 %v4078
    %v4080 = vpop.xlane.xlu0 %4079
    %v4081 = vsel %vm224, %v4043, 0.0
    %4082 = vadd.xlane.f32.xlu0 %v4081
    %v4083 = vpop.xlane.xlu0 %4082
    %v4084 = vsel %vm224, %v4044, 0.0
    %4085 = vadd.xlane.f32.xlu0 %v4084
    %v4086 = vpop.xlane.xlu0 %4085
    %v4087 = vsel %vm224, %v4045, 0.0
    %4088 = vadd.xlane.f32.xlu0 %v4087
    %v4089 = vpop.xlane.xlu0 %4088
    %v4090 = vsel %vm224, %v4046, 0.0
    %4091 = vadd.xlane.f32.xlu0 %v4090
    %v4092 = vpop.xlane.xlu0 %4091
    %v4093 = vsel %vm224, %v4047, 0.0
    %4094 = vadd.xlane.f32.xlu0 %v4093
    %v4095 = vpop.xlane.xlu0 %4094
    %v4096 = vmul.f32 %v4050, %v279
    %v4097 = vmul.f32 %v4053, %v279
    %v4098 = vmul.f32 %v4056, %v279
    %v4099 = vmul.f32 %v4059, %v279
    %v4100 = vmul.f32 %v4062, %v279
    %v4101 = vmul.f32 %v4065, %v279
    %v4102 = vmul.f32 %v4068, %v279
    %v4103 = vmul.f32 %v4071, %v279
    %v4104 = vmul.f32 %v4074, %v279
    %v4105 = vmul.f32 %v4077, %v279
    %v4106 = vmul.f32 %v4080, %v279
    %v4107 = vmul.f32 %v4083, %v279
    %v4108 = vmul.f32 %v4086, %v279
    %v4109 = vmul.f32 %v4089, %v279
    %v4110 = vmul.f32 %v4092, %v279
    %v4111 = vmul.f32 %v4095, %v279
    %v4112 = vmul.f32 %v4032, %v4032
    %v4113 = vmul.f32 %v4033, %v4033
    %v4114 = vmul.f32 %v4034, %v4034
    %v4115 = vmul.f32 %v4035, %v4035
    %v4116 = vmul.f32 %v4036, %v4036
    %v4117 = vmul.f32 %v4037, %v4037
    %v4118 = vmul.f32 %v4038, %v4038
    %v4119 = vmul.f32 %v4039, %v4039
    %v4120 = vmul.f32 %v4040, %v4040
    %v4121 = vmul.f32 %v4041, %v4041
    %v4122 = vmul.f32 %v4042, %v4042
    %v4123 = vmul.f32 %v4043, %v4043
    %v4124 = vmul.f32 %v4044, %v4044
    %v4125 = vmul.f32 %v4045, %v4045
    %v4126 = vmul.f32 %v4046, %v4046
    %v4127 = vmul.f32 %v4047, %v4047
    %v4128 = vsel %vm224, %v4112, 0.0
    %4129 = vadd.xlane.f32.xlu0 %v4128
    %v4130 = vpop.xlane.xlu0 %4129
    %v4131 = vsel %vm224, %v4113, 0.0
    %4132 = vadd.xlane.f32.xlu0 %v4131
    %v4133 = vpop.xlane.xlu0 %4132
    %v4134 = vsel %vm224, %v4114, 0.0
    %4135 = vadd.xlane.f32.xlu0 %v4134
    %v4136 = vpop.xlane.xlu0 %4135
    %v4137 = vsel %vm224, %v4115, 0.0
    %4138 = vadd.xlane.f32.xlu0 %v4137
    %v4139 = vpop.xlane.xlu0 %4138
    %v4140 = vsel %vm224, %v4116, 0.0
    %4141 = vadd.xlane.f32.xlu0 %v4140
    %v4142 = vpop.xlane.xlu0 %4141
    %v4143 = vsel %vm224, %v4117, 0.0
    %4144 = vadd.xlane.f32.xlu0 %v4143
    %v4145 = vpop.xlane.xlu0 %4144
    %v4146 = vsel %vm224, %v4118, 0.0
    %4147 = vadd.xlane.f32.xlu0 %v4146
    %v4148 = vpop.xlane.xlu0 %4147
    %v4149 = vsel %vm224, %v4119, 0.0
    %4150 = vadd.xlane.f32.xlu0 %v4149
    %v4151 = vpop.xlane.xlu0 %4150
    %v4152 = vsel %vm224, %v4120, 0.0
    %4153 = vadd.xlane.f32.xlu0 %v4152
    %v4154 = vpop.xlane.xlu0 %4153
    %v4155 = vsel %vm224, %v4121, 0.0
    %4156 = vadd.xlane.f32.xlu0 %v4155
    %v4157 = vpop.xlane.xlu0 %4156
    %v4158 = vsel %vm224, %v4122, 0.0
    %4159 = vadd.xlane.f32.xlu0 %v4158
    %v4160 = vpop.xlane.xlu0 %4159
    %v4161 = vsel %vm224, %v4123, 0.0
    %4162 = vadd.xlane.f32.xlu0 %v4161
    %v4163 = vpop.xlane.xlu0 %4162
    %v4164 = vsel %vm224, %v4124, 0.0
    %4165 = vadd.xlane.f32.xlu0 %v4164
    %v4166 = vpop.xlane.xlu0 %4165
    %v4167 = vsel %vm224, %v4125, 0.0
    %4168 = vadd.xlane.f32.xlu0 %v4167
    %v4169 = vpop.xlane.xlu0 %4168
    %v4170 = vsel %vm224, %v4126, 0.0
    %4171 = vadd.xlane.f32.xlu0 %v4170
    %v4172 = vpop.xlane.xlu0 %4171
    %v4173 = vsel %vm224, %v4127, 0.0
    %4174 = vadd.xlane.f32.xlu0 %v4173
    %v4175 = vpop.xlane.xlu0 %4174
    %v4176 = vmul.f32 %v4130, %v279
    %v4177 = vmul.f32 %v4133, %v279
    %v4178 = vmul.f32 %v4136, %v279
    %v4179 = vmul.f32 %v4139, %v279
    %v4180 = vmul.f32 %v4142, %v279
    %v4181 = vmul.f32 %v4145, %v279
    %v4182 = vmul.f32 %v4148, %v279
    %v4183 = vmul.f32 %v4151, %v279
    %v4184 = vmul.f32 %v4154, %v279
    %v4185 = vmul.f32 %v4157, %v279
    %v4186 = vmul.f32 %v4160, %v279
    %v4187 = vmul.f32 %v4163, %v279
    %v4188 = vmul.f32 %v4166, %v279
    %v4189 = vmul.f32 %v4169, %v279
    %v4190 = vmul.f32 %v4172, %v279
    %v4191 = vmul.f32 %v4175, %v279
    %v4192 = vmul.f32 %v4096, %v4096
    %v4193 = vmul.f32 %v4097, %v4097
    %v4194 = vmul.f32 %v4098, %v4098
    %v4195 = vmul.f32 %v4099, %v4099
    %v4196 = vmul.f32 %v4100, %v4100
    %v4197 = vmul.f32 %v4101, %v4101
    %v4198 = vmul.f32 %v4102, %v4102
    %v4199 = vmul.f32 %v4103, %v4103
    %v4200 = vmul.f32 %v4104, %v4104
    %v4201 = vmul.f32 %v4105, %v4105
    %v4202 = vmul.f32 %v4106, %v4106
    %v4203 = vmul.f32 %v4107, %v4107
    %v4204 = vmul.f32 %v4108, %v4108
    %v4205 = vmul.f32 %v4109, %v4109
    %v4206 = vmul.f32 %v4110, %v4110
    %v4207 = vmul.f32 %v4111, %v4111
    %v4208 = vsub.f32 %v4176, %v4192
    %v4209 = vsub.f32 %v4177, %v4193
    %v4210 = vsub.f32 %v4178, %v4194
    %v4211 = vsub.f32 %v4179, %v4195
    %v4212 = vsub.f32 %v4180, %v4196
    %v4213 = vsub.f32 %v4181, %v4197
    %v4214 = vsub.f32 %v4182, %v4198
    %v4215 = vsub.f32 %v4183, %v4199
    %v4216 = vsub.f32 %v4184, %v4200
    %v4217 = vsub.f32 %v4185, %v4201
    %v4218 = vsub.f32 %v4186, %v4202
    %v4219 = vsub.f32 %v4187, %v4203
    %v4220 = vsub.f32 %v4188, %v4204
    %v4221 = vsub.f32 %v4189, %v4205
    %v4222 = vsub.f32 %v4190, %v4206
    %v4223 = vsub.f32 %v4191, %v4207
    %v4224 = vsub.f32 %v4032, %v4096
    %v4225 = vsub.f32 %v4033, %v4097
    %v4226 = vsub.f32 %v4034, %v4098
    %v4227 = vsub.f32 %v4035, %v4099
    %v4228 = vsub.f32 %v4036, %v4100
    %v4229 = vsub.f32 %v4037, %v4101
    %v4230 = vsub.f32 %v4038, %v4102
    %v4231 = vsub.f32 %v4039, %v4103
    %v4232 = vsub.f32 %v4040, %v4104
    %v4233 = vsub.f32 %v4041, %v4105
    %v4234 = vsub.f32 %v4042, %v4106
    %v4235 = vsub.f32 %v4043, %v4107
    %v4236 = vsub.f32 %v4044, %v4108
    %v4237 = vsub.f32 %v4045, %v4109
    %v4238 = vsub.f32 %v4046, %v4110
    %v4239 = vsub.f32 %v4047, %v4111
    %v4240 = vadd.f32 %v4208, 1e-05
    %v4241 = vadd.f32 %v4209, 1e-05
    %v4242 = vadd.f32 %v4210, 1e-05
    %v4243 = vadd.f32 %v4211, 1e-05
    %v4244 = vadd.f32 %v4212, 1e-05
    %v4245 = vadd.f32 %v4213, 1e-05
    %v4246 = vadd.f32 %v4214, 1e-05
    %v4247 = vadd.f32 %v4215, 1e-05
    %v4248 = vadd.f32 %v4216, 1e-05
    %v4249 = vadd.f32 %v4217, 1e-05
    %v4250 = vadd.f32 %v4218, 1e-05
    %v4251 = vadd.f32 %v4219, 1e-05
    %v4252 = vadd.f32 %v4220, 1e-05
    %v4253 = vadd.f32 %v4221, 1e-05
    %v4254 = vadd.f32 %v4222, 1e-05
    %v4255 = vadd.f32 %v4223, 1e-05
    %v4256 = vrsqrt.pop %v4240
    %v4257 = vmul.f32 %v4256, %v4240
    %v4258 = vmul.f32 %v4257, %v4256
    %v4259 = vmul.f32 0.5, %v4258
    %v4260 = vsub.f32 1.5, %v4259
    %v4261 = vmul.f32 %v4256, %v4260
    %vm4262 = vweird.f32 %v4240
    %vm4263 = vweird.f32 %v4256
    %vm4264 = vmor %vm4262, %vm4263
    %v4265 = vsel %vm4264, %v4256, %v4261
    %v4266 = vrsqrt.pop %v4241
    %v4267 = vmul.f32 %v4266, %v4241
    %v4268 = vmul.f32 %v4267, %v4266
    %v4269 = vmul.f32 0.5, %v4268
    %v4270 = vsub.f32 1.5, %v4269
    %v4271 = vmul.f32 %v4266, %v4270
    %vm4272 = vweird.f32 %v4241
    %vm4273 = vweird.f32 %v4266
    %vm4274 = vmor %vm4272, %vm4273
    %v4275 = vsel %vm4274, %v4266, %v4271
    %v4276 = vrsqrt.pop %v4242
    %v4277 = vmul.f32 %v4276, %v4242
    %v4278 = vmul.f32 %v4277, %v4276
    %v4279 = vmul.f32 0.5, %v4278
    %v4280 = vsub.f32 1.5, %v4279
    %v4281 = vmul.f32 %v4276, %v4280
    %vm4282 = vweird.f32 %v4242
    %vm4283 = vweird.f32 %v4276
    %vm4284 = vmor %vm4282, %vm4283
    %v4285 = vsel %vm4284, %v4276, %v4281
    %v4286 = vrsqrt.pop %v4243
    %v4287 = vmul.f32 %v4286, %v4243
    %v4288 = vmul.f32 %v4287, %v4286
    %v4289 = vmul.f32 0.5, %v4288
    %v4290 = vsub.f32 1.5, %v4289
    %v4291 = vmul.f32 %v4286, %v4290
    %vm4292 = vweird.f32 %v4243
    %vm4293 = vweird.f32 %v4286
    %vm4294 = vmor %vm4292, %vm4293
    %v4295 = vsel %vm4294, %v4286, %v4291
    %v4296 = vrsqrt.pop %v4244
    %v4297 = vmul.f32 %v4296, %v4244
    %v4298 = vmul.f32 %v4297, %v4296
    %v4299 = vmul.f32 0.5, %v4298
    %v4300 = vsub.f32 1.5, %v4299
    %v4301 = vmul.f32 %v4296, %v4300
    %vm4302 = vweird.f32 %v4244
    %vm4303 = vweird.f32 %v4296
    %vm4304 = vmor %vm4302, %vm4303
    %v4305 = vsel %vm4304, %v4296, %v4301
    %v4306 = vrsqrt.pop %v4245
    %v4307 = vmul.f32 %v4306, %v4245
    %v4308 = vmul.f32 %v4307, %v4306
    %v4309 = vmul.f32 0.5, %v4308
    %v4310 = vsub.f32 1.5, %v4309
    %v4311 = vmul.f32 %v4306, %v4310
    %vm4312 = vweird.f32 %v4245
    %vm4313 = vweird.f32 %v4306
    %vm4314 = vmor %vm4312, %vm4313
    %v4315 = vsel %vm4314, %v4306, %v4311
    %v4316 = vrsqrt.pop %v4246
    %v4317 = vmul.f32 %v4316, %v4246
    %v4318 = vmul.f32 %v4317, %v4316
    %v4319 = vmul.f32 0.5, %v4318
    %v4320 = vsub.f32 1.5, %v4319
    %v4321 = vmul.f32 %v4316, %v4320
    %vm4322 = vweird.f32 %v4246
    %vm4323 = vweird.f32 %v4316
    %vm4324 = vmor %vm4322, %vm4323
    %v4325 = vsel %vm4324, %v4316, %v4321
    %v4326 = vrsqrt.pop %v4247
    %v4327 = vmul.f32 %v4326, %v4247
    %v4328 = vmul.f32 %v4327, %v4326
    %v4329 = vmul.f32 0.5, %v4328
    %v4330 = vsub.f32 1.5, %v4329
    %v4331 = vmul.f32 %v4326, %v4330
    %vm4332 = vweird.f32 %v4247
    %vm4333 = vweird.f32 %v4326
    %vm4334 = vmor %vm4332, %vm4333
    %v4335 = vsel %vm4334, %v4326, %v4331
    %v4336 = vrsqrt.pop %v4248
    %v4337 = vmul.f32 %v4336, %v4248
    %v4338 = vmul.f32 %v4337, %v4336
    %v4339 = vmul.f32 0.5, %v4338
    %v4340 = vsub.f32 1.5, %v4339
    %v4341 = vmul.f32 %v4336, %v4340
    %vm4342 = vweird.f32 %v4248
    %vm4343 = vweird.f32 %v4336
    %vm4344 = vmor %vm4342, %vm4343
    %v4345 = vsel %vm4344, %v4336, %v4341
    %v4346 = vrsqrt.pop %v4249
    %v4347 = vmul.f32 %v4346, %v4249
    %v4348 = vmul.f32 %v4347, %v4346
    %v4349 = vmul.f32 0.5, %v4348
    %v4350 = vsub.f32 1.5, %v4349
    %v4351 = vmul.f32 %v4346, %v4350
    %vm4352 = vweird.f32 %v4249
    %vm4353 = vweird.f32 %v4346
    %vm4354 = vmor %vm4352, %vm4353
    %v4355 = vsel %vm4354, %v4346, %v4351
    %v4356 = vrsqrt.pop %v4250
    %v4357 = vmul.f32 %v4356, %v4250
    %v4358 = vmul.f32 %v4357, %v4356
    %v4359 = vmul.f32 0.5, %v4358
    %v4360 = vsub.f32 1.5, %v4359
    %v4361 = vmul.f32 %v4356, %v4360
    %vm4362 = vweird.f32 %v4250
    %vm4363 = vweird.f32 %v4356
    %vm4364 = vmor %vm4362, %vm4363
    %v4365 = vsel %vm4364, %v4356, %v4361
    %v4366 = vrsqrt.pop %v4251
    %v4367 = vmul.f32 %v4366, %v4251
    %v4368 = vmul.f32 %v4367, %v4366
    %v4369 = vmul.f32 0.5, %v4368
    %v4370 = vsub.f32 1.5, %v4369
    %v4371 = vmul.f32 %v4366, %v4370
    %vm4372 = vweird.f32 %v4251
    %vm4373 = vweird.f32 %v4366
    %vm4374 = vmor %vm4372, %vm4373
    %v4375 = vsel %vm4374, %v4366, %v4371
    %v4376 = vrsqrt.pop %v4252
    %v4377 = vmul.f32 %v4376, %v4252
    %v4378 = vmul.f32 %v4377, %v4376
    %v4379 = vmul.f32 0.5, %v4378
    %v4380 = vsub.f32 1.5, %v4379
    %v4381 = vmul.f32 %v4376, %v4380
    %vm4382 = vweird.f32 %v4252
    %vm4383 = vweird.f32 %v4376
    %vm4384 = vmor %vm4382, %vm4383
    %v4385 = vsel %vm4384, %v4376, %v4381
    %v4386 = vrsqrt.pop %v4253
    %v4387 = vmul.f32 %v4386, %v4253
    %v4388 = vmul.f32 %v4387, %v4386
    %v4389 = vmul.f32 0.5, %v4388
    %v4390 = vsub.f32 1.5, %v4389
    %v4391 = vmul.f32 %v4386, %v4390
    %vm4392 = vweird.f32 %v4253
    %vm4393 = vweird.f32 %v4386
    %vm4394 = vmor %vm4392, %vm4393
    %v4395 = vsel %vm4394, %v4386, %v4391
    %v4396 = vrsqrt.pop %v4254
    %v4397 = vmul.f32 %v4396, %v4254
    %v4398 = vmul.f32 %v4397, %v4396
    %v4399 = vmul.f32 0.5, %v4398
    %v4400 = vsub.f32 1.5, %v4399
    %v4401 = vmul.f32 %v4396, %v4400
    %vm4402 = vweird.f32 %v4254
    %vm4403 = vweird.f32 %v4396
    %vm4404 = vmor %vm4402, %vm4403
    %v4405 = vsel %vm4404, %v4396, %v4401
    %v4406 = vrsqrt.pop %v4255
    %v4407 = vmul.f32 %v4406, %v4255
    %v4408 = vmul.f32 %v4407, %v4406
    %v4409 = vmul.f32 0.5, %v4408
    %v4410 = vsub.f32 1.5, %v4409
    %v4411 = vmul.f32 %v4406, %v4410
    %vm4412 = vweird.f32 %v4255
    %vm4413 = vweird.f32 %v4406
    %vm4414 = vmor %vm4412, %vm4413
    %v4415 = vsel %vm4414, %v4406, %v4411
    %v4416 = vmul.f32 %v4224, %v4265
    %v4417 = vmul.f32 %v4225, %v4275
    %v4418 = vmul.f32 %v4226, %v4285
    %v4419 = vmul.f32 %v4227, %v4295
    %v4420 = vmul.f32 %v4228, %v4305
    %v4421 = vmul.f32 %v4229, %v4315
    %v4422 = vmul.f32 %v4230, %v4325
    %v4423 = vmul.f32 %v4231, %v4335
    %v4424 = vmul.f32 %v4232, %v4345
    %v4425 = vmul.f32 %v4233, %v4355
    %v4426 = vmul.f32 %v4234, %v4365
    %v4427 = vmul.f32 %v4235, %v4375
    %v4428 = vmul.f32 %v4236, %v4385
    %v4429 = vmul.f32 %v4237, %v4395
    %v4430 = vmul.f32 %v4238, %v4405
    %v4431 = vmul.f32 %v4239, %v4415
    %v4433 = vperm.slane %v4029, 0
    %v4435 = vmul.f32 %v4416, %v4433
    %v4436 = vmul.f32 %v4417, %v4433
    %v4437 = vmul.f32 %v4418, %v4433
    %v4438 = vmul.f32 %v4419, %v4433
    %v4439 = vmul.f32 %v4420, %v4433
    %v4440 = vmul.f32 %v4421, %v4433
    %v4441 = vmul.f32 %v4422, %v4433
    %v4442 = vmul.f32 %v4423, %v4433
    %v4443 = vmul.f32 %v4424, %v4433
    %v4444 = vmul.f32 %v4425, %v4433
    %v4445 = vmul.f32 %v4426, %v4433
    %v4446 = vmul.f32 %v4427, %v4433
    %v4447 = vmul.f32 %v4428, %v4433
    %v4448 = vmul.f32 %v4429, %v4433
    %v4449 = vmul.f32 %v4430, %v4433
    %v4450 = vmul.f32 %v4431, %v4433
    %v4452 = vperm.slane %v4031, 0
    %v4454 = vadd.f32 %v4435, %v4452
    %v4455 = vadd.f32 %v4436, %v4452
    %v4456 = vadd.f32 %v4437, %v4452
    %v4457 = vadd.f32 %v4438, %v4452
    %v4458 = vadd.f32 %v4439, %v4452
    %v4459 = vadd.f32 %v4440, %v4452
    %v4460 = vadd.f32 %v4441, %v4452
    %v4461 = vadd.f32 %v4442, %v4452
    %v4462 = vadd.f32 %v4443, %v4452
    %v4463 = vadd.f32 %v4444, %v4452
    %v4464 = vadd.f32 %v4445, %v4452
    %v4465 = vadd.f32 %v4446, %v4452
    %v4466 = vadd.f32 %v4447, %v4452
    %v4467 = vadd.f32 %v4448, %v4452
    %v4468 = vadd.f32 %v4449, %v4452
    %v4469 = vadd.f32 %v4450, %v4452
    %v4470 = vpack.c.bf16 %v4455, %v4454
    %v4471 = vpack.c.bf16 %v4457, %v4456
    %v4472 = vpack.c.bf16 %v4459, %v4458
    %v4473 = vpack.c.bf16 %v4461, %v4460
    %v4474 = vpack.c.bf16 %v4463, %v4462
    %v4475 = vpack.c.bf16 %v4465, %v4464
    %v4476 = vpack.c.bf16 %v4467, %v4466
    %v4477 = vpack.c.bf16 %v4469, %v4468
    %s4478 = scalar_lea.vmem %s11, 16
    %v4479 = vld [vmem:[%s4478] sm:$0xf]
    %v4480 = vld [vmem:[%s4478 + $0x4] sm:$0xf]
    %v4481 = vld [vmem:[%s4478 + $0x8] sm:$0xf]
    %v4482 = vld [vmem:[%s4478 + $0xc] sm:$0xf]
    %s4483 = scalar_lea.vmem %s12, 1
    %v4484 = vld [vmem:[%s4483] sm:$0x1]
    %v4486 = vperm.slane %v4484, 0
    %v4492 = vunpack.c.l.b16 %v4479
    %v4493 = vunpack.c.l.b16 %v4480
    %v4494 = vunpack.c.l.b16 %v4481
    %v4495 = vunpack.c.l.b16 %v4482
    %v4496 = vpack.c.b16 %v4493, %v4492
    %v4497 = vpack.c.b16 %v4495, %v4494
    %v4501 = vsel %vm224, %v4470, 0
    %v4504 = vsel %vm224, %v4471, 0
    %v4507 = vsel %vm224, %v4472, 0
    %v4510 = vsel %vm224, %v4473, 0
    %v4513 = vsel %vm224, %v4474, 0
    %v4516 = vsel %vm224, %v4475, 0
    %v4519 = vsel %vm224, %v4476, 0
    %v4522 = vsel %vm224, %v4477, 0
    %4524 = vmatpush.bf16.msra.mxu0 0
    %4525 = vmatpush.bf16.msra.mxu0 0
    %4526 = vmatpush.bf16.msra.mxu0 0
    %4527 = vmatpush.bf16.msra.mxu0 0
    %4528 = vmatpush.bf16.msra.mxu0 0
    %4529 = vmatpush.bf16.msra.mxu0 0
    %4530 = vmatpush.bf16.msra.mxu0 %v4497
    %4531 = vmatpush.bf16.msra.mxu0 %v4496
    %4532 = vmatmul.bf16.gmra.mxu0 %v4501
    %v4533 = vpop.f32.mrf.mxu0
    %v4534 = vadd.f32 %v4486, %v4533
    %v4535 = vpop.f32.mrf.mxu0
    %v4536 = vadd.f32 %v4486, %v4535
    %4537 = vmatmul.bf16.gmra.mxu0 %v4504
    %v4538 = vpop.f32.mrf.mxu0
    %v4539 = vadd.f32 %v4486, %v4538
    %v4540 = vpop.f32.mrf.mxu0
    %v4541 = vadd.f32 %v4486, %v4540
    %4542 = vmatmul.bf16.gmra.mxu0 %v4507
    %v4543 = vpop.f32.mrf.mxu0
    %v4544 = vadd.f32 %v4486, %v4543
    %v4545 = vpop.f32.mrf.mxu0
    %v4546 = vadd.f32 %v4486, %v4545
    %4547 = vmatmul.bf16.gmra.mxu0 %v4510
    %v4548 = vpop.f32.mrf.mxu0
    %v4549 = vadd.f32 %v4486, %v4548
    %v4550 = vpop.f32.mrf.mxu0
    %v4551 = vadd.f32 %v4486, %v4550
    %4552 = vmatmul.bf16.gmra.mxu0 %v4513
    %v4553 = vpop.f32.mrf.mxu0
    %v4554 = vadd.f32 %v4486, %v4553
    %v4555 = vpop.f32.mrf.mxu0
    %v4556 = vadd.f32 %v4486, %v4555
    %4557 = vmatmul.bf16.gmra.mxu0 %v4516
    %v4558 = vpop.f32.mrf.mxu0
    %v4559 = vadd.f32 %v4486, %v4558
    %v4560 = vpop.f32.mrf.mxu0
    %v4561 = vadd.f32 %v4486, %v4560
    %4562 = vmatmul.bf16.gmra.mxu0 %v4519
    %v4563 = vpop.f32.mrf.mxu0
    %v4564 = vadd.f32 %v4486, %v4563
    %v4565 = vpop.f32.mrf.mxu0
    %v4566 = vadd.f32 %v4486, %v4565
    %4567 = vmatmul.bf16.gmra.mxu0 %v4522
    %v4568 = vpop.f32.mrf.mxu0
    %v4569 = vadd.f32 %v4486, %v4568
    %v4570 = vpop.f32.mrf.mxu0
    %v4571 = vadd.f32 %v4486, %v4570
    %4572 = vdwg.mxu0
    %v4573 = vmul.f32 %v4534, 0.5
    %v4574 = vmul.f32 %v4536, 0.5
    %v4575 = vmul.f32 %v4539, 0.5
    %v4576 = vmul.f32 %v4541, 0.5
    %v4577 = vmul.f32 %v4544, 0.5
    %v4578 = vmul.f32 %v4546, 0.5
    %v4579 = vmul.f32 %v4549, 0.5
    %v4580 = vmul.f32 %v4551, 0.5
    %v4581 = vmul.f32 %v4554, 0.5
    %v4582 = vmul.f32 %v4556, 0.5
    %v4583 = vmul.f32 %v4559, 0.5
    %v4584 = vmul.f32 %v4561, 0.5
    %v4585 = vmul.f32 %v4564, 0.5
    %v4586 = vmul.f32 %v4566, 0.5
    %v4587 = vmul.f32 %v4569, 0.5
    %v4588 = vmul.f32 %v4571, 0.5
    %v4589 = vmul.f32 %v4534, 0.044715
    %v4590 = vmul.f32 %v4536, 0.044715
    %v4591 = vmul.f32 %v4539, 0.044715
    %v4592 = vmul.f32 %v4541, 0.044715
    %v4593 = vmul.f32 %v4544, 0.044715
    %v4594 = vmul.f32 %v4546, 0.044715
    %v4595 = vmul.f32 %v4549, 0.044715
    %v4596 = vmul.f32 %v4551, 0.044715
    %v4597 = vmul.f32 %v4554, 0.044715
    %v4598 = vmul.f32 %v4556, 0.044715
    %v4599 = vmul.f32 %v4559, 0.044715
    %v4600 = vmul.f32 %v4561, 0.044715
    %v4601 = vmul.f32 %v4564, 0.044715
    %v4602 = vmul.f32 %v4566, 0.044715
    %v4603 = vmul.f32 %v4569, 0.044715
    %v4604 = vmul.f32 %v4571, 0.044715
    %v4605 = vmul.f32 %v4589, %v4534
    %v4606 = vmul.f32 %v4590, %v4536
    %v4607 = vmul.f32 %v4591, %v4539
    %v4608 = vmul.f32 %v4592, %v4541
    %v4609 = vmul.f32 %v4593, %v4544
    %v4610 = vmul.f32 %v4594, %v4546
    %v4611 = vmul.f32 %v4595, %v4549
    %v4612 = vmul.f32 %v4596, %v4551
    %v4613 = vmul.f32 %v4597, %v4554
    %v4614 = vmul.f32 %v4598, %v4556
    %v4615 = vmul.f32 %v4599, %v4559
    %v4616 = vmul.f32 %v4600, %v4561
    %v4617 = vmul.f32 %v4601, %v4564
    %v4618 = vmul.f32 %v4602, %v4566
    %v4619 = vmul.f32 %v4603, %v4569
    %v4620 = vmul.f32 %v4604, %v4571
    %v4621 = vmul.f32 %v4605, %v4534
    %v4622 = vmul.f32 %v4606, %v4536
    %v4623 = vmul.f32 %v4607, %v4539
    %v4624 = vmul.f32 %v4608, %v4541
    %v4625 = vmul.f32 %v4609, %v4544
    %v4626 = vmul.f32 %v4610, %v4546
    %v4627 = vmul.f32 %v4611, %v4549
    %v4628 = vmul.f32 %v4612, %v4551
    %v4629 = vmul.f32 %v4613, %v4554
    %v4630 = vmul.f32 %v4614, %v4556
    %v4631 = vmul.f32 %v4615, %v4559
    %v4632 = vmul.f32 %v4616, %v4561
    %v4633 = vmul.f32 %v4617, %v4564
    %v4634 = vmul.f32 %v4618, %v4566
    %v4635 = vmul.f32 %v4619, %v4569
    %v4636 = vmul.f32 %v4620, %v4571
    %v4637 = vadd.f32 %v4534, %v4621
    %v4638 = vadd.f32 %v4536, %v4622
    %v4639 = vadd.f32 %v4539, %v4623
    %v4640 = vadd.f32 %v4541, %v4624
    %v4641 = vadd.f32 %v4544, %v4625
    %v4642 = vadd.f32 %v4546, %v4626
    %v4643 = vadd.f32 %v4549, %v4627
    %v4644 = vadd.f32 %v4551, %v4628
    %v4645 = vadd.f32 %v4554, %v4629
    %v4646 = vadd.f32 %v4556, %v4630
    %v4647 = vadd.f32 %v4559, %v4631
    %v4648 = vadd.f32 %v4561, %v4632
    %v4649 = vadd.f32 %v4564, %v4633
    %v4650 = vadd.f32 %v4566, %v4634
    %v4651 = vadd.f32 %v4569, %v4635
    %v4652 = vadd.f32 %v4571, %v4636
    %v4653 = vmul.f32 %v4637, 0.7978846
    %v4654 = vmul.f32 %v4638, 0.7978846
    %v4655 = vmul.f32 %v4639, 0.7978846
    %v4656 = vmul.f32 %v4640, 0.7978846
    %v4657 = vmul.f32 %v4641, 0.7978846
    %v4658 = vmul.f32 %v4642, 0.7978846
    %v4659 = vmul.f32 %v4643, 0.7978846
    %v4660 = vmul.f32 %v4644, 0.7978846
    %v4661 = vmul.f32 %v4645, 0.7978846
    %v4662 = vmul.f32 %v4646, 0.7978846
    %v4663 = vmul.f32 %v4647, 0.7978846
    %v4664 = vmul.f32 %v4648, 0.7978846
    %v4665 = vmul.f32 %v4649, 0.7978846
    %v4666 = vmul.f32 %v4650, 0.7978846
    %v4667 = vmul.f32 %v4651, 0.7978846
    %v4668 = vmul.f32 %v4652, 0.7978846
    %v4669 = vtanh.pop %v4653
    %v4670 = vtanh.pop %v4654
    %v4671 = vtanh.pop %v4655
    %v4672 = vtanh.pop %v4656
    %v4673 = vtanh.pop %v4657
    %v4674 = vtanh.pop %v4658
    %v4675 = vtanh.pop %v4659
    %v4676 = vtanh.pop %v4660
    %v4677 = vtanh.pop %v4661
    %v4678 = vtanh.pop %v4662
    %v4679 = vtanh.pop %v4663
    %v4680 = vtanh.pop %v4664
    %v4681 = vtanh.pop %v4665
    %v4682 = vtanh.pop %v4666
    %v4683 = vtanh.pop %v4667
    %v4684 = vtanh.pop %v4668
    %v4685 = vadd.f32 %v4669, 1.0
    %v4686 = vadd.f32 %v4670, 1.0
    %v4687 = vadd.f32 %v4671, 1.0
    %v4688 = vadd.f32 %v4672, 1.0
    %v4689 = vadd.f32 %v4673, 1.0
    %v4690 = vadd.f32 %v4674, 1.0
    %v4691 = vadd.f32 %v4675, 1.0
    %v4692 = vadd.f32 %v4676, 1.0
    %v4693 = vadd.f32 %v4677, 1.0
    %v4694 = vadd.f32 %v4678, 1.0
    %v4695 = vadd.f32 %v4679, 1.0
    %v4696 = vadd.f32 %v4680, 1.0
    %v4697 = vadd.f32 %v4681, 1.0
    %v4698 = vadd.f32 %v4682, 1.0
    %v4699 = vadd.f32 %v4683, 1.0
    %v4700 = vadd.f32 %v4684, 1.0
    %v4701 = vmul.f32 %v4573, %v4685
    %v4702 = vmul.f32 %v4574, %v4686
    %v4703 = vmul.f32 %v4575, %v4687
    %v4704 = vmul.f32 %v4576, %v4688
    %v4705 = vmul.f32 %v4577, %v4689
    %v4706 = vmul.f32 %v4578, %v4690
    %v4707 = vmul.f32 %v4579, %v4691
    %v4708 = vmul.f32 %v4580, %v4692
    %v4709 = vmul.f32 %v4581, %v4693
    %v4710 = vmul.f32 %v4582, %v4694
    %v4711 = vmul.f32 %v4583, %v4695
    %v4712 = vmul.f32 %v4584, %v4696
    %v4713 = vmul.f32 %v4585, %v4697
    %v4714 = vmul.f32 %v4586, %v4698
    %v4715 = vmul.f32 %v4587, %v4699
    %v4716 = vmul.f32 %v4588, %v4700
    %v4717 = vpack.c.bf16 %v4702, %v4701
    %v4718 = vpack.c.bf16 %v4704, %v4703
    %v4719 = vpack.c.bf16 %v4706, %v4705
    %v4720 = vpack.c.bf16 %v4708, %v4707
    %v4721 = vpack.c.bf16 %v4710, %v4709
    %v4722 = vpack.c.bf16 %v4712, %v4711
    %v4723 = vpack.c.bf16 %v4714, %v4713
    %v4724 = vpack.c.bf16 %v4716, %v4715
    %s4725 = scalar_lea.vmem %s13, 8
    %v4726 = vld [vmem:[%s4725] sm:$0xf]
    %v4727 = vld [vmem:[%s4725 + $0x4] sm:$0xf]
    %s4728 = scalar_lea.vmem %s14, 1
    %v4729 = vld [vmem:[%s4728] sm:$0x1]
    %v4731 = vperm.slane %v4729, 0
    %v4735 = vunpack.c.l.b16 %v4726
    %v4736 = vunpack.c.l.b16 %v4727
    %v4737 = vpack.c.b16 %v4736, %v4735
    %v4740 = vsel %vm858, %v4717, 0
    %v4743 = vsel %vm858, %v4718, 0
    %v4746 = vsel %vm858, %v4719, 0
    %v4749 = vsel %vm858, %v4720, 0
    %v4752 = vsel %vm858, %v4721, 0
    %v4755 = vsel %vm858, %v4722, 0
    %v4758 = vsel %vm858, %v4723, 0
    %v4761 = vsel %vm858, %v4724, 0
    %4763 = vmatpush.bf16.msra.mxu0 0
    %4764 = vmatpush.bf16.msra.mxu0 0
    %4765 = vmatpush.bf16.msra.mxu0 0
    %4766 = vmatpush.bf16.msra.mxu0 0
    %4767 = vmatpush.bf16.msra.mxu0 0
    %4768 = vmatpush.bf16.msra.mxu0 0
    %4769 = vmatpush.bf16.msra.mxu0 0
    %4770 = vmatpush.bf16.msra.mxu0 %v4737
    %4771 = vmatmul.bf16.gmra.mxu0 %v4740
    %v4772 = vpop.f32.mrf.mxu0
    %v4773 = vadd.f32 %v4731, %v4772
    %v4774 = vpop.f32.mrf.mxu0
    %v4775 = vadd.f32 %v4731, %v4774
    %4776 = vmatmul.bf16.gmra.mxu0 %v4743
    %v4777 = vpop.f32.mrf.mxu0
    %v4778 = vadd.f32 %v4731, %v4777
    %v4779 = vpop.f32.mrf.mxu0
    %v4780 = vadd.f32 %v4731, %v4779
    %4781 = vmatmul.bf16.gmra.mxu0 %v4746
    %v4782 = vpop.f32.mrf.mxu0
    %v4783 = vadd.f32 %v4731, %v4782
    %v4784 = vpop.f32.mrf.mxu0
    %v4785 = vadd.f32 %v4731, %v4784
    %4786 = vmatmul.bf16.gmra.mxu0 %v4749
    %v4787 = vpop.f32.mrf.mxu0
    %v4788 = vadd.f32 %v4731, %v4787
    %v4789 = vpop.f32.mrf.mxu0
    %v4790 = vadd.f32 %v4731, %v4789
    %4791 = vmatmul.bf16.gmra.mxu0 %v4752
    %v4792 = vpop.f32.mrf.mxu0
    %v4793 = vadd.f32 %v4731, %v4792
    %v4794 = vpop.f32.mrf.mxu0
    %v4795 = vadd.f32 %v4731, %v4794
    %4796 = vmatmul.bf16.gmra.mxu0 %v4755
    %v4797 = vpop.f32.mrf.mxu0
    %v4798 = vadd.f32 %v4731, %v4797
    %v4799 = vpop.f32.mrf.mxu0
    %v4800 = vadd.f32 %v4731, %v4799
    %4801 = vmatmul.bf16.gmra.mxu0 %v4758
    %v4802 = vpop.f32.mrf.mxu0
    %v4803 = vadd.f32 %v4731, %v4802
    %v4804 = vpop.f32.mrf.mxu0
    %v4805 = vadd.f32 %v4731, %v4804
    %4806 = vmatmul.bf16.gmra.mxu0 %v4761
    %v4807 = vpop.f32.mrf.mxu0
    %v4808 = vadd.f32 %v4731, %v4807
    %v4809 = vpop.f32.mrf.mxu0
    %v4810 = vadd.f32 %v4731, %v4809
    %4811 = vdwg.mxu0
    %v4812 = vadd.f32 %v2508, %v4773
    %v4813 = vadd.f32 %v2509, %v4775
    %v4814 = vadd.f32 %v2510, %v4778
    %v4815 = vadd.f32 %v2511, %v4780
    %v4816 = vadd.f32 %v2512, %v4783
    %v4817 = vadd.f32 %v2513, %v4785
    %v4818 = vadd.f32 %v2514, %v4788
    %v4819 = vadd.f32 %v2515, %v4790
    %v4820 = vadd.f32 %v2516, %v4793
    %v4821 = vadd.f32 %v2517, %v4795
    %v4822 = vadd.f32 %v2518, %v4798
    %v4823 = vadd.f32 %v2519, %v4800
    %v4824 = vadd.f32 %v2520, %v4803
    %v4825 = vadd.f32 %v2521, %v4805
    %v4826 = vadd.f32 %v2522, %v4808
    %v4827 = vadd.f32 %v2523, %v4810
    %v4828 = vld [vmem:[%s15] sm:$0x1]
    %v4829 = vld [vmem:[%s16] sm:$0x1]
    %v4830 = vsel %vm224, %v4812, 0.0
    %4831 = vadd.xlane.f32.xlu0 %v4830
    %v4832 = vpop.xlane.xlu0 %4831
    %v4833 = vsel %vm224, %v4813, 0.0
    %4834 = vadd.xlane.f32.xlu0 %v4833
    %v4835 = vpop.xlane.xlu0 %4834
    %v4836 = vsel %vm224, %v4814, 0.0
    %4837 = vadd.xlane.f32.xlu0 %v4836
    %v4838 = vpop.xlane.xlu0 %4837
    %v4839 = vsel %vm224, %v4815, 0.0
    %4840 = vadd.xlane.f32.xlu0 %v4839
    %v4841 = vpop.xlane.xlu0 %4840
    %v4842 = vsel %vm224, %v4816, 0.0
    %4843 = vadd.xlane.f32.xlu0 %v4842
    %v4844 = vpop.xlane.xlu0 %4843
    %v4845 = vsel %vm224, %v4817, 0.0
    %4846 = vadd.xlane.f32.xlu0 %v4845
    %v4847 = vpop.xlane.xlu0 %4846
    %v4848 = vsel %vm224, %v4818, 0.0
    %4849 = vadd.xlane.f32.xlu0 %v4848
    %v4850 = vpop.xlane.xlu0 %4849
    %v4851 = vsel %vm224, %v4819, 0.0
    %4852 = vadd.xlane.f32.xlu0 %v4851
    %v4853 = vpop.xlane.xlu0 %4852
    %v4854 = vsel %vm224, %v4820, 0.0
    %4855 = vadd.xlane.f32.xlu0 %v4854
    %v4856 = vpop.xlane.xlu0 %4855
    %v4857 = vsel %vm224, %v4821, 0.0
    %4858 = vadd.xlane.f32.xlu0 %v4857
    %v4859 = vpop.xlane.xlu0 %4858
    %v4860 = vsel %vm224, %v4822, 0.0
    %4861 = vadd.xlane.f32.xlu0 %v4860
    %v4862 = vpop.xlane.xlu0 %4861
    %v4863 = vsel %vm224, %v4823, 0.0
    %4864 = vadd.xlane.f32.xlu0 %v4863
    %v4865 = vpop.xlane.xlu0 %4864
    %v4866 = vsel %vm224, %v4824, 0.0
    %4867 = vadd.xlane.f32.xlu0 %v4866
    %v4868 = vpop.xlane.xlu0 %4867
    %v4869 = vsel %vm224, %v4825, 0.0
    %4870 = vadd.xlane.f32.xlu0 %v4869
    %v4871 = vpop.xlane.xlu0 %4870
    %v4872 = vsel %vm224, %v4826, 0.0
    %4873 = vadd.xlane.f32.xlu0 %v4872
    %v4874 = vpop.xlane.xlu0 %4873
    %v4875 = vsel %vm224, %v4827, 0.0
    %4876 = vadd.xlane.f32.xlu0 %v4875
    %v4877 = vpop.xlane.xlu0 %4876
    %v4878 = vmul.f32 %v4832, %v279
    %v4879 = vmul.f32 %v4835, %v279
    %v4880 = vmul.f32 %v4838, %v279
    %v4881 = vmul.f32 %v4841, %v279
    %v4882 = vmul.f32 %v4844, %v279
    %v4883 = vmul.f32 %v4847, %v279
    %v4884 = vmul.f32 %v4850, %v279
    %v4885 = vmul.f32 %v4853, %v279
    %v4886 = vmul.f32 %v4856, %v279
    %v4887 = vmul.f32 %v4859, %v279
    %v4888 = vmul.f32 %v4862, %v279
    %v4889 = vmul.f32 %v4865, %v279
    %v4890 = vmul.f32 %v4868, %v279
    %v4891 = vmul.f32 %v4871, %v279
    %v4892 = vmul.f32 %v4874, %v279
    %v4893 = vmul.f32 %v4877, %v279
    %v4894 = vmul.f32 %v4812, %v4812
    %v4895 = vmul.f32 %v4813, %v4813
    %v4896 = vmul.f32 %v4814, %v4814
    %v4897 = vmul.f32 %v4815, %v4815
    %v4898 = vmul.f32 %v4816, %v4816
    %v4899 = vmul.f32 %v4817, %v4817
    %v4900 = vmul.f32 %v4818, %v4818
    %v4901 = vmul.f32 %v4819, %v4819
    %v4902 = vmul.f32 %v4820, %v4820
    %v4903 = vmul.f32 %v4821, %v4821
    %v4904 = vmul.f32 %v4822, %v4822
    %v4905 = vmul.f32 %v4823, %v4823
    %v4906 = vmul.f32 %v4824, %v4824
    %v4907 = vmul.f32 %v4825, %v4825
    %v4908 = vmul.f32 %v4826, %v4826
    %v4909 = vmul.f32 %v4827, %v4827
    %v4910 = vsel %vm224, %v4894, 0.0
    %4911 = vadd.xlane.f32.xlu0 %v4910
    %v4912 = vpop.xlane.xlu0 %4911
    %v4913 = vsel %vm224, %v4895, 0.0
    %4914 = vadd.xlane.f32.xlu0 %v4913
    %v4915 = vpop.xlane.xlu0 %4914
    %v4916 = vsel %vm224, %v4896, 0.0
    %4917 = vadd.xlane.f32.xlu0 %v4916
    %v4918 = vpop.xlane.xlu0 %4917
    %v4919 = vsel %vm224, %v4897, 0.0
    %4920 = vadd.xlane.f32.xlu0 %v4919
    %v4921 = vpop.xlane.xlu0 %4920
    %v4922 = vsel %vm224, %v4898, 0.0
    %4923 = vadd.xlane.f32.xlu0 %v4922
    %v4924 = vpop.xlane.xlu0 %4923
    %v4925 = vsel %vm224, %v4899, 0.0
    %4926 = vadd.xlane.f32.xlu0 %v4925
    %v4927 = vpop.xlane.xlu0 %4926
    %v4928 = vsel %vm224, %v4900, 0.0
    %4929 = vadd.xlane.f32.xlu0 %v4928
    %v4930 = vpop.xlane.xlu0 %4929
    %v4931 = vsel %vm224, %v4901, 0.0
    %4932 = vadd.xlane.f32.xlu0 %v4931
    %v4933 = vpop.xlane.xlu0 %4932
    %v4934 = vsel %vm224, %v4902, 0.0
    %4935 = vadd.xlane.f32.xlu0 %v4934
    %v4936 = vpop.xlane.xlu0 %4935
    %v4937 = vsel %vm224, %v4903, 0.0
    %4938 = vadd.xlane.f32.xlu0 %v4937
    %v4939 = vpop.xlane.xlu0 %4938
    %v4940 = vsel %vm224, %v4904, 0.0
    %4941 = vadd.xlane.f32.xlu0 %v4940
    %v4942 = vpop.xlane.xlu0 %4941
    %v4943 = vsel %vm224, %v4905, 0.0
    %4944 = vadd.xlane.f32.xlu0 %v4943
    %v4945 = vpop.xlane.xlu0 %4944
    %v4946 = vsel %vm224, %v4906, 0.0
    %4947 = vadd.xlane.f32.xlu0 %v4946
    %v4948 = vpop.xlane.xlu0 %4947
    %v4949 = vsel %vm224, %v4907, 0.0
    %4950 = vadd.xlane.f32.xlu0 %v4949
    %v4951 = vpop.xlane.xlu0 %4950
    %v4952 = vsel %vm224, %v4908, 0.0
    %4953 = vadd.xlane.f32.xlu0 %v4952
    %v4954 = vpop.xlane.xlu0 %4953
    %v4955 = vsel %vm224, %v4909, 0.0
    %4956 = vadd.xlane.f32.xlu0 %v4955
    %v4957 = vpop.xlane.xlu0 %4956
    %v4958 = vmul.f32 %v4912, %v279
    %v4959 = vmul.f32 %v4915, %v279
    %v4960 = vmul.f32 %v4918, %v279
    %v4961 = vmul.f32 %v4921, %v279
    %v4962 = vmul.f32 %v4924, %v279
    %v4963 = vmul.f32 %v4927, %v279
    %v4964 = vmul.f32 %v4930, %v279
    %v4965 = vmul.f32 %v4933, %v279
    %v4966 = vmul.f32 %v4936, %v279
    %v4967 = vmul.f32 %v4939, %v279
    %v4968 = vmul.f32 %v4942, %v279
    %v4969 = vmul.f32 %v4945, %v279
    %v4970 = vmul.f32 %v4948, %v279
    %v4971 = vmul.f32 %v4951, %v279
    %v4972 = vmul.f32 %v4954, %v279
    %v4973 = vmul.f32 %v4957, %v279
    %v4974 = vmul.f32 %v4878, %v4878
    %v4975 = vmul.f32 %v4879, %v4879
    %v4976 = vmul.f32 %v4880, %v4880
    %v4977 = vmul.f32 %v4881, %v4881
    %v4978 = vmul.f32 %v4882, %v4882
    %v4979 = vmul.f32 %v4883, %v4883
    %v4980 = vmul.f32 %v4884, %v4884
    %v4981 = vmul.f32 %v4885, %v4885
    %v4982 = vmul.f32 %v4886, %v4886
    %v4983 = vmul.f32 %v4887, %v4887
    %v4984 = vmul.f32 %v4888, %v4888
    %v4985 = vmul.f32 %v4889, %v4889
    %v4986 = vmul.f32 %v4890, %v4890
    %v4987 = vmul.f32 %v4891, %v4891
    %v4988 = vmul.f32 %v4892, %v4892
    %v4989 = vmul.f32 %v4893, %v4893
    %v4990 = vsub.f32 %v4958, %v4974
    %v4991 = vsub.f32 %v4959, %v4975
    %v4992 = vsub.f32 %v4960, %v4976
    %v4993 = vsub.f32 %v4961, %v4977
    %v4994 = vsub.f32 %v4962, %v4978
    %v4995 = vsub.f32 %v4963, %v4979
    %v4996 = vsub.f32 %v4964, %v4980
    %v4997 = vsub.f32 %v4965, %v4981
    %v4998 = vsub.f32 %v4966, %v4982
    %v4999 = vsub.f32 %v4967, %v4983
    %v5000 = vsub.f32 %v4968, %v4984
    %v5001 = vsub.f32 %v4969, %v4985
    %v5002 = vsub.f32 %v4970, %v4986
    %v5003 = vsub.f32 %v4971, %v4987
    %v5004 = vsub.f32 %v4972, %v4988
    %v5005 = vsub.f32 %v4973, %v4989
    %v5006 = vsub.f32 %v4812, %v4878
    %v5007 = vsub.f32 %v4813, %v4879
    %v5008 = vsub.f32 %v4814, %v4880
    %v5009 = vsub.f32 %v4815, %v4881
    %v5010 = vsub.f32 %v4816, %v4882
    %v5011 = vsub.f32 %v4817, %v4883
    %v5012 = vsub.f32 %v4818, %v4884
    %v5013 = vsub.f32 %v4819, %v4885
    %v5014 = vsub.f32 %v4820, %v4886
    %v5015 = vsub.f32 %v4821, %v4887
    %v5016 = vsub.f32 %v4822, %v4888
    %v5017 = vsub.f32 %v4823, %v4889
    %v5018 = vsub.f32 %v4824, %v4890
    %v5019 = vsub.f32 %v4825, %v4891
    %v5020 = vsub.f32 %v4826, %v4892
    %v5021 = vsub.f32 %v4827, %v4893
    %v5022 = vadd.f32 %v4990, 1e-05
    %v5023 = vadd.f32 %v4991, 1e-05
    %v5024 = vadd.f32 %v4992, 1e-05
    %v5025 = vadd.f32 %v4993, 1e-05
    %v5026 = vadd.f32 %v4994, 1e-05
    %v5027 = vadd.f32 %v4995, 1e-05
    %v5028 = vadd.f32 %v4996, 1e-05
    %v5029 = vadd.f32 %v4997, 1e-05
    %v5030 = vadd.f32 %v4998, 1e-05
    %v5031 = vadd.f32 %v4999, 1e-05
    %v5032 = vadd.f32 %v5000, 1e-05
    %v5033 = vadd.f32 %v5001, 1e-05
    %v5034 = vadd.f32 %v5002, 1e-05
    %v5035 = vadd.f32 %v5003, 1e-05
    %v5036 = vadd.f32 %v5004, 1e-05
    %v5037 = vadd.f32 %v5005, 1e-05
    %v5038 = vrsqrt.pop %v5022
    %v5039 = vmul.f32 %v5038, %v5022
    %v5040 = vmul.f32 %v5039, %v5038
    %v5041 = vmul.f32 0.5, %v5040
    %v5042 = vsub.f32 1.5, %v5041
    %v5043 = vmul.f32 %v5038, %v5042
    %vm5044 = vweird.f32 %v5022
    %vm5045 = vweird.f32 %v5038
    %vm5046 = vmor %vm5044, %vm5045
    %v5047 = vsel %vm5046, %v5038, %v5043
    %v5048 = vrsqrt.pop %v5023
    %v5049 = vmul.f32 %v5048, %v5023
    %v5050 = vmul.f32 %v5049, %v5048
    %v5051 = vmul.f32 0.5, %v5050
    %v5052 = vsub.f32 1.5, %v5051
    %v5053 = vmul.f32 %v5048, %v5052
    %vm5054 = vweird.f32 %v5023
    %vm5055 = vweird.f32 %v5048
    %vm5056 = vmor %vm5054, %vm5055
    %v5057 = vsel %vm5056, %v5048, %v5053
    %v5058 = vrsqrt.pop %v5024
    %v5059 = vmul.f32 %v5058, %v5024
    %v5060 = vmul.f32 %v5059, %v5058
    %v5061 = vmul.f32 0.5, %v5060
    %v5062 = vsub.f32 1.5, %v5061
    %v5063 = vmul.f32 %v5058, %v5062
    %vm5064 = vweird.f32 %v5024
    %vm5065 = vweird.f32 %v5058
    %vm5066 = vmor %vm5064, %vm5065
    %v5067 = vsel %vm5066, %v5058, %v5063
    %v5068 = vrsqrt.pop %v5025
    %v5069 = vmul.f32 %v5068, %v5025
    %v5070 = vmul.f32 %v5069, %v5068
    %v5071 = vmul.f32 0.5, %v5070
    %v5072 = vsub.f32 1.5, %v5071
    %v5073 = vmul.f32 %v5068, %v5072
    %vm5074 = vweird.f32 %v5025
    %vm5075 = vweird.f32 %v5068
    %vm5076 = vmor %vm5074, %vm5075
    %v5077 = vsel %vm5076, %v5068, %v5073
    %v5078 = vrsqrt.pop %v5026
    %v5079 = vmul.f32 %v5078, %v5026
    %v5080 = vmul.f32 %v5079, %v5078
    %v5081 = vmul.f32 0.5, %v5080
    %v5082 = vsub.f32 1.5, %v5081
    %v5083 = vmul.f32 %v5078, %v5082
    %vm5084 = vweird.f32 %v5026
    %vm5085 = vweird.f32 %v5078
    %vm5086 = vmor %vm5084, %vm5085
    %v5087 = vsel %vm5086, %v5078, %v5083
    %v5088 = vrsqrt.pop %v5027
    %v5089 = vmul.f32 %v5088, %v5027
    %v5090 = vmul.f32 %v5089, %v5088
    %v5091 = vmul.f32 0.5, %v5090
    %v5092 = vsub.f32 1.5, %v5091
    %v5093 = vmul.f32 %v5088, %v5092
    %vm5094 = vweird.f32 %v5027
    %vm5095 = vweird.f32 %v5088
    %vm5096 = vmor %vm5094, %vm5095
    %v5097 = vsel %vm5096, %v5088, %v5093
    %v5098 = vrsqrt.pop %v5028
    %v5099 = vmul.f32 %v5098, %v5028
    %v5100 = vmul.f32 %v5099, %v5098
    %v5101 = vmul.f32 0.5, %v5100
    %v5102 = vsub.f32 1.5, %v5101
    %v5103 = vmul.f32 %v5098, %v5102
    %vm5104 = vweird.f32 %v5028
    %vm5105 = vweird.f32 %v5098
    %vm5106 = vmor %vm5104, %vm5105
    %v5107 = vsel %vm5106, %v5098, %v5103
    %v5108 = vrsqrt.pop %v5029
    %v5109 = vmul.f32 %v5108, %v5029
    %v5110 = vmul.f32 %v5109, %v5108
    %v5111 = vmul.f32 0.5, %v5110
    %v5112 = vsub.f32 1.5, %v5111
    %v5113 = vmul.f32 %v5108, %v5112
    %vm5114 = vweird.f32 %v5029
    %vm5115 = vweird.f32 %v5108
    %vm5116 = vmor %vm5114, %vm5115
    %v5117 = vsel %vm5116, %v5108, %v5113
    %v5118 = vrsqrt.pop %v5030
    %v5119 = vmul.f32 %v5118, %v5030
    %v5120 = vmul.f32 %v5119, %v5118
    %v5121 = vmul.f32 0.5, %v5120
    %v5122 = vsub.f32 1.5, %v5121
    %v5123 = vmul.f32 %v5118, %v5122
    %vm5124 = vweird.f32 %v5030
    %vm5125 = vweird.f32 %v5118
    %vm5126 = vmor %vm5124, %vm5125
    %v5127 = vsel %vm5126, %v5118, %v5123
    %v5128 = vrsqrt.pop %v5031
    %v5129 = vmul.f32 %v5128, %v5031
    %v5130 = vmul.f32 %v5129, %v5128
    %v5131 = vmul.f32 0.5, %v5130
    %v5132 = vsub.f32 1.5, %v5131
    %v5133 = vmul.f32 %v5128, %v5132
    %vm5134 = vweird.f32 %v5031
    %vm5135 = vweird.f32 %v5128
    %vm5136 = vmor %vm5134, %vm5135
    %v5137 = vsel %vm5136, %v5128, %v5133
    %v5138 = vrsqrt.pop %v5032
    %v5139 = vmul.f32 %v5138, %v5032
    %v5140 = vmul.f32 %v5139, %v5138
    %v5141 = vmul.f32 0.5, %v5140
    %v5142 = vsub.f32 1.5, %v5141
    %v5143 = vmul.f32 %v5138, %v5142
    %vm5144 = vweird.f32 %v5032
    %vm5145 = vweird.f32 %v5138
    %vm5146 = vmor %vm5144, %vm5145
    %v5147 = vsel %vm5146, %v5138, %v5143
    %v5148 = vrsqrt.pop %v5033
    %v5149 = vmul.f32 %v5148, %v5033
    %v5150 = vmul.f32 %v5149, %v5148
    %v5151 = vmul.f32 0.5, %v5150
    %v5152 = vsub.f32 1.5, %v5151
    %v5153 = vmul.f32 %v5148, %v5152
    %vm5154 = vweird.f32 %v5033
    %vm5155 = vweird.f32 %v5148
    %vm5156 = vmor %vm5154, %vm5155
    %v5157 = vsel %vm5156, %v5148, %v5153
    %v5158 = vrsqrt.pop %v5034
    %v5159 = vmul.f32 %v5158, %v5034
    %v5160 = vmul.f32 %v5159, %v5158
    %v5161 = vmul.f32 0.5, %v5160
    %v5162 = vsub.f32 1.5, %v5161
    %v5163 = vmul.f32 %v5158, %v5162
    %vm5164 = vweird.f32 %v5034
    %vm5165 = vweird.f32 %v5158
    %vm5166 = vmor %vm5164, %vm5165
    %v5167 = vsel %vm5166, %v5158, %v5163
    %v5168 = vrsqrt.pop %v5035
    %v5169 = vmul.f32 %v5168, %v5035
    %v5170 = vmul.f32 %v5169, %v5168
    %v5171 = vmul.f32 0.5, %v5170
    %v5172 = vsub.f32 1.5, %v5171
    %v5173 = vmul.f32 %v5168, %v5172
    %vm5174 = vweird.f32 %v5035
    %vm5175 = vweird.f32 %v5168
    %vm5176 = vmor %vm5174, %vm5175
    %v5177 = vsel %vm5176, %v5168, %v5173
    %v5178 = vrsqrt.pop %v5036
    %v5179 = vmul.f32 %v5178, %v5036
    %v5180 = vmul.f32 %v5179, %v5178
    %v5181 = vmul.f32 0.5, %v5180
    %v5182 = vsub.f32 1.5, %v5181
    %v5183 = vmul.f32 %v5178, %v5182
    %vm5184 = vweird.f32 %v5036
    %vm5185 = vweird.f32 %v5178
    %vm5186 = vmor %vm5184, %vm5185
    %v5187 = vsel %vm5186, %v5178, %v5183
    %v5188 = vrsqrt.pop %v5037
    %v5189 = vmul.f32 %v5188, %v5037
    %v5190 = vmul.f32 %v5189, %v5188
    %v5191 = vmul.f32 0.5, %v5190
    %v5192 = vsub.f32 1.5, %v5191
    %v5193 = vmul.f32 %v5188, %v5192
    %vm5194 = vweird.f32 %v5037
    %vm5195 = vweird.f32 %v5188
    %vm5196 = vmor %vm5194, %vm5195
    %v5197 = vsel %vm5196, %v5188, %v5193
    %v5198 = vmul.f32 %v5006, %v5047
    %v5199 = vmul.f32 %v5007, %v5057
    %v5200 = vmul.f32 %v5008, %v5067
    %v5201 = vmul.f32 %v5009, %v5077
    %v5202 = vmul.f32 %v5010, %v5087
    %v5203 = vmul.f32 %v5011, %v5097
    %v5204 = vmul.f32 %v5012, %v5107
    %v5205 = vmul.f32 %v5013, %v5117
    %v5206 = vmul.f32 %v5014, %v5127
    %v5207 = vmul.f32 %v5015, %v5137
    %v5208 = vmul.f32 %v5016, %v5147
    %v5209 = vmul.f32 %v5017, %v5157
    %v5210 = vmul.f32 %v5018, %v5167
    %v5211 = vmul.f32 %v5019, %v5177
    %v5212 = vmul.f32 %v5020, %v5187
    %v5213 = vmul.f32 %v5021, %v5197
    %v5215 = vperm.slane %v4828, 0
    %v5217 = vmul.f32 %v5198, %v5215
    %v5218 = vmul.f32 %v5199, %v5215
    %v5219 = vmul.f32 %v5200, %v5215
    %v5220 = vmul.f32 %v5201, %v5215
    %v5221 = vmul.f32 %v5202, %v5215
    %v5222 = vmul.f32 %v5203, %v5215
    %v5223 = vmul.f32 %v5204, %v5215
    %v5224 = vmul.f32 %v5205, %v5215
    %v5225 = vmul.f32 %v5206, %v5215
    %v5226 = vmul.f32 %v5207, %v5215
    %v5227 = vmul.f32 %v5208, %v5215
    %v5228 = vmul.f32 %v5209, %v5215
    %v5229 = vmul.f32 %v5210, %v5215
    %v5230 = vmul.f32 %v5211, %v5215
    %v5231 = vmul.f32 %v5212, %v5215
    %v5232 = vmul.f32 %v5213, %v5215
    %v5234 = vperm.slane %v4829, 0
    %v5236 = vadd.f32 %v5217, %v5234
    %v5237 = vadd.f32 %v5218, %v5234
    %v5238 = vadd.f32 %v5219, %v5234
    %v5239 = vadd.f32 %v5220, %v5234
    %v5240 = vadd.f32 %v5221, %v5234
    %v5241 = vadd.f32 %v5222, %v5234
    %v5242 = vadd.f32 %v5223, %v5234
    %v5243 = vadd.f32 %v5224, %v5234
    %v5244 = vadd.f32 %v5225, %v5234
    %v5245 = vadd.f32 %v5226, %v5234
    %v5246 = vadd.f32 %v5227, %v5234
    %v5247 = vadd.f32 %v5228, %v5234
    %v5248 = vadd.f32 %v5229, %v5234
    %v5249 = vadd.f32 %v5230, %v5234
    %v5250 = vadd.f32 %v5231, %v5234
    %v5251 = vadd.f32 %v5232, %v5234
    %v5252 = vpack.c.bf16 %v5237, %v5236
    %v5253 = vpack.c.bf16 %v5239, %v5238
    %v5254 = vpack.c.bf16 %v5241, %v5240
    %v5255 = vpack.c.bf16 %v5243, %v5242
    %v5256 = vpack.c.bf16 %v5245, %v5244
    %v5257 = vpack.c.bf16 %v5247, %v5246
    %v5258 = vpack.c.bf16 %v5249, %v5248
    %v5259 = vpack.c.bf16 %v5251, %v5250
    %v5260 = vld [vmem:[%s17] sm:$0xf]
    %v5261 = vld [vmem:[%s17 + $0x4] sm:$0xf]
    %v5262 = vld [vmem:[%s17 + $0x8] sm:$0xf]
    %v5263 = vld [vmem:[%s17 + $0xc] sm:$0xf]
    %v5268 = vunpack.c.l.b16 %v5260
    %v5269 = vunpack.c.l.b16 %v5261
    %v5270 = vunpack.c.l.b16 %v5262
    %v5271 = vunpack.c.l.b16 %v5263
    %v5272 = vpack.c.b16 %v5269, %v5268
    %v5273 = vpack.c.b16 %v5271, %v5270
    %v5277 = vsel %vm224, %v5252, 0
    %v5280 = vsel %vm224, %v5253, 0
    %v5283 = vsel %vm224, %v5254, 0
    %v5286 = vsel %vm224, %v5255, 0
    %v5289 = vsel %vm224, %v5256, 0
    %v5292 = vsel %vm224, %v5257, 0
    %v5295 = vsel %vm224, %v5258, 0
    %v5298 = vsel %vm224, %v5259, 0
    %5300 = vmatpush.bf16.msra.mxu0 0
    %5301 = vmatpush.bf16.msra.mxu0 0
    %5302 = vmatpush.bf16.msra.mxu0 0
    %5303 = vmatpush.bf16.msra.mxu0 0
    %5304 = vmatpush.bf16.msra.mxu0 0
    %5305 = vmatpush.bf16.msra.mxu0 0
    %5306 = vmatpush.bf16.msra.mxu0 %v5273
    %5307 = vmatpush.bf16.msra.mxu0 %v5272
    %5308 = vmatmul.bf16.gmra.mxu0 %v5277
    %v5309 = vpop.f32.mrf.mxu0
    %v5310 = vadd.f32 0.0, %v5309
    %v5311 = vpop.f32.mrf.mxu0
    %v5312 = vadd.f32 0.0, %v5311
    %5313 = vmatmul.bf16.gmra.mxu0 %v5280
    %v5314 = vpop.f32.mrf.mxu0
    %v5315 = vadd.f32 0.0, %v5314
    %v5316 = vpop.f32.mrf.mxu0
    %v5317 = vadd.f32 0.0, %v5316
    %5318 = vmatmul.bf16.gmra.mxu0 %v5283
    %v5319 = vpop.f32.mrf.mxu0
    %v5320 = vadd.f32 0.0, %v5319
    %v5321 = vpop.f32.mrf.mxu0
    %v5322 = vadd.f32 0.0, %v5321
    %5323 = vmatmul.bf16.gmra.mxu0 %v5286
    %v5324 = vpop.f32.mrf.mxu0
    %v5325 = vadd.f32 0.0, %v5324
    %v5326 = vpop.f32.mrf.mxu0
    %v5327 = vadd.f32 0.0, %v5326
    %5328 = vmatmul.bf16.gmra.mxu0 %v5289
    %v5329 = vpop.f32.mrf.mxu0
    %v5330 = vadd.f32 0.0, %v5329
    %v5331 = vpop.f32.mrf.mxu0
    %v5332 = vadd.f32 0.0, %v5331
    %5333 = vmatmul.bf16.gmra.mxu0 %v5292
    %v5334 = vpop.f32.mrf.mxu0
    %v5335 = vadd.f32 0.0, %v5334
    %v5336 = vpop.f32.mrf.mxu0
    %v5337 = vadd.f32 0.0, %v5336
    %5338 = vmatmul.bf16.gmra.mxu0 %v5295
    %v5339 = vpop.f32.mrf.mxu0
    %v5340 = vadd.f32 0.0, %v5339
    %v5341 = vpop.f32.mrf.mxu0
    %v5342 = vadd.f32 0.0, %v5341
    %5343 = vmatmul.bf16.gmra.mxu0 %v5298
    %v5344 = vpop.f32.mrf.mxu0
    %v5345 = vadd.f32 0.0, %v5344
    %v5346 = vpop.f32.mrf.mxu0
    %v5347 = vadd.f32 0.0, %v5346
    %5348 = vdwg.mxu0
    %v5349 = vadd.f32 %v5310, %v5312
    %v5350 = vrot.slane %v5349, 4
    %v5351 = vadd.f32 %v5349, %v5350
    %v5352 = vrot.slane %v5351, 2
    %v5353 = vadd.f32 %v5351, %v5352
    %v5354 = vrot.slane %v5353, 1
    %v5355 = vadd.f32 %v5353, %v5354
    %v5356 = vadd.f32 %v5315, %v5317
    %v5357 = vrot.slane %v5356, 4
    %v5358 = vadd.f32 %v5356, %v5357
    %v5359 = vrot.slane %v5358, 2
    %v5360 = vadd.f32 %v5358, %v5359
    %v5361 = vrot.slane %v5360, 1
    %v5362 = vadd.f32 %v5360, %v5361
    %v5363 = vadd.f32 %v5320, %v5322
    %v5364 = vrot.slane %v5363, 4
    %v5365 = vadd.f32 %v5363, %v5364
    %v5366 = vrot.slane %v5365, 2
    %v5367 = vadd.f32 %v5365, %v5366
    %v5368 = vrot.slane %v5367, 1
    %v5369 = vadd.f32 %v5367, %v5368
    %v5370 = vadd.f32 %v5325, %v5327
    %v5371 = vrot.slane %v5370, 4
    %v5372 = vadd.f32 %v5370, %v5371
    %v5373 = vrot.slane %v5372, 2
    %v5374 = vadd.f32 %v5372, %v5373
    %v5375 = vrot.slane %v5374, 1
    %v5376 = vadd.f32 %v5374, %v5375
    %v5377 = vadd.f32 %v5330, %v5332
    %v5378 = vrot.slane %v5377, 4
    %v5379 = vadd.f32 %v5377, %v5378
    %v5380 = vrot.slane %v5379, 2
    %v5381 = vadd.f32 %v5379, %v5380
    %v5382 = vrot.slane %v5381, 1
    %v5383 = vadd.f32 %v5381, %v5382
    %v5384 = vadd.f32 %v5335, %v5337
    %v5385 = vrot.slane %v5384, 4
    %v5386 = vadd.f32 %v5384, %v5385
    %v5387 = vrot.slane %v5386, 2
    %v5388 = vadd.f32 %v5386, %v5387
    %v5389 = vrot.slane %v5388, 1
    %v5390 = vadd.f32 %v5388, %v5389
    %v5391 = vadd.f32 %v5340, %v5342
    %v5392 = vrot.slane %v5391, 4
    %v5393 = vadd.f32 %v5391, %v5392
    %v5394 = vrot.slane %v5393, 2
    %v5395 = vadd.f32 %v5393, %v5394
    %v5396 = vrot.slane %v5395, 1
    %v5397 = vadd.f32 %v5395, %v5396
    %v5398 = vadd.f32 %v5345, %v5347
    %v5399 = vrot.slane %v5398, 4
    %v5400 = vadd.f32 %v5398, %v5399
    %v5401 = vrot.slane %v5400, 2
    %v5402 = vadd.f32 %v5400, %v5401
    %v5403 = vrot.slane %v5402, 1
    %v5404 = vadd.f32 %v5402, %v5403
    %v5405 = vmul.f32 %v5355, 0.0625
    %v5406 = vmul.f32 %v5362, 0.0625
    %v5407 = vmul.f32 %v5369, 0.0625
    %v5408 = vmul.f32 %v5376, 0.0625
    %v5409 = vmul.f32 %v5383, 0.0625
    %v5410 = vmul.f32 %v5390, 0.0625
    %v5411 = vmul.f32 %v5397, 0.0625
    %v5412 = vmul.f32 %v5404, 0.0625
    %v5413 = vld [vmem:[%s18] sm:$0x1]
    %v5415 = vperm.slane %v5413, 0
    %v5417 = vadd.f32 %v5405, %v5415
    %v5418 = vadd.f32 %v5406, %v5415
    %v5419 = vadd.f32 %v5407, %v5415
    %v5420 = vadd.f32 %v5408, %v5415
    %v5421 = vadd.f32 %v5409, %v5415
    %v5422 = vadd.f32 %v5410, %v5415
    %v5423 = vadd.f32 %v5411, %v5415
    %v5424 = vadd.f32 %v5412, %v5415
    %v5433 = vrot.slane %v5418, 7
    %vm5434 = vcmask 1041409
    %v5435 = vsel %vm5434, %v5433, %v5417
    %v5436 = vrot.slane %v5419, 6
    %vm5437 = vcmask 1042434
    %v5438 = vsel %vm5437, %v5436, %v5435
    %v5439 = vrot.slane %v5420, 5
    %vm5440 = vcmask 1043459
    %v5441 = vsel %vm5440, %v5439, %v5438
    %v5442 = vrot.slane %v5421, 4
    %vm5443 = vcmask 1044484
    %v5444 = vsel %vm5443, %v5442, %v5441
    %v5445 = vrot.slane %v5422, 3
    %vm5446 = vcmask 1045509
    %v5447 = vsel %vm5446, %v5445, %v5444
    %v5448 = vrot.slane %v5423, 2
    %vm5449 = vcmask 1046534
    %v5450 = vsel %vm5449, %v5448, %v5447
    %v5451 = vrot.slane %v5424, 1
    %vm5452 = vcmask 1047559
    %v5453 = vsel %vm5452, %v5451, %v5450
    %5455 = vst [vmem:[#allocation2] sm:$0xff] %v5453
    // Predicated region
    $region78: #{tpu_custom_call.1} parent=1 // pred_check
      _
    $region79: #{tpu_custom_call.1} parent=1 // pred_check_branch
      %5457 = sbr.rel (0) target = $region81
    $region80: #{tpu_custom_call.1} parent=1 // pred_region
      %5459 = vsyncadd [#allocation3], 0
      %s5461 = sshll.u32 [#allocation2], 4
      %s5462 = int_to_ptr.vmem [resolvable:$true] %s5461
      %s5463 = sshll.u32 %s19, 4
      %s5464 = int_to_ptr.hbm [resolvable:$true] %s5463
      %5466 = dma.vmem_to_hbm [thread:$0]  %s5462, 128, %s5464, [#allocation3]
    $region81: #{tpu_custom_call.1} parent=1 // pred_fallthru
      _
    // Predicated region
    $region82: #{tpu_custom_call.1} parent=1 // pred_check
      _
    $region83: #{tpu_custom_call.1} parent=1 // pred_check_branch
      %5468 = sbr.rel (0) target = $region85
    $region84: #{tpu_custom_call.1} parent=1 // pred_region
      %5470 = dma.done [#allocation3], 128
    $region85: #{tpu_custom_call.1} parent=1 // pred_fallthru
      _
    %5471 = vsyncpa [#allocation3], 1

</llo_original>
